<compile_context>
chip_gen: v6e
topology: v6e:2x2x1
jax: 0.10.0
libtpu: 0.0.40
codegen_flags: <defaults>
</compile_context>

<pallas_src>
import functools

import jax
import jax.numpy as jnp
from jax.experimental import pallas as pl
from jax.experimental.pallas import tpu as pltpu


# ----------------------------------------------------------------------------
# Fused kernel: Conv2d(+bias,+ReLU) -> flatten -> Linear(+bias), one sample
# per grid step.  All activations stay in vregs/VMEM.
# ----------------------------------------------------------------------------
def _fused_convnet_kernel(x_ref, cw_ref, cb_ref, lw_ref, lb_ref, o_ref, *,
                          C, OC, KH, KW, OH, OW, OUT):
    """
    x_ref : (1, C, H, W)       VMEM  input sample (NCHW block)
    cw_ref: (OC, C*KH*KW)      SMEM  conv weight, PyTorch (C,KH,KW) flatten order
    cb_ref: (OC,)              SMEM  conv bias
    lw_ref: (OUT, OC, OH, OW)  VMEM  linear weight in conv-output layout (resident)
    lb_ref: (1, OUT)           VMEM  linear bias
    o_ref : (1, 1, OUT)        VMEM  output row for this sample
    """
    # ---------------- Conv2d (direct, im2col-free) + bias + ReLU ------------
    # conv[oc, oh, ow] = b[oc] + sum_{c,i,j} w[oc,c,i,j] * x[c, oh+i, ow+j]
    acc = [None] * OC
    for i in range(KH):
        for j in range(KW):
            # shifted (C, OH, OW) window, loaded straight from the VMEM block
            pat = x_ref[0, :, i:i + OH, j:j + OW]
            for c in range(C):
                p2 = pat[c]                                  # (OH, OW)
                k = (c * KH + i) * KW + j
                for oc in range(OC):
                    term = cw_ref[oc, k] * p2                # SMEM scalar * vector
                    acc[oc] = term if acc[oc] is None else acc[oc] + term
    conv = [jnp.maximum(acc[oc] + cb_ref[oc], 0.0) for oc in range(OC)]

    # ---------------- Flatten + Linear head (stays on-chip) -----------------
    # y[o] = lb[o] + sum_{oc,oh,ow} conv[oc,oh,ow] * lw[o,oc,oh,ow]
    lane = jax.lax.broadcasted_iota(jnp.int32, (1, OUT), 1)
    y = lb_ref[...]                                          # (1, OUT)
    for o in range(OUT):
        lwo = lw_ref[o]                                      # (OC, OH, OW) resident
        p = conv[0] * lwo[0]
        for oc in range(1, OC):
            p = p + conv[oc] * lwo[oc]
        s = jnp.sum(p, axis=1, keepdims=True)                # (OH, 1) lane reduce
        s = jnp.sum(s, axis=0, keepdims=True)                # (1, 1)  sublane reduce
        y = y + jnp.where(lane == o, s, 0.0)                 # place into column o
    o_ref[0] = y.astype(o_ref.dtype)


def fused_forward(x, cw_mat, cb, lw4, lb2, *, KH, KW, OH, OW):
    """x: (N, C, H, W) f32 -> (N, OUT) f32, single fused pallas_call."""
    N, C, H, W = x.shape
    OC = cw_mat.shape[0]
    OUT = lw4.shape[0]
    kernel = functools.partial(_fused_convnet_kernel, C=C, OC=OC, KH=KH, KW=KW,
                               OH=OH, OW=OW, OUT=OUT)
    # TODO(synk): for very large batches, process a batch tile (>1 sample) per
    # grid step to amortize the ~0.35 us/step pipeline overhead.
    out = pl.pallas_call(
        kernel,
        out_shape=jax.ShapeDtypeStruct((N, 1, OUT), jnp.float32),
        grid=(N,),
        in_specs=[
            # one sample per step
            pl.BlockSpec((1, C, H, W), lambda b: (b, 0, 0, 0)),
            # conv weight / bias: small scalar tables -> SMEM, whole array
            pl.BlockSpec(memory_space=pltpu.MemorySpace.SMEM),
            pl.BlockSpec(memory_space=pltpu.MemorySpace.SMEM),
            # linear weight: constant index_map => weight-stationary in VMEM
            pl.BlockSpec((OUT, OC, OH, OW), lambda b: (0, 0, 0, 0)),
            # linear bias
            pl.BlockSpec((1, OUT), lambda b: (0, 0)),
        ],
        out_specs=pl.BlockSpec((1, 1, OUT), lambda b: (b, 0, 0)),
        compiler_params=pltpu.CompilerParams(
            dimension_semantics=("parallel",)),   # shard batch across TCs (v7x)
    )(x, cw_mat, cb, lw4, lb2)
    return out.reshape(N, OUT)


# ----------------------------------------------------------------------------
# The "BaseNeuralNet" concrete model in JAX/Pallas
# ----------------------------------------------------------------------------
class BaseNeuralNetPallas:
    def __init__(self, input_dim, output_dim, key):
        self.channel, self.height, self.width = input_dim
        self.output_dim = output_dim

        self.out_channels = 8
        self.kh = self.kw = 3
        self.oh = self.height - self.kh + 1
        self.ow = self.width - self.kw + 1
        # get_conv_out_size: prod of conv output shape for a batch-1 dummy
        self.conv_out_size = 1 * self.out_channels * self.oh * self.ow

        k1, k2, k3, k4 = jax.random.split(key, 4)
        fan_in_conv = self.channel * self.kh * self.kw
        bound_c = 1.0 / jnp.sqrt(fan_in_conv)
        # Conv2d weight (OC, C, KH, KW), bias (OC,) -- PyTorch convention
        self.conv_w = jax.random.uniform(
            k1, (self.out_channels, self.channel, self.kh, self.kw),
            minval=-bound_c, maxval=bound_c, dtype=jnp.float32)
        self.conv_b = jax.random.uniform(
            k2, (self.out_channels,), minval=-bound_c, maxval=bound_c,
            dtype=jnp.float32)

        bound_l = 1.0 / jnp.sqrt(self.conv_out_size)
        # Linear weight (out, F), bias (out,) -- PyTorch convention
        self.lin_w = jax.random.uniform(
            k3, (self.output_dim, self.conv_out_size),
            minval=-bound_l, maxval=bound_l, dtype=jnp.float32)
        self.lin_b = jax.random.uniform(
            k4, (self.output_dim,), minval=-bound_l, maxval=bound_l,
            dtype=jnp.float32)

        # ---- Hoisted, kernel-friendly weight layouts (built once) ----------
        # conv weight rows in PyTorch (C, KH, KW) flatten order
        self.cw_mat = self.conv_w.reshape(self.out_channels, -1)       # (OC, C*KH*KW)
        self.cb = self.conv_b                                          # (OC,)
        # linear weight reshaped to the conv-output (OC, OH, OW) flatten order
        self.lw4 = self.lin_w.reshape(self.output_dim, self.out_channels,
                                      self.oh, self.ow)                # (OUT, OC, OH, OW)
        self.lb2 = self.lin_b.reshape(1, self.output_dim)              # (1, OUT)

    def forward(self, state):
        """state: (N, C, H, W) float32 -> (N, output_dim) float32."""
        return fused_forward(state, self.cw_mat, self.cb, self.lw4, self.lb2,
                             KH=self.kh, KW=self.kw, OH=self.oh, OW=self.ow)


# Pure-JAX reference for a sanity check (full-precision f32)
def forward_ref(net, state):
    out = jax.lax.conv_general_dilated(
        state, net.conv_w, window_strides=(1, 1), padding="VALID",
        dimension_numbers=("NCHW", "OIHW", "NCHW"),
        precision=jax.lax.Precision.HIGHEST)
    out = out + net.conv_b[None, :, None, None]
    out = jnp.maximum(out, 0.0)
    feat = out.reshape(state.shape[0], -1)
    return jnp.dot(feat, net.lin_w.T,
                   precision=jax.lax.Precision.HIGHEST) + net.lin_b


if __name__ == "__main__":
    key = jax.random.PRNGKey(0)
    k_in, k_params = jax.random.split(key)

    input_dim = (4, 16, 16)      # (C, H, W)
    output_dim = 8
    batch = 2

    net = BaseNeuralNetPallas(input_dim, output_dim, k_params)
    x = jax.random.normal(k_in, (batch,) + input_dim, dtype=jnp.float32)

    y = net.forward(x)
    y = jax.block_until_ready(y)

    y_ref = jax.block_until_ready(forward_ref(net, x))
    assert y.shape == (batch, output_dim)
    assert jnp.allclose(y, y_ref, atol=2e-4, rtol=2e-4)

    print("KERNEL_OK")
</pallas_src>

<mosaic_0001>
module attributes {stable_mosaic.version = 11 : i64} {
  func.func @_fused_convnet_kernel(%arg0: i32, %arg1: memref<1x4x16x16xf32, #tpu.memory_space<vmem>>, %arg2: memref<8x36xf32, #tpu.memory_space<smem>>, %arg3: memref<8xf32, #tpu.memory_space<smem>>, %arg4: memref<8x8x14x14xf32, #tpu.memory_space<vmem>>, %arg5: memref<1x8xf32, #tpu.memory_space<vmem>>, %arg6: memref<1x1x8xf32, #tpu.memory_space<vmem>>) attributes {dimension_semantics = [#tpu.dimension_semantics<parallel>], iteration_bounds = array<i64: 2>, scalar_prefetch = 0 : i64, scratch_operands = 0 : i64, tpu.core_type = #tpu.core_type<tc>, window_params = [{transform_indices = @transform_0, window_bounds = array<i64: 1, 4, 16, 16>}, {transform_indices = @transform_1, window_bounds = array<i64: 8, 36>}, {transform_indices = @transform_2, window_bounds = array<i64: 8>}, {pipeline_mode = #tpu.pipeline_mode<synchronous>, transform_indices = @transform_3, window_bounds = array<i64: 8, 8, 14, 14>}, {pipeline_mode = #tpu.pipeline_mode<synchronous>, transform_indices = @transform_4, window_bounds = array<i64: 1, 8>}, {transform_indices = @transform_5, window_bounds = array<i64: 1, 1, 8>}]} {
    %c0 = arith.constant 0 : index
    %c0_0 = arith.constant 0 : index
    %c0_1 = arith.constant 0 : index
    %c0_2 = arith.constant 0 : index
    %0 = vector.load %arg1[%c0, %c0_0, %c0_1, %c0_2] : memref<1x4x16x16xf32, #tpu.memory_space<vmem>>, vector<1x4x14x14xf32>
    %1 = vector.shape_cast %0 : vector<1x4x14x14xf32> to vector<4x14x14xf32>
    %2 = vector.extract_strided_slice %1 {offsets = [0, 0, 0], sizes = [1, 14, 14], strides = [1, 1, 1]} : vector<4x14x14xf32> to vector<1x14x14xf32>
    %3 = vector.shape_cast %2 : vector<1x14x14xf32> to vector<14x14xf32>
    %c0_3 = arith.constant 0 : index
    %c0_4 = arith.constant 0 : index
    %4 = memref.load %arg2[%c0_3, %c0_4] : memref<8x36xf32, #tpu.memory_space<smem>>
    %5 = vector.broadcast %4 : f32 to vector<14x14xf32>
    %6 = arith.mulf %5, %3 : vector<14x14xf32>
    %c1 = arith.constant 1 : index
    %c0_5 = arith.constant 0 : index
    %7 = memref.load %arg2[%c1, %c0_5] : memref<8x36xf32, #tpu.memory_space<smem>>
    %8 = vector.broadcast %7 : f32 to vector<14x14xf32>
    %9 = arith.mulf %8, %3 : vector<14x14xf32>
    %c2 = arith.constant 2 : index
    %c0_6 = arith.constant 0 : index
    %10 = memref.load %arg2[%c2, %c0_6] : memref<8x36xf32, #tpu.memory_space<smem>>
    %11 = vector.broadcast %10 : f32 to vector<14x14xf32>
    %12 = arith.mulf %11, %3 : vector<14x14xf32>
    %c3 = arith.constant 3 : index
    %c0_7 = arith.constant 0 : index
    %13 = memref.load %arg2[%c3, %c0_7] : memref<8x36xf32, #tpu.memory_space<smem>>
    %14 = vector.broadcast %13 : f32 to vector<14x14xf32>
    %15 = arith.mulf %14, %3 : vector<14x14xf32>
    %c4 = arith.constant 4 : index
    %c0_8 = arith.constant 0 : index
    %16 = memref.load %arg2[%c4, %c0_8] : memref<8x36xf32, #tpu.memory_space<smem>>
    %17 = vector.broadcast %16 : f32 to vector<14x14xf32>
    %18 = arith.mulf %17, %3 : vector<14x14xf32>
    %c5 = arith.constant 5 : index
    %c0_9 = arith.constant 0 : index
    %19 = memref.load %arg2[%c5, %c0_9] : memref<8x36xf32, #tpu.memory_space<smem>>
    %20 = vector.broadcast %19 : f32 to vector<14x14xf32>
    %21 = arith.mulf %20, %3 : vector<14x14xf32>
    %c6 = arith.constant 6 : index
    %c0_10 = arith.constant 0 : index
    %22 = memref.load %arg2[%c6, %c0_10] : memref<8x36xf32, #tpu.memory_space<smem>>
    %23 = vector.broadcast %22 : f32 to vector<14x14xf32>
    %24 = arith.mulf %23, %3 : vector<14x14xf32>
    %c7 = arith.constant 7 : index
    %c0_11 = arith.constant 0 : index
    %25 = memref.load %arg2[%c7, %c0_11] : memref<8x36xf32, #tpu.memory_space<smem>>
    %26 = vector.broadcast %25 : f32 to vector<14x14xf32>
    %27 = arith.mulf %26, %3 : vector<14x14xf32>
    %28 = vector.extract_strided_slice %1 {offsets = [1, 0, 0], sizes = [1, 14, 14], strides = [1, 1, 1]} : vector<4x14x14xf32> to vector<1x14x14xf32>
    %29 = vector.shape_cast %28 : vector<1x14x14xf32> to vector<14x14xf32>
    %c0_12 = arith.constant 0 : index
    %c9 = arith.constant 9 : index
    %30 = memref.load %arg2[%c0_12, %c9] : memref<8x36xf32, #tpu.memory_space<smem>>
    %31 = vector.broadcast %30 : f32 to vector<14x14xf32>
    %32 = arith.mulf %31, %29 : vector<14x14xf32>
    %33 = arith.addf %6, %32 : vector<14x14xf32>
    %c1_13 = arith.constant 1 : index
    %c9_14 = arith.constant 9 : index
    %34 = memref.load %arg2[%c1_13, %c9_14] : memref<8x36xf32, #tpu.memory_space<smem>>
    %35 = vector.broadcast %34 : f32 to vector<14x14xf32>
    %36 = arith.mulf %35, %29 : vector<14x14xf32>
    %37 = arith.addf %9, %36 : vector<14x14xf32>
    %c2_15 = arith.constant 2 : index
    %c9_16 = arith.constant 9 : index
    %38 = memref.load %arg2[%c2_15, %c9_16] : memref<8x36xf32, #tpu.memory_space<smem>>
    %39 = vector.broadcast %38 : f32 to vector<14x14xf32>
    %40 = arith.mulf %39, %29 : vector<14x14xf32>
    %41 = arith.addf %12, %40 : vector<14x14xf32>
    %c3_17 = arith.constant 3 : index
    %c9_18 = arith.constant 9 : index
    %42 = memref.load %arg2[%c3_17, %c9_18] : memref<8x36xf32, #tpu.memory_space<smem>>
    %43 = vector.broadcast %42 : f32 to vector<14x14xf32>
    %44 = arith.mulf %43, %29 : vector<14x14xf32>
    %45 = arith.addf %15, %44 : vector<14x14xf32>
    %c4_19 = arith.constant 4 : index
    %c9_20 = arith.constant 9 : index
    %46 = memref.load %arg2[%c4_19, %c9_20] : memref<8x36xf32, #tpu.memory_space<smem>>
    %47 = vector.broadcast %46 : f32 to vector<14x14xf32>
    %48 = arith.mulf %47, %29 : vector<14x14xf32>
    %49 = arith.addf %18, %48 : vector<14x14xf32>
    %c5_21 = arith.constant 5 : index
    %c9_22 = arith.constant 9 : index
    %50 = memref.load %arg2[%c5_21, %c9_22] : memref<8x36xf32, #tpu.memory_space<smem>>
    %51 = vector.broadcast %50 : f32 to vector<14x14xf32>
    %52 = arith.mulf %51, %29 : vector<14x14xf32>
    %53 = arith.addf %21, %52 : vector<14x14xf32>
    %c6_23 = arith.constant 6 : index
    %c9_24 = arith.constant 9 : index
    %54 = memref.load %arg2[%c6_23, %c9_24] : memref<8x36xf32, #tpu.memory_space<smem>>
    %55 = vector.broadcast %54 : f32 to vector<14x14xf32>
    %56 = arith.mulf %55, %29 : vector<14x14xf32>
    %57 = arith.addf %24, %56 : vector<14x14xf32>
    %c7_25 = arith.constant 7 : index
    %c9_26 = arith.constant 9 : index
    %58 = memref.load %arg2[%c7_25, %c9_26] : memref<8x36xf32, #tpu.memory_space<smem>>
    %59 = vector.broadcast %58 : f32 to vector<14x14xf32>
    %60 = arith.mulf %59, %29 : vector<14x14xf32>
    %61 = arith.addf %27, %60 : vector<14x14xf32>
    %62 = vector.extract_strided_slice %1 {offsets = [2, 0, 0], sizes = [1, 14, 14], strides = [1, 1, 1]} : vector<4x14x14xf32> to vector<1x14x14xf32>
    %63 = vector.shape_cast %62 : vector<1x14x14xf32> to vector<14x14xf32>
    %c0_27 = arith.constant 0 : index
    %c18 = arith.constant 18 : index
    %64 = memref.load %arg2[%c0_27, %c18] : memref<8x36xf32, #tpu.memory_space<smem>>
    %65 = vector.broadcast %64 : f32 to vector<14x14xf32>
    %66 = arith.mulf %65, %63 : vector<14x14xf32>
    %67 = arith.addf %33, %66 : vector<14x14xf32>
    %c1_28 = arith.constant 1 : index
    %c18_29 = arith.constant 18 : index
    %68 = memref.load %arg2[%c1_28, %c18_29] : memref<8x36xf32, #tpu.memory_space<smem>>
    %69 = vector.broadcast %68 : f32 to vector<14x14xf32>
    %70 = arith.mulf %69, %63 : vector<14x14xf32>
    %71 = arith.addf %37, %70 : vector<14x14xf32>
    %c2_30 = arith.constant 2 : index
    %c18_31 = arith.constant 18 : index
    %72 = memref.load %arg2[%c2_30, %c18_31] : memref<8x36xf32, #tpu.memory_space<smem>>
    %73 = vector.broadcast %72 : f32 to vector<14x14xf32>
    %74 = arith.mulf %73, %63 : vector<14x14xf32>
    %75 = arith.addf %41, %74 : vector<14x14xf32>
    %c3_32 = arith.constant 3 : index
    %c18_33 = arith.constant 18 : index
    %76 = memref.load %arg2[%c3_32, %c18_33] : memref<8x36xf32, #tpu.memory_space<smem>>
    %77 = vector.broadcast %76 : f32 to vector<14x14xf32>
    %78 = arith.mulf %77, %63 : vector<14x14xf32>
    %79 = arith.addf %45, %78 : vector<14x14xf32>
    %c4_34 = arith.constant 4 : index
    %c18_35 = arith.constant 18 : index
    %80 = memref.load %arg2[%c4_34, %c18_35] : memref<8x36xf32, #tpu.memory_space<smem>>
    %81 = vector.broadcast %80 : f32 to vector<14x14xf32>
    %82 = arith.mulf %81, %63 : vector<14x14xf32>
    %83 = arith.addf %49, %82 : vector<14x14xf32>
    %c5_36 = arith.constant 5 : index
    %c18_37 = arith.constant 18 : index
    %84 = memref.load %arg2[%c5_36, %c18_37] : memref<8x36xf32, #tpu.memory_space<smem>>
    %85 = vector.broadcast %84 : f32 to vector<14x14xf32>
    %86 = arith.mulf %85, %63 : vector<14x14xf32>
    %87 = arith.addf %53, %86 : vector<14x14xf32>
    %c6_38 = arith.constant 6 : index
    %c18_39 = arith.constant 18 : index
    %88 = memref.load %arg2[%c6_38, %c18_39] : memref<8x36xf32, #tpu.memory_space<smem>>
    %89 = vector.broadcast %88 : f32 to vector<14x14xf32>
    %90 = arith.mulf %89, %63 : vector<14x14xf32>
    %91 = arith.addf %57, %90 : vector<14x14xf32>
    %c7_40 = arith.constant 7 : index
    %c18_41 = arith.constant 18 : index
    %92 = memref.load %arg2[%c7_40, %c18_41] : memref<8x36xf32, #tpu.memory_space<smem>>
    %93 = vector.broadcast %92 : f32 to vector<14x14xf32>
    %94 = arith.mulf %93, %63 : vector<14x14xf32>
    %95 = arith.addf %61, %94 : vector<14x14xf32>
    %96 = vector.extract_strided_slice %1 {offsets = [3, 0, 0], sizes = [1, 14, 14], strides = [1, 1, 1]} : vector<4x14x14xf32> to vector<1x14x14xf32>
    %97 = vector.shape_cast %96 : vector<1x14x14xf32> to vector<14x14xf32>
    %c0_42 = arith.constant 0 : index
    %c27 = arith.constant 27 : index
    %98 = memref.load %arg2[%c0_42, %c27] : memref<8x36xf32, #tpu.memory_space<smem>>
    %99 = vector.broadcast %98 : f32 to vector<14x14xf32>
    %100 = arith.mulf %99, %97 : vector<14x14xf32>
    %101 = arith.addf %67, %100 : vector<14x14xf32>
    %c1_43 = arith.constant 1 : index
    %c27_44 = arith.constant 27 : index
    %102 = memref.load %arg2[%c1_43, %c27_44] : memref<8x36xf32, #tpu.memory_space<smem>>
    %103 = vector.broadcast %102 : f32 to vector<14x14xf32>
    %104 = arith.mulf %103, %97 : vector<14x14xf32>
    %105 = arith.addf %71, %104 : vector<14x14xf32>
    %c2_45 = arith.constant 2 : index
    %c27_46 = arith.constant 27 : index
    %106 = memref.load %arg2[%c2_45, %c27_46] : memref<8x36xf32, #tpu.memory_space<smem>>
    %107 = vector.broadcast %106 : f32 to vector<14x14xf32>
    %108 = arith.mulf %107, %97 : vector<14x14xf32>
    %109 = arith.addf %75, %108 : vector<14x14xf32>
    %c3_47 = arith.constant 3 : index
    %c27_48 = arith.constant 27 : index
    %110 = memref.load %arg2[%c3_47, %c27_48] : memref<8x36xf32, #tpu.memory_space<smem>>
    %111 = vector.broadcast %110 : f32 to vector<14x14xf32>
    %112 = arith.mulf %111, %97 : vector<14x14xf32>
    %113 = arith.addf %79, %112 : vector<14x14xf32>
    %c4_49 = arith.constant 4 : index
    %c27_50 = arith.constant 27 : index
    %114 = memref.load %arg2[%c4_49, %c27_50] : memref<8x36xf32, #tpu.memory_space<smem>>
    %115 = vector.broadcast %114 : f32 to vector<14x14xf32>
    %116 = arith.mulf %115, %97 : vector<14x14xf32>
    %117 = arith.addf %83, %116 : vector<14x14xf32>
    %c5_51 = arith.constant 5 : index
    %c27_52 = arith.constant 27 : index
    %118 = memref.load %arg2[%c5_51, %c27_52] : memref<8x36xf32, #tpu.memory_space<smem>>
    %119 = vector.broadcast %118 : f32 to vector<14x14xf32>
    %120 = arith.mulf %119, %97 : vector<14x14xf32>
    %121 = arith.addf %87, %120 : vector<14x14xf32>
    %c6_53 = arith.constant 6 : index
    %c27_54 = arith.constant 27 : index
    %122 = memref.load %arg2[%c6_53, %c27_54] : memref<8x36xf32, #tpu.memory_space<smem>>
    %123 = vector.broadcast %122 : f32 to vector<14x14xf32>
    %124 = arith.mulf %123, %97 : vector<14x14xf32>
    %125 = arith.addf %91, %124 : vector<14x14xf32>
    %c7_55 = arith.constant 7 : index
    %c27_56 = arith.constant 27 : index
    %126 = memref.load %arg2[%c7_55, %c27_56] : memref<8x36xf32, #tpu.memory_space<smem>>
    %127 = vector.broadcast %126 : f32 to vector<14x14xf32>
    %128 = arith.mulf %127, %97 : vector<14x14xf32>
    %129 = arith.addf %95, %128 : vector<14x14xf32>
    %c0_57 = arith.constant 0 : index
    %c0_58 = arith.constant 0 : index
    %c0_59 = arith.constant 0 : index
    %c1_60 = arith.constant 1 : index
    %130 = vector.load %arg1[%c0_57, %c0_58, %c0_59, %c1_60] : memref<1x4x16x16xf32, #tpu.memory_space<vmem>>, vector<1x4x14x14xf32>
    %131 = vector.shape_cast %130 : vector<1x4x14x14xf32> to vector<4x14x14xf32>
    %132 = vector.extract_strided_slice %131 {offsets = [0, 0, 0], sizes = [1, 14, 14], strides = [1, 1, 1]} : vector<4x14x14xf32> to vector<1x14x14xf32>
    %133 = vector.shape_cast %132 : vector<1x14x14xf32> to vector<14x14xf32>
    %c0_61 = arith.constant 0 : index
    %c1_62 = arith.constant 1 : index
    %134 = memref.load %arg2[%c0_61, %c1_62] : memref<8x36xf32, #tpu.memory_space<smem>>
    %135 = vector.broadcast %134 : f32 to vector<14x14xf32>
    %136 = arith.mulf %135, %133 : vector<14x14xf32>
    %137 = arith.addf %101, %136 : vector<14x14xf32>
    %c1_63 = arith.constant 1 : index
    %c1_64 = arith.constant 1 : index
    %138 = memref.load %arg2[%c1_63, %c1_64] : memref<8x36xf32, #tpu.memory_space<smem>>
    %139 = vector.broadcast %138 : f32 to vector<14x14xf32>
    %140 = arith.mulf %139, %133 : vector<14x14xf32>
    %141 = arith.addf %105, %140 : vector<14x14xf32>
    %c2_65 = arith.constant 2 : index
    %c1_66 = arith.constant 1 : index
    %142 = memref.load %arg2[%c2_65, %c1_66] : memref<8x36xf32, #tpu.memory_space<smem>>
    %143 = vector.broadcast %142 : f32 to vector<14x14xf32>
    %144 = arith.mulf %143, %133 : vector<14x14xf32>
    %145 = arith.addf %109, %144 : vector<14x14xf32>
    %c3_67 = arith.constant 3 : index
    %c1_68 = arith.constant 1 : index
    %146 = memref.load %arg2[%c3_67, %c1_68] : memref<8x36xf32, #tpu.memory_space<smem>>
    %147 = vector.broadcast %146 : f32 to vector<14x14xf32>
    %148 = arith.mulf %147, %133 : vector<14x14xf32>
    %149 = arith.addf %113, %148 : vector<14x14xf32>
    %c4_69 = arith.constant 4 : index
    %c1_70 = arith.constant 1 : index
    %150 = memref.load %arg2[%c4_69, %c1_70] : memref<8x36xf32, #tpu.memory_space<smem>>
    %151 = vector.broadcast %150 : f32 to vector<14x14xf32>
    %152 = arith.mulf %151, %133 : vector<14x14xf32>
    %153 = arith.addf %117, %152 : vector<14x14xf32>
    %c5_71 = arith.constant 5 : index
    %c1_72 = arith.constant 1 : index
    %154 = memref.load %arg2[%c5_71, %c1_72] : memref<8x36xf32, #tpu.memory_space<smem>>
    %155 = vector.broadcast %154 : f32 to vector<14x14xf32>
    %156 = arith.mulf %155, %133 : vector<14x14xf32>
    %157 = arith.addf %121, %156 : vector<14x14xf32>
    %c6_73 = arith.constant 6 : index
    %c1_74 = arith.constant 1 : index
    %158 = memref.load %arg2[%c6_73, %c1_74] : memref<8x36xf32, #tpu.memory_space<smem>>
    %159 = vector.broadcast %158 : f32 to vector<14x14xf32>
    %160 = arith.mulf %159, %133 : vector<14x14xf32>
    %161 = arith.addf %125, %160 : vector<14x14xf32>
    %c7_75 = arith.constant 7 : index
    %c1_76 = arith.constant 1 : index
    %162 = memref.load %arg2[%c7_75, %c1_76] : memref<8x36xf32, #tpu.memory_space<smem>>
    %163 = vector.broadcast %162 : f32 to vector<14x14xf32>
    %164 = arith.mulf %163, %133 : vector<14x14xf32>
    %165 = arith.addf %129, %164 : vector<14x14xf32>
    %166 = vector.extract_strided_slice %131 {offsets = [1, 0, 0], sizes = [1, 14, 14], strides = [1, 1, 1]} : vector<4x14x14xf32> to vector<1x14x14xf32>
    %167 = vector.shape_cast %166 : vector<1x14x14xf32> to vector<14x14xf32>
    %c0_77 = arith.constant 0 : index
    %c10 = arith.constant 10 : index
    %168 = memref.load %arg2[%c0_77, %c10] : memref<8x36xf32, #tpu.memory_space<smem>>
    %169 = vector.broadcast %168 : f32 to vector<14x14xf32>
    %170 = arith.mulf %169, %167 : vector<14x14xf32>
    %171 = arith.addf %137, %170 : vector<14x14xf32>
    %c1_78 = arith.constant 1 : index
    %c10_79 = arith.constant 10 : index
    %172 = memref.load %arg2[%c1_78, %c10_79] : memref<8x36xf32, #tpu.memory_space<smem>>
    %173 = vector.broadcast %172 : f32 to vector<14x14xf32>
    %174 = arith.mulf %173, %167 : vector<14x14xf32>
    %175 = arith.addf %141, %174 : vector<14x14xf32>
    %c2_80 = arith.constant 2 : index
    %c10_81 = arith.constant 10 : index
    %176 = memref.load %arg2[%c2_80, %c10_81] : memref<8x36xf32, #tpu.memory_space<smem>>
    %177 = vector.broadcast %176 : f32 to vector<14x14xf32>
    %178 = arith.mulf %177, %167 : vector<14x14xf32>
    %179 = arith.addf %145, %178 : vector<14x14xf32>
    %c3_82 = arith.constant 3 : index
    %c10_83 = arith.constant 10 : index
    %180 = memref.load %arg2[%c3_82, %c10_83] : memref<8x36xf32, #tpu.memory_space<smem>>
    %181 = vector.broadcast %180 : f32 to vector<14x14xf32>
    %182 = arith.mulf %181, %167 : vector<14x14xf32>
    %183 = arith.addf %149, %182 : vector<14x14xf32>
    %c4_84 = arith.constant 4 : index
    %c10_85 = arith.constant 10 : index
    %184 = memref.load %arg2[%c4_84, %c10_85] : memref<8x36xf32, #tpu.memory_space<smem>>
    %185 = vector.broadcast %184 : f32 to vector<14x14xf32>
    %186 = arith.mulf %185, %167 : vector<14x14xf32>
    %187 = arith.addf %153, %186 : vector<14x14xf32>
    %c5_86 = arith.constant 5 : index
    %c10_87 = arith.constant 10 : index
    %188 = memref.load %arg2[%c5_86, %c10_87] : memref<8x36xf32, #tpu.memory_space<smem>>
    %189 = vector.broadcast %188 : f32 to vector<14x14xf32>
    %190 = arith.mulf %189, %167 : vector<14x14xf32>
    %191 = arith.addf %157, %190 : vector<14x14xf32>
    %c6_88 = arith.constant 6 : index
    %c10_89 = arith.constant 10 : index
    %192 = memref.load %arg2[%c6_88, %c10_89] : memref<8x36xf32, #tpu.memory_space<smem>>
    %193 = vector.broadcast %192 : f32 to vector<14x14xf32>
    %194 = arith.mulf %193, %167 : vector<14x14xf32>
    %195 = arith.addf %161, %194 : vector<14x14xf32>
    %c7_90 = arith.constant 7 : index
    %c10_91 = arith.constant 10 : index
    %196 = memref.load %arg2[%c7_90, %c10_91] : memref<8x36xf32, #tpu.memory_space<smem>>
    %197 = vector.broadcast %196 : f32 to vector<14x14xf32>
    %198 = arith.mulf %197, %167 : vector<14x14xf32>
    %199 = arith.addf %165, %198 : vector<14x14xf32>
    %200 = vector.extract_strided_slice %131 {offsets = [2, 0, 0], sizes = [1, 14, 14], strides = [1, 1, 1]} : vector<4x14x14xf32> to vector<1x14x14xf32>
    %201 = vector.shape_cast %200 : vector<1x14x14xf32> to vector<14x14xf32>
    %c0_92 = arith.constant 0 : index
    %c19 = arith.constant 19 : index
    %202 = memref.load %arg2[%c0_92, %c19] : memref<8x36xf32, #tpu.memory_space<smem>>
    %203 = vector.broadcast %202 : f32 to vector<14x14xf32>
    %204 = arith.mulf %203, %201 : vector<14x14xf32>
    %205 = arith.addf %171, %204 : vector<14x14xf32>
    %c1_93 = arith.constant 1 : index
    %c19_94 = arith.constant 19 : index
    %206 = memref.load %arg2[%c1_93, %c19_94] : memref<8x36xf32, #tpu.memory_space<smem>>
    %207 = vector.broadcast %206 : f32 to vector<14x14xf32>
    %208 = arith.mulf %207, %201 : vector<14x14xf32>
    %209 = arith.addf %175, %208 : vector<14x14xf32>
    %c2_95 = arith.constant 2 : index
    %c19_96 = arith.constant 19 : index
    %210 = memref.load %arg2[%c2_95, %c19_96] : memref<8x36xf32, #tpu.memory_space<smem>>
    %211 = vector.broadcast %210 : f32 to vector<14x14xf32>
    %212 = arith.mulf %211, %201 : vector<14x14xf32>
    %213 = arith.addf %179, %212 : vector<14x14xf32>
    %c3_97 = arith.constant 3 : index
    %c19_98 = arith.constant 19 : index
    %214 = memref.load %arg2[%c3_97, %c19_98] : memref<8x36xf32, #tpu.memory_space<smem>>
    %215 = vector.broadcast %214 : f32 to vector<14x14xf32>
    %216 = arith.mulf %215, %201 : vector<14x14xf32>
    %217 = arith.addf %183, %216 : vector<14x14xf32>
    %c4_99 = arith.constant 4 : index
    %c19_100 = arith.constant 19 : index
    %218 = memref.load %arg2[%c4_99, %c19_100] : memref<8x36xf32, #tpu.memory_space<smem>>
    %219 = vector.broadcast %218 : f32 to vector<14x14xf32>
    %220 = arith.mulf %219, %201 : vector<14x14xf32>
    %221 = arith.addf %187, %220 : vector<14x14xf32>
    %c5_101 = arith.constant 5 : index
    %c19_102 = arith.constant 19 : index
    %222 = memref.load %arg2[%c5_101, %c19_102] : memref<8x36xf32, #tpu.memory_space<smem>>
    %223 = vector.broadcast %222 : f32 to vector<14x14xf32>
    %224 = arith.mulf %223, %201 : vector<14x14xf32>
    %225 = arith.addf %191, %224 : vector<14x14xf32>
    %c6_103 = arith.constant 6 : index
    %c19_104 = arith.constant 19 : index
    %226 = memref.load %arg2[%c6_103, %c19_104] : memref<8x36xf32, #tpu.memory_space<smem>>
    %227 = vector.broadcast %226 : f32 to vector<14x14xf32>
    %228 = arith.mulf %227, %201 : vector<14x14xf32>
    %229 = arith.addf %195, %228 : vector<14x14xf32>
    %c7_105 = arith.constant 7 : index
    %c19_106 = arith.constant 19 : index
    %230 = memref.load %arg2[%c7_105, %c19_106] : memref<8x36xf32, #tpu.memory_space<smem>>
    %231 = vector.broadcast %230 : f32 to vector<14x14xf32>
    %232 = arith.mulf %231, %201 : vector<14x14xf32>
    %233 = arith.addf %199, %232 : vector<14x14xf32>
    %234 = vector.extract_strided_slice %131 {offsets = [3, 0, 0], sizes = [1, 14, 14], strides = [1, 1, 1]} : vector<4x14x14xf32> to vector<1x14x14xf32>
    %235 = vector.shape_cast %234 : vector<1x14x14xf32> to vector<14x14xf32>
    %c0_107 = arith.constant 0 : index
    %c28 = arith.constant 28 : index
    %236 = memref.load %arg2[%c0_107, %c28] : memref<8x36xf32, #tpu.memory_space<smem>>
    %237 = vector.broadcast %236 : f32 to vector<14x14xf32>
    %238 = arith.mulf %237, %235 : vector<14x14xf32>
    %239 = arith.addf %205, %238 : vector<14x14xf32>
    %c1_108 = arith.constant 1 : index
    %c28_109 = arith.constant 28 : index
    %240 = memref.load %arg2[%c1_108, %c28_109] : memref<8x36xf32, #tpu.memory_space<smem>>
    %241 = vector.broadcast %240 : f32 to vector<14x14xf32>
    %242 = arith.mulf %241, %235 : vector<14x14xf32>
    %243 = arith.addf %209, %242 : vector<14x14xf32>
    %c2_110 = arith.constant 2 : index
    %c28_111 = arith.constant 28 : index
    %244 = memref.load %arg2[%c2_110, %c28_111] : memref<8x36xf32, #tpu.memory_space<smem>>
    %245 = vector.broadcast %244 : f32 to vector<14x14xf32>
    %246 = arith.mulf %245, %235 : vector<14x14xf32>
    %247 = arith.addf %213, %246 : vector<14x14xf32>
    %c3_112 = arith.constant 3 : index
    %c28_113 = arith.constant 28 : index
    %248 = memref.load %arg2[%c3_112, %c28_113] : memref<8x36xf32, #tpu.memory_space<smem>>
    %249 = vector.broadcast %248 : f32 to vector<14x14xf32>
    %250 = arith.mulf %249, %235 : vector<14x14xf32>
    %251 = arith.addf %217, %250 : vector<14x14xf32>
    %c4_114 = arith.constant 4 : index
    %c28_115 = arith.constant 28 : index
    %252 = memref.load %arg2[%c4_114, %c28_115] : memref<8x36xf32, #tpu.memory_space<smem>>
    %253 = vector.broadcast %252 : f32 to vector<14x14xf32>
    %254 = arith.mulf %253, %235 : vector<14x14xf32>
    %255 = arith.addf %221, %254 : vector<14x14xf32>
    %c5_116 = arith.constant 5 : index
    %c28_117 = arith.constant 28 : index
    %256 = memref.load %arg2[%c5_116, %c28_117] : memref<8x36xf32, #tpu.memory_space<smem>>
    %257 = vector.broadcast %256 : f32 to vector<14x14xf32>
    %258 = arith.mulf %257, %235 : vector<14x14xf32>
    %259 = arith.addf %225, %258 : vector<14x14xf32>
    %c6_118 = arith.constant 6 : index
    %c28_119 = arith.constant 28 : index
    %260 = memref.load %arg2[%c6_118, %c28_119] : memref<8x36xf32, #tpu.memory_space<smem>>
    %261 = vector.broadcast %260 : f32 to vector<14x14xf32>
    %262 = arith.mulf %261, %235 : vector<14x14xf32>
    %263 = arith.addf %229, %262 : vector<14x14xf32>
    %c7_120 = arith.constant 7 : index
    %c28_121 = arith.constant 28 : index
    %264 = memref.load %arg2[%c7_120, %c28_121] : memref<8x36xf32, #tpu.memory_space<smem>>
    %265 = vector.broadcast %264 : f32 to vector<14x14xf32>
    %266 = arith.mulf %265, %235 : vector<14x14xf32>
    %267 = arith.addf %233, %266 : vector<14x14xf32>
    %c0_122 = arith.constant 0 : index
    %c0_123 = arith.constant 0 : index
    %c0_124 = arith.constant 0 : index
    %c2_125 = arith.constant 2 : index
    %268 = vector.load %arg1[%c0_122, %c0_123, %c0_124, %c2_125] : memref<1x4x16x16xf32, #tpu.memory_space<vmem>>, vector<1x4x14x14xf32>
    %269 = vector.shape_cast %268 : vector<1x4x14x14xf32> to vector<4x14x14xf32>
    %270 = vector.extract_strided_slice %269 {offsets = [0, 0, 0], sizes = [1, 14, 14], strides = [1, 1, 1]} : vector<4x14x14xf32> to vector<1x14x14xf32>
    %271 = vector.shape_cast %270 : vector<1x14x14xf32> to vector<14x14xf32>
    %c0_126 = arith.constant 0 : index
    %c2_127 = arith.constant 2 : index
    %272 = memref.load %arg2[%c0_126, %c2_127] : memref<8x36xf32, #tpu.memory_space<smem>>
    %273 = vector.broadcast %272 : f32 to vector<14x14xf32>
    %274 = arith.mulf %273, %271 : vector<14x14xf32>
    %275 = arith.addf %239, %274 : vector<14x14xf32>
    %c1_128 = arith.constant 1 : index
    %c2_129 = arith.constant 2 : index
    %276 = memref.load %arg2[%c1_128, %c2_129] : memref<8x36xf32, #tpu.memory_space<smem>>
    %277 = vector.broadcast %276 : f32 to vector<14x14xf32>
    %278 = arith.mulf %277, %271 : vector<14x14xf32>
    %279 = arith.addf %243, %278 : vector<14x14xf32>
    %c2_130 = arith.constant 2 : index
    %c2_131 = arith.constant 2 : index
    %280 = memref.load %arg2[%c2_130, %c2_131] : memref<8x36xf32, #tpu.memory_space<smem>>
    %281 = vector.broadcast %280 : f32 to vector<14x14xf32>
    %282 = arith.mulf %281, %271 : vector<14x14xf32>
    %283 = arith.addf %247, %282 : vector<14x14xf32>
    %c3_132 = arith.constant 3 : index
    %c2_133 = arith.constant 2 : index
    %284 = memref.load %arg2[%c3_132, %c2_133] : memref<8x36xf32, #tpu.memory_space<smem>>
    %285 = vector.broadcast %284 : f32 to vector<14x14xf32>
    %286 = arith.mulf %285, %271 : vector<14x14xf32>
    %287 = arith.addf %251, %286 : vector<14x14xf32>
    %c4_134 = arith.constant 4 : index
    %c2_135 = arith.constant 2 : index
    %288 = memref.load %arg2[%c4_134, %c2_135] : memref<8x36xf32, #tpu.memory_space<smem>>
    %289 = vector.broadcast %288 : f32 to vector<14x14xf32>
    %290 = arith.mulf %289, %271 : vector<14x14xf32>
    %291 = arith.addf %255, %290 : vector<14x14xf32>
    %c5_136 = arith.constant 5 : index
    %c2_137 = arith.constant 2 : index
    %292 = memref.load %arg2[%c5_136, %c2_137] : memref<8x36xf32, #tpu.memory_space<smem>>
    %293 = vector.broadcast %292 : f32 to vector<14x14xf32>
    %294 = arith.mulf %293, %271 : vector<14x14xf32>
    %295 = arith.addf %259, %294 : vector<14x14xf32>
    %c6_138 = arith.constant 6 : index
    %c2_139 = arith.constant 2 : index
    %296 = memref.load %arg2[%c6_138, %c2_139] : memref<8x36xf32, #tpu.memory_space<smem>>
    %297 = vector.broadcast %296 : f32 to vector<14x14xf32>
    %298 = arith.mulf %297, %271 : vector<14x14xf32>
    %299 = arith.addf %263, %298 : vector<14x14xf32>
    %c7_140 = arith.constant 7 : index
    %c2_141 = arith.constant 2 : index
    %300 = memref.load %arg2[%c7_140, %c2_141] : memref<8x36xf32, #tpu.memory_space<smem>>
    %301 = vector.broadcast %300 : f32 to vector<14x14xf32>
    %302 = arith.mulf %301, %271 : vector<14x14xf32>
    %303 = arith.addf %267, %302 : vector<14x14xf32>
    %304 = vector.extract_strided_slice %269 {offsets = [1, 0, 0], sizes = [1, 14, 14], strides = [1, 1, 1]} : vector<4x14x14xf32> to vector<1x14x14xf32>
    %305 = vector.shape_cast %304 : vector<1x14x14xf32> to vector<14x14xf32>
    %c0_142 = arith.constant 0 : index
    %c11 = arith.constant 11 : index
    %306 = memref.load %arg2[%c0_142, %c11] : memref<8x36xf32, #tpu.memory_space<smem>>
    %307 = vector.broadcast %306 : f32 to vector<14x14xf32>
    %308 = arith.mulf %307, %305 : vector<14x14xf32>
    %309 = arith.addf %275, %308 : vector<14x14xf32>
    %c1_143 = arith.constant 1 : index
    %c11_144 = arith.constant 11 : index
    %310 = memref.load %arg2[%c1_143, %c11_144] : memref<8x36xf32, #tpu.memory_space<smem>>
    %311 = vector.broadcast %310 : f32 to vector<14x14xf32>
    %312 = arith.mulf %311, %305 : vector<14x14xf32>
    %313 = arith.addf %279, %312 : vector<14x14xf32>
    %c2_145 = arith.constant 2 : index
    %c11_146 = arith.constant 11 : index
    %314 = memref.load %arg2[%c2_145, %c11_146] : memref<8x36xf32, #tpu.memory_space<smem>>
    %315 = vector.broadcast %314 : f32 to vector<14x14xf32>
    %316 = arith.mulf %315, %305 : vector<14x14xf32>
    %317 = arith.addf %283, %316 : vector<14x14xf32>
    %c3_147 = arith.constant 3 : index
    %c11_148 = arith.constant 11 : index
    %318 = memref.load %arg2[%c3_147, %c11_148] : memref<8x36xf32, #tpu.memory_space<smem>>
    %319 = vector.broadcast %318 : f32 to vector<14x14xf32>
    %320 = arith.mulf %319, %305 : vector<14x14xf32>
    %321 = arith.addf %287, %320 : vector<14x14xf32>
    %c4_149 = arith.constant 4 : index
    %c11_150 = arith.constant 11 : index
    %322 = memref.load %arg2[%c4_149, %c11_150] : memref<8x36xf32, #tpu.memory_space<smem>>
    %323 = vector.broadcast %322 : f32 to vector<14x14xf32>
    %324 = arith.mulf %323, %305 : vector<14x14xf32>
    %325 = arith.addf %291, %324 : vector<14x14xf32>
    %c5_151 = arith.constant 5 : index
    %c11_152 = arith.constant 11 : index
    %326 = memref.load %arg2[%c5_151, %c11_152] : memref<8x36xf32, #tpu.memory_space<smem>>
    %327 = vector.broadcast %326 : f32 to vector<14x14xf32>
    %328 = arith.mulf %327, %305 : vector<14x14xf32>
    %329 = arith.addf %295, %328 : vector<14x14xf32>
    %c6_153 = arith.constant 6 : index
    %c11_154 = arith.constant 11 : index
    %330 = memref.load %arg2[%c6_153, %c11_154] : memref<8x36xf32, #tpu.memory_space<smem>>
    %331 = vector.broadcast %330 : f32 to vector<14x14xf32>
    %332 = arith.mulf %331, %305 : vector<14x14xf32>
    %333 = arith.addf %299, %332 : vector<14x14xf32>
    %c7_155 = arith.constant 7 : index
    %c11_156 = arith.constant 11 : index
    %334 = memref.load %arg2[%c7_155, %c11_156] : memref<8x36xf32, #tpu.memory_space<smem>>
    %335 = vector.broadcast %334 : f32 to vector<14x14xf32>
    %336 = arith.mulf %335, %305 : vector<14x14xf32>
    %337 = arith.addf %303, %336 : vector<14x14xf32>
    %338 = vector.extract_strided_slice %269 {offsets = [2, 0, 0], sizes = [1, 14, 14], strides = [1, 1, 1]} : vector<4x14x14xf32> to vector<1x14x14xf32>
    %339 = vector.shape_cast %338 : vector<1x14x14xf32> to vector<14x14xf32>
    %c0_157 = arith.constant 0 : index
    %c20 = arith.constant 20 : index
    %340 = memref.load %arg2[%c0_157, %c20] : memref<8x36xf32, #tpu.memory_space<smem>>
    %341 = vector.broadcast %340 : f32 to vector<14x14xf32>
    %342 = arith.mulf %341, %339 : vector<14x14xf32>
    %343 = arith.addf %309, %342 : vector<14x14xf32>
    %c1_158 = arith.constant 1 : index
    %c20_159 = arith.constant 20 : index
    %344 = memref.load %arg2[%c1_158, %c20_159] : memref<8x36xf32, #tpu.memory_space<smem>>
    %345 = vector.broadcast %344 : f32 to vector<14x14xf32>
    %346 = arith.mulf %345, %339 : vector<14x14xf32>
    %347 = arith.addf %313, %346 : vector<14x14xf32>
    %c2_160 = arith.constant 2 : index
    %c20_161 = arith.constant 20 : index
    %348 = memref.load %arg2[%c2_160, %c20_161] : memref<8x36xf32, #tpu.memory_space<smem>>
    %349 = vector.broadcast %348 : f32 to vector<14x14xf32>
    %350 = arith.mulf %349, %339 : vector<14x14xf32>
    %351 = arith.addf %317, %350 : vector<14x14xf32>
    %c3_162 = arith.constant 3 : index
    %c20_163 = arith.constant 20 : index
    %352 = memref.load %arg2[%c3_162, %c20_163] : memref<8x36xf32, #tpu.memory_space<smem>>
    %353 = vector.broadcast %352 : f32 to vector<14x14xf32>
    %354 = arith.mulf %353, %339 : vector<14x14xf32>
    %355 = arith.addf %321, %354 : vector<14x14xf32>
    %c4_164 = arith.constant 4 : index
    %c20_165 = arith.constant 20 : index
    %356 = memref.load %arg2[%c4_164, %c20_165] : memref<8x36xf32, #tpu.memory_space<smem>>
    %357 = vector.broadcast %356 : f32 to vector<14x14xf32>
    %358 = arith.mulf %357, %339 : vector<14x14xf32>
    %359 = arith.addf %325, %358 : vector<14x14xf32>
    %c5_166 = arith.constant 5 : index
    %c20_167 = arith.constant 20 : index
    %360 = memref.load %arg2[%c5_166, %c20_167] : memref<8x36xf32, #tpu.memory_space<smem>>
    %361 = vector.broadcast %360 : f32 to vector<14x14xf32>
    %362 = arith.mulf %361, %339 : vector<14x14xf32>
    %363 = arith.addf %329, %362 : vector<14x14xf32>
    %c6_168 = arith.constant 6 : index
    %c20_169 = arith.constant 20 : index
    %364 = memref.load %arg2[%c6_168, %c20_169] : memref<8x36xf32, #tpu.memory_space<smem>>
    %365 = vector.broadcast %364 : f32 to vector<14x14xf32>
    %366 = arith.mulf %365, %339 : vector<14x14xf32>
    %367 = arith.addf %333, %366 : vector<14x14xf32>
    %c7_170 = arith.constant 7 : index
    %c20_171 = arith.constant 20 : index
    %368 = memref.load %arg2[%c7_170, %c20_171] : memref<8x36xf32, #tpu.memory_space<smem>>
    %369 = vector.broadcast %368 : f32 to vector<14x14xf32>
    %370 = arith.mulf %369, %339 : vector<14x14xf32>
    %371 = arith.addf %337, %370 : vector<14x14xf32>
    %372 = vector.extract_strided_slice %269 {offsets = [3, 0, 0], sizes = [1, 14, 14], strides = [1, 1, 1]} : vector<4x14x14xf32> to vector<1x14x14xf32>
    %373 = vector.shape_cast %372 : vector<1x14x14xf32> to vector<14x14xf32>
    %c0_172 = arith.constant 0 : index
    %c29 = arith.constant 29 : index
    %374 = memref.load %arg2[%c0_172, %c29] : memref<8x36xf32, #tpu.memory_space<smem>>
    %375 = vector.broadcast %374 : f32 to vector<14x14xf32>
    %376 = arith.mulf %375, %373 : vector<14x14xf32>
    %377 = arith.addf %343, %376 : vector<14x14xf32>
    %c1_173 = arith.constant 1 : index
    %c29_174 = arith.constant 29 : index
    %378 = memref.load %arg2[%c1_173, %c29_174] : memref<8x36xf32, #tpu.memory_space<smem>>
    %379 = vector.broadcast %378 : f32 to vector<14x14xf32>
    %380 = arith.mulf %379, %373 : vector<14x14xf32>
    %381 = arith.addf %347, %380 : vector<14x14xf32>
    %c2_175 = arith.constant 2 : index
    %c29_176 = arith.constant 29 : index
    %382 = memref.load %arg2[%c2_175, %c29_176] : memref<8x36xf32, #tpu.memory_space<smem>>
    %383 = vector.broadcast %382 : f32 to vector<14x14xf32>
    %384 = arith.mulf %383, %373 : vector<14x14xf32>
    %385 = arith.addf %351, %384 : vector<14x14xf32>
    %c3_177 = arith.constant 3 : index
    %c29_178 = arith.constant 29 : index
    %386 = memref.load %arg2[%c3_177, %c29_178] : memref<8x36xf32, #tpu.memory_space<smem>>
    %387 = vector.broadcast %386 : f32 to vector<14x14xf32>
    %388 = arith.mulf %387, %373 : vector<14x14xf32>
    %389 = arith.addf %355, %388 : vector<14x14xf32>
    %c4_179 = arith.constant 4 : index
    %c29_180 = arith.constant 29 : index
    %390 = memref.load %arg2[%c4_179, %c29_180] : memref<8x36xf32, #tpu.memory_space<smem>>
    %391 = vector.broadcast %390 : f32 to vector<14x14xf32>
    %392 = arith.mulf %391, %373 : vector<14x14xf32>
    %393 = arith.addf %359, %392 : vector<14x14xf32>
    %c5_181 = arith.constant 5 : index
    %c29_182 = arith.constant 29 : index
    %394 = memref.load %arg2[%c5_181, %c29_182] : memref<8x36xf32, #tpu.memory_space<smem>>
    %395 = vector.broadcast %394 : f32 to vector<14x14xf32>
    %396 = arith.mulf %395, %373 : vector<14x14xf32>
    %397 = arith.addf %363, %396 : vector<14x14xf32>
    %c6_183 = arith.constant 6 : index
    %c29_184 = arith.constant 29 : index
    %398 = memref.load %arg2[%c6_183, %c29_184] : memref<8x36xf32, #tpu.memory_space<smem>>
    %399 = vector.broadcast %398 : f32 to vector<14x14xf32>
    %400 = arith.mulf %399, %373 : vector<14x14xf32>
    %401 = arith.addf %367, %400 : vector<14x14xf32>
    %c7_185 = arith.constant 7 : index
    %c29_186 = arith.constant 29 : index
    %402 = memref.load %arg2[%c7_185, %c29_186] : memref<8x36xf32, #tpu.memory_space<smem>>
    %403 = vector.broadcast %402 : f32 to vector<14x14xf32>
    %404 = arith.mulf %403, %373 : vector<14x14xf32>
    %405 = arith.addf %371, %404 : vector<14x14xf32>
    %c0_187 = arith.constant 0 : index
    %c0_188 = arith.constant 0 : index
    %c1_189 = arith.constant 1 : index
    %c0_190 = arith.constant 0 : index
    %406 = vector.load %arg1[%c0_187, %c0_188, %c1_189, %c0_190] : memref<1x4x16x16xf32, #tpu.memory_space<vmem>>, vector<1x4x14x14xf32>
    %407 = vector.shape_cast %406 : vector<1x4x14x14xf32> to vector<4x14x14xf32>
    %408 = vector.extract_strided_slice %407 {offsets = [0, 0, 0], sizes = [1, 14, 14], strides = [1, 1, 1]} : vector<4x14x14xf32> to vector<1x14x14xf32>
    %409 = vector.shape_cast %408 : vector<1x14x14xf32> to vector<14x14xf32>
    %c0_191 = arith.constant 0 : index
    %c3_192 = arith.constant 3 : index
    %410 = memref.load %arg2[%c0_191, %c3_192] : memref<8x36xf32, #tpu.memory_space<smem>>
    %411 = vector.broadcast %410 : f32 to vector<14x14xf32>
    %412 = arith.mulf %411, %409 : vector<14x14xf32>
    %413 = arith.addf %377, %412 : vector<14x14xf32>
    %c1_193 = arith.constant 1 : index
    %c3_194 = arith.constant 3 : index
    %414 = memref.load %arg2[%c1_193, %c3_194] : memref<8x36xf32, #tpu.memory_space<smem>>
    %415 = vector.broadcast %414 : f32 to vector<14x14xf32>
    %416 = arith.mulf %415, %409 : vector<14x14xf32>
    %417 = arith.addf %381, %416 : vector<14x14xf32>
    %c2_195 = arith.constant 2 : index
    %c3_196 = arith.constant 3 : index
    %418 = memref.load %arg2[%c2_195, %c3_196] : memref<8x36xf32, #tpu.memory_space<smem>>
    %419 = vector.broadcast %418 : f32 to vector<14x14xf32>
    %420 = arith.mulf %419, %409 : vector<14x14xf32>
    %421 = arith.addf %385, %420 : vector<14x14xf32>
    %c3_197 = arith.constant 3 : index
    %c3_198 = arith.constant 3 : index
    %422 = memref.load %arg2[%c3_197, %c3_198] : memref<8x36xf32, #tpu.memory_space<smem>>
    %423 = vector.broadcast %422 : f32 to vector<14x14xf32>
    %424 = arith.mulf %423, %409 : vector<14x14xf32>
    %425 = arith.addf %389, %424 : vector<14x14xf32>
    %c4_199 = arith.constant 4 : index
    %c3_200 = arith.constant 3 : index
    %426 = memref.load %arg2[%c4_199, %c3_200] : memref<8x36xf32, #tpu.memory_space<smem>>
    %427 = vector.broadcast %426 : f32 to vector<14x14xf32>
    %428 = arith.mulf %427, %409 : vector<14x14xf32>
    %429 = arith.addf %393, %428 : vector<14x14xf32>
    %c5_201 = arith.constant 5 : index
    %c3_202 = arith.constant 3 : index
    %430 = memref.load %arg2[%c5_201, %c3_202] : memref<8x36xf32, #tpu.memory_space<smem>>
    %431 = vector.broadcast %430 : f32 to vector<14x14xf32>
    %432 = arith.mulf %431, %409 : vector<14x14xf32>
    %433 = arith.addf %397, %432 : vector<14x14xf32>
    %c6_203 = arith.constant 6 : index
    %c3_204 = arith.constant 3 : index
    %434 = memref.load %arg2[%c6_203, %c3_204] : memref<8x36xf32, #tpu.memory_space<smem>>
    %435 = vector.broadcast %434 : f32 to vector<14x14xf32>
    %436 = arith.mulf %435, %409 : vector<14x14xf32>
    %437 = arith.addf %401, %436 : vector<14x14xf32>
    %c7_205 = arith.constant 7 : index
    %c3_206 = arith.constant 3 : index
    %438 = memref.load %arg2[%c7_205, %c3_206] : memref<8x36xf32, #tpu.memory_space<smem>>
    %439 = vector.broadcast %438 : f32 to vector<14x14xf32>
    %440 = arith.mulf %439, %409 : vector<14x14xf32>
    %441 = arith.addf %405, %440 : vector<14x14xf32>
    %442 = vector.extract_strided_slice %407 {offsets = [1, 0, 0], sizes = [1, 14, 14], strides = [1, 1, 1]} : vector<4x14x14xf32> to vector<1x14x14xf32>
    %443 = vector.shape_cast %442 : vector<1x14x14xf32> to vector<14x14xf32>
    %c0_207 = arith.constant 0 : index
    %c12 = arith.constant 12 : index
    %444 = memref.load %arg2[%c0_207, %c12] : memref<8x36xf32, #tpu.memory_space<smem>>
    %445 = vector.broadcast %444 : f32 to vector<14x14xf32>
    %446 = arith.mulf %445, %443 : vector<14x14xf32>
    %447 = arith.addf %413, %446 : vector<14x14xf32>
    %c1_208 = arith.constant 1 : index
    %c12_209 = arith.constant 12 : index
    %448 = memref.load %arg2[%c1_208, %c12_209] : memref<8x36xf32, #tpu.memory_space<smem>>
    %449 = vector.broadcast %448 : f32 to vector<14x14xf32>
    %450 = arith.mulf %449, %443 : vector<14x14xf32>
    %451 = arith.addf %417, %450 : vector<14x14xf32>
    %c2_210 = arith.constant 2 : index
    %c12_211 = arith.constant 12 : index
    %452 = memref.load %arg2[%c2_210, %c12_211] : memref<8x36xf32, #tpu.memory_space<smem>>
    %453 = vector.broadcast %452 : f32 to vector<14x14xf32>
    %454 = arith.mulf %453, %443 : vector<14x14xf32>
    %455 = arith.addf %421, %454 : vector<14x14xf32>
    %c3_212 = arith.constant 3 : index
    %c12_213 = arith.constant 12 : index
    %456 = memref.load %arg2[%c3_212, %c12_213] : memref<8x36xf32, #tpu.memory_space<smem>>
    %457 = vector.broadcast %456 : f32 to vector<14x14xf32>
    %458 = arith.mulf %457, %443 : vector<14x14xf32>
    %459 = arith.addf %425, %458 : vector<14x14xf32>
    %c4_214 = arith.constant 4 : index
    %c12_215 = arith.constant 12 : index
    %460 = memref.load %arg2[%c4_214, %c12_215] : memref<8x36xf32, #tpu.memory_space<smem>>
    %461 = vector.broadcast %460 : f32 to vector<14x14xf32>
    %462 = arith.mulf %461, %443 : vector<14x14xf32>
    %463 = arith.addf %429, %462 : vector<14x14xf32>
    %c5_216 = arith.constant 5 : index
    %c12_217 = arith.constant 12 : index
    %464 = memref.load %arg2[%c5_216, %c12_217] : memref<8x36xf32, #tpu.memory_space<smem>>
    %465 = vector.broadcast %464 : f32 to vector<14x14xf32>
    %466 = arith.mulf %465, %443 : vector<14x14xf32>
    %467 = arith.addf %433, %466 : vector<14x14xf32>
    %c6_218 = arith.constant 6 : index
    %c12_219 = arith.constant 12 : index
    %468 = memref.load %arg2[%c6_218, %c12_219] : memref<8x36xf32, #tpu.memory_space<smem>>
    %469 = vector.broadcast %468 : f32 to vector<14x14xf32>
    %470 = arith.mulf %469, %443 : vector<14x14xf32>
    %471 = arith.addf %437, %470 : vector<14x14xf32>
    %c7_220 = arith.constant 7 : index
    %c12_221 = arith.constant 12 : index
    %472 = memref.load %arg2[%c7_220, %c12_221] : memref<8x36xf32, #tpu.memory_space<smem>>
    %473 = vector.broadcast %472 : f32 to vector<14x14xf32>
    %474 = arith.mulf %473, %443 : vector<14x14xf32>
    %475 = arith.addf %441, %474 : vector<14x14xf32>
    %476 = vector.extract_strided_slice %407 {offsets = [2, 0, 0], sizes = [1, 14, 14], strides = [1, 1, 1]} : vector<4x14x14xf32> to vector<1x14x14xf32>
    %477 = vector.shape_cast %476 : vector<1x14x14xf32> to vector<14x14xf32>
    %c0_222 = arith.constant 0 : index
    %c21 = arith.constant 21 : index
    %478 = memref.load %arg2[%c0_222, %c21] : memref<8x36xf32, #tpu.memory_space<smem>>
    %479 = vector.broadcast %478 : f32 to vector<14x14xf32>
    %480 = arith.mulf %479, %477 : vector<14x14xf32>
    %481 = arith.addf %447, %480 : vector<14x14xf32>
    %c1_223 = arith.constant 1 : index
    %c21_224 = arith.constant 21 : index
    %482 = memref.load %arg2[%c1_223, %c21_224] : memref<8x36xf32, #tpu.memory_space<smem>>
    %483 = vector.broadcast %482 : f32 to vector<14x14xf32>
    %484 = arith.mulf %483, %477 : vector<14x14xf32>
    %485 = arith.addf %451, %484 : vector<14x14xf32>
    %c2_225 = arith.constant 2 : index
    %c21_226 = arith.constant 21 : index
    %486 = memref.load %arg2[%c2_225, %c21_226] : memref<8x36xf32, #tpu.memory_space<smem>>
    %487 = vector.broadcast %486 : f32 to vector<14x14xf32>
    %488 = arith.mulf %487, %477 : vector<14x14xf32>
    %489 = arith.addf %455, %488 : vector<14x14xf32>
    %c3_227 = arith.constant 3 : index
    %c21_228 = arith.constant 21 : index
    %490 = memref.load %arg2[%c3_227, %c21_228] : memref<8x36xf32, #tpu.memory_space<smem>>
    %491 = vector.broadcast %490 : f32 to vector<14x14xf32>
    %492 = arith.mulf %491, %477 : vector<14x14xf32>
    %493 = arith.addf %459, %492 : vector<14x14xf32>
    %c4_229 = arith.constant 4 : index
    %c21_230 = arith.constant 21 : index
    %494 = memref.load %arg2[%c4_229, %c21_230] : memref<8x36xf32, #tpu.memory_space<smem>>
    %495 = vector.broadcast %494 : f32 to vector<14x14xf32>
    %496 = arith.mulf %495, %477 : vector<14x14xf32>
    %497 = arith.addf %463, %496 : vector<14x14xf32>
    %c5_231 = arith.constant 5 : index
    %c21_232 = arith.constant 21 : index
    %498 = memref.load %arg2[%c5_231, %c21_232] : memref<8x36xf32, #tpu.memory_space<smem>>
    %499 = vector.broadcast %498 : f32 to vector<14x14xf32>
    %500 = arith.mulf %499, %477 : vector<14x14xf32>
    %501 = arith.addf %467, %500 : vector<14x14xf32>
    %c6_233 = arith.constant 6 : index
    %c21_234 = arith.constant 21 : index
    %502 = memref.load %arg2[%c6_233, %c21_234] : memref<8x36xf32, #tpu.memory_space<smem>>
    %503 = vector.broadcast %502 : f32 to vector<14x14xf32>
    %504 = arith.mulf %503, %477 : vector<14x14xf32>
    %505 = arith.addf %471, %504 : vector<14x14xf32>
    %c7_235 = arith.constant 7 : index
    %c21_236 = arith.constant 21 : index
    %506 = memref.load %arg2[%c7_235, %c21_236] : memref<8x36xf32, #tpu.memory_space<smem>>
    %507 = vector.broadcast %506 : f32 to vector<14x14xf32>
    %508 = arith.mulf %507, %477 : vector<14x14xf32>
    %509 = arith.addf %475, %508 : vector<14x14xf32>
    %510 = vector.extract_strided_slice %407 {offsets = [3, 0, 0], sizes = [1, 14, 14], strides = [1, 1, 1]} : vector<4x14x14xf32> to vector<1x14x14xf32>
    %511 = vector.shape_cast %510 : vector<1x14x14xf32> to vector<14x14xf32>
    %c0_237 = arith.constant 0 : index
    %c30 = arith.constant 30 : index
    %512 = memref.load %arg2[%c0_237, %c30] : memref<8x36xf32, #tpu.memory_space<smem>>
    %513 = vector.broadcast %512 : f32 to vector<14x14xf32>
    %514 = arith.mulf %513, %511 : vector<14x14xf32>
    %515 = arith.addf %481, %514 : vector<14x14xf32>
    %c1_238 = arith.constant 1 : index
    %c30_239 = arith.constant 30 : index
    %516 = memref.load %arg2[%c1_238, %c30_239] : memref<8x36xf32, #tpu.memory_space<smem>>
    %517 = vector.broadcast %516 : f32 to vector<14x14xf32>
    %518 = arith.mulf %517, %511 : vector<14x14xf32>
    %519 = arith.addf %485, %518 : vector<14x14xf32>
    %c2_240 = arith.constant 2 : index
    %c30_241 = arith.constant 30 : index
    %520 = memref.load %arg2[%c2_240, %c30_241] : memref<8x36xf32, #tpu.memory_space<smem>>
    %521 = vector.broadcast %520 : f32 to vector<14x14xf32>
    %522 = arith.mulf %521, %511 : vector<14x14xf32>
    %523 = arith.addf %489, %522 : vector<14x14xf32>
    %c3_242 = arith.constant 3 : index
    %c30_243 = arith.constant 30 : index
    %524 = memref.load %arg2[%c3_242, %c30_243] : memref<8x36xf32, #tpu.memory_space<smem>>
    %525 = vector.broadcast %524 : f32 to vector<14x14xf32>
    %526 = arith.mulf %525, %511 : vector<14x14xf32>
    %527 = arith.addf %493, %526 : vector<14x14xf32>
    %c4_244 = arith.constant 4 : index
    %c30_245 = arith.constant 30 : index
    %528 = memref.load %arg2[%c4_244, %c30_245] : memref<8x36xf32, #tpu.memory_space<smem>>
    %529 = vector.broadcast %528 : f32 to vector<14x14xf32>
    %530 = arith.mulf %529, %511 : vector<14x14xf32>
    %531 = arith.addf %497, %530 : vector<14x14xf32>
    %c5_246 = arith.constant 5 : index
    %c30_247 = arith.constant 30 : index
    %532 = memref.load %arg2[%c5_246, %c30_247] : memref<8x36xf32, #tpu.memory_space<smem>>
    %533 = vector.broadcast %532 : f32 to vector<14x14xf32>
    %534 = arith.mulf %533, %511 : vector<14x14xf32>
    %535 = arith.addf %501, %534 : vector<14x14xf32>
    %c6_248 = arith.constant 6 : index
    %c30_249 = arith.constant 30 : index
    %536 = memref.load %arg2[%c6_248, %c30_249] : memref<8x36xf32, #tpu.memory_space<smem>>
    %537 = vector.broadcast %536 : f32 to vector<14x14xf32>
    %538 = arith.mulf %537, %511 : vector<14x14xf32>
    %539 = arith.addf %505, %538 : vector<14x14xf32>
    %c7_250 = arith.constant 7 : index
    %c30_251 = arith.constant 30 : index
    %540 = memref.load %arg2[%c7_250, %c30_251] : memref<8x36xf32, #tpu.memory_space<smem>>
    %541 = vector.broadcast %540 : f32 to vector<14x14xf32>
    %542 = arith.mulf %541, %511 : vector<14x14xf32>
    %543 = arith.addf %509, %542 : vector<14x14xf32>
    %c0_252 = arith.constant 0 : index
    %c0_253 = arith.constant 0 : index
    %c1_254 = arith.constant 1 : index
    %c1_255 = arith.constant 1 : index
    %544 = vector.load %arg1[%c0_252, %c0_253, %c1_254, %c1_255] : memref<1x4x16x16xf32, #tpu.memory_space<vmem>>, vector<1x4x14x14xf32>
    %545 = vector.shape_cast %544 : vector<1x4x14x14xf32> to vector<4x14x14xf32>
    %546 = vector.extract_strided_slice %545 {offsets = [0, 0, 0], sizes = [1, 14, 14], strides = [1, 1, 1]} : vector<4x14x14xf32> to vector<1x14x14xf32>
    %547 = vector.shape_cast %546 : vector<1x14x14xf32> to vector<14x14xf32>
    %c0_256 = arith.constant 0 : index
    %c4_257 = arith.constant 4 : index
    %548 = memref.load %arg2[%c0_256, %c4_257] : memref<8x36xf32, #tpu.memory_space<smem>>
    %549 = vector.broadcast %548 : f32 to vector<14x14xf32>
    %550 = arith.mulf %549, %547 : vector<14x14xf32>
    %551 = arith.addf %515, %550 : vector<14x14xf32>
    %c1_258 = arith.constant 1 : index
    %c4_259 = arith.constant 4 : index
    %552 = memref.load %arg2[%c1_258, %c4_259] : memref<8x36xf32, #tpu.memory_space<smem>>
    %553 = vector.broadcast %552 : f32 to vector<14x14xf32>
    %554 = arith.mulf %553, %547 : vector<14x14xf32>
    %555 = arith.addf %519, %554 : vector<14x14xf32>
    %c2_260 = arith.constant 2 : index
    %c4_261 = arith.constant 4 : index
    %556 = memref.load %arg2[%c2_260, %c4_261] : memref<8x36xf32, #tpu.memory_space<smem>>
    %557 = vector.broadcast %556 : f32 to vector<14x14xf32>
    %558 = arith.mulf %557, %547 : vector<14x14xf32>
    %559 = arith.addf %523, %558 : vector<14x14xf32>
    %c3_262 = arith.constant 3 : index
    %c4_263 = arith.constant 4 : index
    %560 = memref.load %arg2[%c3_262, %c4_263] : memref<8x36xf32, #tpu.memory_space<smem>>
    %561 = vector.broadcast %560 : f32 to vector<14x14xf32>
    %562 = arith.mulf %561, %547 : vector<14x14xf32>
    %563 = arith.addf %527, %562 : vector<14x14xf32>
    %c4_264 = arith.constant 4 : index
    %c4_265 = arith.constant 4 : index
    %564 = memref.load %arg2[%c4_264, %c4_265] : memref<8x36xf32, #tpu.memory_space<smem>>
    %565 = vector.broadcast %564 : f32 to vector<14x14xf32>
    %566 = arith.mulf %565, %547 : vector<14x14xf32>
    %567 = arith.addf %531, %566 : vector<14x14xf32>
    %c5_266 = arith.constant 5 : index
    %c4_267 = arith.constant 4 : index
    %568 = memref.load %arg2[%c5_266, %c4_267] : memref<8x36xf32, #tpu.memory_space<smem>>
    %569 = vector.broadcast %568 : f32 to vector<14x14xf32>
    %570 = arith.mulf %569, %547 : vector<14x14xf32>
    %571 = arith.addf %535, %570 : vector<14x14xf32>
    %c6_268 = arith.constant 6 : index
    %c4_269 = arith.constant 4 : index
    %572 = memref.load %arg2[%c6_268, %c4_269] : memref<8x36xf32, #tpu.memory_space<smem>>
    %573 = vector.broadcast %572 : f32 to vector<14x14xf32>
    %574 = arith.mulf %573, %547 : vector<14x14xf32>
    %575 = arith.addf %539, %574 : vector<14x14xf32>
    %c7_270 = arith.constant 7 : index
    %c4_271 = arith.constant 4 : index
    %576 = memref.load %arg2[%c7_270, %c4_271] : memref<8x36xf32, #tpu.memory_space<smem>>
    %577 = vector.broadcast %576 : f32 to vector<14x14xf32>
    %578 = arith.mulf %577, %547 : vector<14x14xf32>
    %579 = arith.addf %543, %578 : vector<14x14xf32>
    %580 = vector.extract_strided_slice %545 {offsets = [1, 0, 0], sizes = [1, 14, 14], strides = [1, 1, 1]} : vector<4x14x14xf32> to vector<1x14x14xf32>
    %581 = vector.shape_cast %580 : vector<1x14x14xf32> to vector<14x14xf32>
    %c0_272 = arith.constant 0 : index
    %c13 = arith.constant 13 : index
    %582 = memref.load %arg2[%c0_272, %c13] : memref<8x36xf32, #tpu.memory_space<smem>>
    %583 = vector.broadcast %582 : f32 to vector<14x14xf32>
    %584 = arith.mulf %583, %581 : vector<14x14xf32>
    %585 = arith.addf %551, %584 : vector<14x14xf32>
    %c1_273 = arith.constant 1 : index
    %c13_274 = arith.constant 13 : index
    %586 = memref.load %arg2[%c1_273, %c13_274] : memref<8x36xf32, #tpu.memory_space<smem>>
    %587 = vector.broadcast %586 : f32 to vector<14x14xf32>
    %588 = arith.mulf %587, %581 : vector<14x14xf32>
    %589 = arith.addf %555, %588 : vector<14x14xf32>
    %c2_275 = arith.constant 2 : index
    %c13_276 = arith.constant 13 : index
    %590 = memref.load %arg2[%c2_275, %c13_276] : memref<8x36xf32, #tpu.memory_space<smem>>
    %591 = vector.broadcast %590 : f32 to vector<14x14xf32>
    %592 = arith.mulf %591, %581 : vector<14x14xf32>
    %593 = arith.addf %559, %592 : vector<14x14xf32>
    %c3_277 = arith.constant 3 : index
    %c13_278 = arith.constant 13 : index
    %594 = memref.load %arg2[%c3_277, %c13_278] : memref<8x36xf32, #tpu.memory_space<smem>>
    %595 = vector.broadcast %594 : f32 to vector<14x14xf32>
    %596 = arith.mulf %595, %581 : vector<14x14xf32>
    %597 = arith.addf %563, %596 : vector<14x14xf32>
    %c4_279 = arith.constant 4 : index
    %c13_280 = arith.constant 13 : index
    %598 = memref.load %arg2[%c4_279, %c13_280] : memref<8x36xf32, #tpu.memory_space<smem>>
    %599 = vector.broadcast %598 : f32 to vector<14x14xf32>
    %600 = arith.mulf %599, %581 : vector<14x14xf32>
    %601 = arith.addf %567, %600 : vector<14x14xf32>
    %c5_281 = arith.constant 5 : index
    %c13_282 = arith.constant 13 : index
    %602 = memref.load %arg2[%c5_281, %c13_282] : memref<8x36xf32, #tpu.memory_space<smem>>
    %603 = vector.broadcast %602 : f32 to vector<14x14xf32>
    %604 = arith.mulf %603, %581 : vector<14x14xf32>
    %605 = arith.addf %571, %604 : vector<14x14xf32>
    %c6_283 = arith.constant 6 : index
    %c13_284 = arith.constant 13 : index
    %606 = memref.load %arg2[%c6_283, %c13_284] : memref<8x36xf32, #tpu.memory_space<smem>>
    %607 = vector.broadcast %606 : f32 to vector<14x14xf32>
    %608 = arith.mulf %607, %581 : vector<14x14xf32>
    %609 = arith.addf %575, %608 : vector<14x14xf32>
    %c7_285 = arith.constant 7 : index
    %c13_286 = arith.constant 13 : index
    %610 = memref.load %arg2[%c7_285, %c13_286] : memref<8x36xf32, #tpu.memory_space<smem>>
    %611 = vector.broadcast %610 : f32 to vector<14x14xf32>
    %612 = arith.mulf %611, %581 : vector<14x14xf32>
    %613 = arith.addf %579, %612 : vector<14x14xf32>
    %614 = vector.extract_strided_slice %545 {offsets = [2, 0, 0], sizes = [1, 14, 14], strides = [1, 1, 1]} : vector<4x14x14xf32> to vector<1x14x14xf32>
    %615 = vector.shape_cast %614 : vector<1x14x14xf32> to vector<14x14xf32>
    %c0_287 = arith.constant 0 : index
    %c22 = arith.constant 22 : index
    %616 = memref.load %arg2[%c0_287, %c22] : memref<8x36xf32, #tpu.memory_space<smem>>
    %617 = vector.broadcast %616 : f32 to vector<14x14xf32>
    %618 = arith.mulf %617, %615 : vector<14x14xf32>
    %619 = arith.addf %585, %618 : vector<14x14xf32>
    %c1_288 = arith.constant 1 : index
    %c22_289 = arith.constant 22 : index
    %620 = memref.load %arg2[%c1_288, %c22_289] : memref<8x36xf32, #tpu.memory_space<smem>>
    %621 = vector.broadcast %620 : f32 to vector<14x14xf32>
    %622 = arith.mulf %621, %615 : vector<14x14xf32>
    %623 = arith.addf %589, %622 : vector<14x14xf32>
    %c2_290 = arith.constant 2 : index
    %c22_291 = arith.constant 22 : index
    %624 = memref.load %arg2[%c2_290, %c22_291] : memref<8x36xf32, #tpu.memory_space<smem>>
    %625 = vector.broadcast %624 : f32 to vector<14x14xf32>
    %626 = arith.mulf %625, %615 : vector<14x14xf32>
    %627 = arith.addf %593, %626 : vector<14x14xf32>
    %c3_292 = arith.constant 3 : index
    %c22_293 = arith.constant 22 : index
    %628 = memref.load %arg2[%c3_292, %c22_293] : memref<8x36xf32, #tpu.memory_space<smem>>
    %629 = vector.broadcast %628 : f32 to vector<14x14xf32>
    %630 = arith.mulf %629, %615 : vector<14x14xf32>
    %631 = arith.addf %597, %630 : vector<14x14xf32>
    %c4_294 = arith.constant 4 : index
    %c22_295 = arith.constant 22 : index
    %632 = memref.load %arg2[%c4_294, %c22_295] : memref<8x36xf32, #tpu.memory_space<smem>>
    %633 = vector.broadcast %632 : f32 to vector<14x14xf32>
    %634 = arith.mulf %633, %615 : vector<14x14xf32>
    %635 = arith.addf %601, %634 : vector<14x14xf32>
    %c5_296 = arith.constant 5 : index
    %c22_297 = arith.constant 22 : index
    %636 = memref.load %arg2[%c5_296, %c22_297] : memref<8x36xf32, #tpu.memory_space<smem>>
    %637 = vector.broadcast %636 : f32 to vector<14x14xf32>
    %638 = arith.mulf %637, %615 : vector<14x14xf32>
    %639 = arith.addf %605, %638 : vector<14x14xf32>
    %c6_298 = arith.constant 6 : index
    %c22_299 = arith.constant 22 : index
    %640 = memref.load %arg2[%c6_298, %c22_299] : memref<8x36xf32, #tpu.memory_space<smem>>
    %641 = vector.broadcast %640 : f32 to vector<14x14xf32>
    %642 = arith.mulf %641, %615 : vector<14x14xf32>
    %643 = arith.addf %609, %642 : vector<14x14xf32>
    %c7_300 = arith.constant 7 : index
    %c22_301 = arith.constant 22 : index
    %644 = memref.load %arg2[%c7_300, %c22_301] : memref<8x36xf32, #tpu.memory_space<smem>>
    %645 = vector.broadcast %644 : f32 to vector<14x14xf32>
    %646 = arith.mulf %645, %615 : vector<14x14xf32>
    %647 = arith.addf %613, %646 : vector<14x14xf32>
    %648 = vector.extract_strided_slice %545 {offsets = [3, 0, 0], sizes = [1, 14, 14], strides = [1, 1, 1]} : vector<4x14x14xf32> to vector<1x14x14xf32>
    %649 = vector.shape_cast %648 : vector<1x14x14xf32> to vector<14x14xf32>
    %c0_302 = arith.constant 0 : index
    %c31 = arith.constant 31 : index
    %650 = memref.load %arg2[%c0_302, %c31] : memref<8x36xf32, #tpu.memory_space<smem>>
    %651 = vector.broadcast %650 : f32 to vector<14x14xf32>
    %652 = arith.mulf %651, %649 : vector<14x14xf32>
    %653 = arith.addf %619, %652 : vector<14x14xf32>
    %c1_303 = arith.constant 1 : index
    %c31_304 = arith.constant 31 : index
    %654 = memref.load %arg2[%c1_303, %c31_304] : memref<8x36xf32, #tpu.memory_space<smem>>
    %655 = vector.broadcast %654 : f32 to vector<14x14xf32>
    %656 = arith.mulf %655, %649 : vector<14x14xf32>
    %657 = arith.addf %623, %656 : vector<14x14xf32>
    %c2_305 = arith.constant 2 : index
    %c31_306 = arith.constant 31 : index
    %658 = memref.load %arg2[%c2_305, %c31_306] : memref<8x36xf32, #tpu.memory_space<smem>>
    %659 = vector.broadcast %658 : f32 to vector<14x14xf32>
    %660 = arith.mulf %659, %649 : vector<14x14xf32>
    %661 = arith.addf %627, %660 : vector<14x14xf32>
    %c3_307 = arith.constant 3 : index
    %c31_308 = arith.constant 31 : index
    %662 = memref.load %arg2[%c3_307, %c31_308] : memref<8x36xf32, #tpu.memory_space<smem>>
    %663 = vector.broadcast %662 : f32 to vector<14x14xf32>
    %664 = arith.mulf %663, %649 : vector<14x14xf32>
    %665 = arith.addf %631, %664 : vector<14x14xf32>
    %c4_309 = arith.constant 4 : index
    %c31_310 = arith.constant 31 : index
    %666 = memref.load %arg2[%c4_309, %c31_310] : memref<8x36xf32, #tpu.memory_space<smem>>
    %667 = vector.broadcast %666 : f32 to vector<14x14xf32>
    %668 = arith.mulf %667, %649 : vector<14x14xf32>
    %669 = arith.addf %635, %668 : vector<14x14xf32>
    %c5_311 = arith.constant 5 : index
    %c31_312 = arith.constant 31 : index
    %670 = memref.load %arg2[%c5_311, %c31_312] : memref<8x36xf32, #tpu.memory_space<smem>>
    %671 = vector.broadcast %670 : f32 to vector<14x14xf32>
    %672 = arith.mulf %671, %649 : vector<14x14xf32>
    %673 = arith.addf %639, %672 : vector<14x14xf32>
    %c6_313 = arith.constant 6 : index
    %c31_314 = arith.constant 31 : index
    %674 = memref.load %arg2[%c6_313, %c31_314] : memref<8x36xf32, #tpu.memory_space<smem>>
    %675 = vector.broadcast %674 : f32 to vector<14x14xf32>
    %676 = arith.mulf %675, %649 : vector<14x14xf32>
    %677 = arith.addf %643, %676 : vector<14x14xf32>
    %c7_315 = arith.constant 7 : index
    %c31_316 = arith.constant 31 : index
    %678 = memref.load %arg2[%c7_315, %c31_316] : memref<8x36xf32, #tpu.memory_space<smem>>
    %679 = vector.broadcast %678 : f32 to vector<14x14xf32>
    %680 = arith.mulf %679, %649 : vector<14x14xf32>
    %681 = arith.addf %647, %680 : vector<14x14xf32>
    %c0_317 = arith.constant 0 : index
    %c0_318 = arith.constant 0 : index
    %c1_319 = arith.constant 1 : index
    %c2_320 = arith.constant 2 : index
    %682 = vector.load %arg1[%c0_317, %c0_318, %c1_319, %c2_320] : memref<1x4x16x16xf32, #tpu.memory_space<vmem>>, vector<1x4x14x14xf32>
    %683 = vector.shape_cast %682 : vector<1x4x14x14xf32> to vector<4x14x14xf32>
    %684 = vector.extract_strided_slice %683 {offsets = [0, 0, 0], sizes = [1, 14, 14], strides = [1, 1, 1]} : vector<4x14x14xf32> to vector<1x14x14xf32>
    %685 = vector.shape_cast %684 : vector<1x14x14xf32> to vector<14x14xf32>
    %c0_321 = arith.constant 0 : index
    %c5_322 = arith.constant 5 : index
    %686 = memref.load %arg2[%c0_321, %c5_322] : memref<8x36xf32, #tpu.memory_space<smem>>
    %687 = vector.broadcast %686 : f32 to vector<14x14xf32>
    %688 = arith.mulf %687, %685 : vector<14x14xf32>
    %689 = arith.addf %653, %688 : vector<14x14xf32>
    %c1_323 = arith.constant 1 : index
    %c5_324 = arith.constant 5 : index
    %690 = memref.load %arg2[%c1_323, %c5_324] : memref<8x36xf32, #tpu.memory_space<smem>>
    %691 = vector.broadcast %690 : f32 to vector<14x14xf32>
    %692 = arith.mulf %691, %685 : vector<14x14xf32>
    %693 = arith.addf %657, %692 : vector<14x14xf32>
    %c2_325 = arith.constant 2 : index
    %c5_326 = arith.constant 5 : index
    %694 = memref.load %arg2[%c2_325, %c5_326] : memref<8x36xf32, #tpu.memory_space<smem>>
    %695 = vector.broadcast %694 : f32 to vector<14x14xf32>
    %696 = arith.mulf %695, %685 : vector<14x14xf32>
    %697 = arith.addf %661, %696 : vector<14x14xf32>
    %c3_327 = arith.constant 3 : index
    %c5_328 = arith.constant 5 : index
    %698 = memref.load %arg2[%c3_327, %c5_328] : memref<8x36xf32, #tpu.memory_space<smem>>
    %699 = vector.broadcast %698 : f32 to vector<14x14xf32>
    %700 = arith.mulf %699, %685 : vector<14x14xf32>
    %701 = arith.addf %665, %700 : vector<14x14xf32>
    %c4_329 = arith.constant 4 : index
    %c5_330 = arith.constant 5 : index
    %702 = memref.load %arg2[%c4_329, %c5_330] : memref<8x36xf32, #tpu.memory_space<smem>>
    %703 = vector.broadcast %702 : f32 to vector<14x14xf32>
    %704 = arith.mulf %703, %685 : vector<14x14xf32>
    %705 = arith.addf %669, %704 : vector<14x14xf32>
    %c5_331 = arith.constant 5 : index
    %c5_332 = arith.constant 5 : index
    %706 = memref.load %arg2[%c5_331, %c5_332] : memref<8x36xf32, #tpu.memory_space<smem>>
    %707 = vector.broadcast %706 : f32 to vector<14x14xf32>
    %708 = arith.mulf %707, %685 : vector<14x14xf32>
    %709 = arith.addf %673, %708 : vector<14x14xf32>
    %c6_333 = arith.constant 6 : index
    %c5_334 = arith.constant 5 : index
    %710 = memref.load %arg2[%c6_333, %c5_334] : memref<8x36xf32, #tpu.memory_space<smem>>
    %711 = vector.broadcast %710 : f32 to vector<14x14xf32>
    %712 = arith.mulf %711, %685 : vector<14x14xf32>
    %713 = arith.addf %677, %712 : vector<14x14xf32>
    %c7_335 = arith.constant 7 : index
    %c5_336 = arith.constant 5 : index
    %714 = memref.load %arg2[%c7_335, %c5_336] : memref<8x36xf32, #tpu.memory_space<smem>>
    %715 = vector.broadcast %714 : f32 to vector<14x14xf32>
    %716 = arith.mulf %715, %685 : vector<14x14xf32>
    %717 = arith.addf %681, %716 : vector<14x14xf32>
    %718 = vector.extract_strided_slice %683 {offsets = [1, 0, 0], sizes = [1, 14, 14], strides = [1, 1, 1]} : vector<4x14x14xf32> to vector<1x14x14xf32>
    %719 = vector.shape_cast %718 : vector<1x14x14xf32> to vector<14x14xf32>
    %c0_337 = arith.constant 0 : index
    %c14 = arith.constant 14 : index
    %720 = memref.load %arg2[%c0_337, %c14] : memref<8x36xf32, #tpu.memory_space<smem>>
    %721 = vector.broadcast %720 : f32 to vector<14x14xf32>
    %722 = arith.mulf %721, %719 : vector<14x14xf32>
    %723 = arith.addf %689, %722 : vector<14x14xf32>
    %c1_338 = arith.constant 1 : index
    %c14_339 = arith.constant 14 : index
    %724 = memref.load %arg2[%c1_338, %c14_339] : memref<8x36xf32, #tpu.memory_space<smem>>
    %725 = vector.broadcast %724 : f32 to vector<14x14xf32>
    %726 = arith.mulf %725, %719 : vector<14x14xf32>
    %727 = arith.addf %693, %726 : vector<14x14xf32>
    %c2_340 = arith.constant 2 : index
    %c14_341 = arith.constant 14 : index
    %728 = memref.load %arg2[%c2_340, %c14_341] : memref<8x36xf32, #tpu.memory_space<smem>>
    %729 = vector.broadcast %728 : f32 to vector<14x14xf32>
    %730 = arith.mulf %729, %719 : vector<14x14xf32>
    %731 = arith.addf %697, %730 : vector<14x14xf32>
    %c3_342 = arith.constant 3 : index
    %c14_343 = arith.constant 14 : index
    %732 = memref.load %arg2[%c3_342, %c14_343] : memref<8x36xf32, #tpu.memory_space<smem>>
    %733 = vector.broadcast %732 : f32 to vector<14x14xf32>
    %734 = arith.mulf %733, %719 : vector<14x14xf32>
    %735 = arith.addf %701, %734 : vector<14x14xf32>
    %c4_344 = arith.constant 4 : index
    %c14_345 = arith.constant 14 : index
    %736 = memref.load %arg2[%c4_344, %c14_345] : memref<8x36xf32, #tpu.memory_space<smem>>
    %737 = vector.broadcast %736 : f32 to vector<14x14xf32>
    %738 = arith.mulf %737, %719 : vector<14x14xf32>
    %739 = arith.addf %705, %738 : vector<14x14xf32>
    %c5_346 = arith.constant 5 : index
    %c14_347 = arith.constant 14 : index
    %740 = memref.load %arg2[%c5_346, %c14_347] : memref<8x36xf32, #tpu.memory_space<smem>>
    %741 = vector.broadcast %740 : f32 to vector<14x14xf32>
    %742 = arith.mulf %741, %719 : vector<14x14xf32>
    %743 = arith.addf %709, %742 : vector<14x14xf32>
    %c6_348 = arith.constant 6 : index
    %c14_349 = arith.constant 14 : index
    %744 = memref.load %arg2[%c6_348, %c14_349] : memref<8x36xf32, #tpu.memory_space<smem>>
    %745 = vector.broadcast %744 : f32 to vector<14x14xf32>
    %746 = arith.mulf %745, %719 : vector<14x14xf32>
    %747 = arith.addf %713, %746 : vector<14x14xf32>
    %c7_350 = arith.constant 7 : index
    %c14_351 = arith.constant 14 : index
    %748 = memref.load %arg2[%c7_350, %c14_351] : memref<8x36xf32, #tpu.memory_space<smem>>
    %749 = vector.broadcast %748 : f32 to vector<14x14xf32>
    %750 = arith.mulf %749, %719 : vector<14x14xf32>
    %751 = arith.addf %717, %750 : vector<14x14xf32>
    %752 = vector.extract_strided_slice %683 {offsets = [2, 0, 0], sizes = [1, 14, 14], strides = [1, 1, 1]} : vector<4x14x14xf32> to vector<1x14x14xf32>
    %753 = vector.shape_cast %752 : vector<1x14x14xf32> to vector<14x14xf32>
    %c0_352 = arith.constant 0 : index
    %c23 = arith.constant 23 : index
    %754 = memref.load %arg2[%c0_352, %c23] : memref<8x36xf32, #tpu.memory_space<smem>>
    %755 = vector.broadcast %754 : f32 to vector<14x14xf32>
    %756 = arith.mulf %755, %753 : vector<14x14xf32>
    %757 = arith.addf %723, %756 : vector<14x14xf32>
    %c1_353 = arith.constant 1 : index
    %c23_354 = arith.constant 23 : index
    %758 = memref.load %arg2[%c1_353, %c23_354] : memref<8x36xf32, #tpu.memory_space<smem>>
    %759 = vector.broadcast %758 : f32 to vector<14x14xf32>
    %760 = arith.mulf %759, %753 : vector<14x14xf32>
    %761 = arith.addf %727, %760 : vector<14x14xf32>
    %c2_355 = arith.constant 2 : index
    %c23_356 = arith.constant 23 : index
    %762 = memref.load %arg2[%c2_355, %c23_356] : memref<8x36xf32, #tpu.memory_space<smem>>
    %763 = vector.broadcast %762 : f32 to vector<14x14xf32>
    %764 = arith.mulf %763, %753 : vector<14x14xf32>
    %765 = arith.addf %731, %764 : vector<14x14xf32>
    %c3_357 = arith.constant 3 : index
    %c23_358 = arith.constant 23 : index
    %766 = memref.load %arg2[%c3_357, %c23_358] : memref<8x36xf32, #tpu.memory_space<smem>>
    %767 = vector.broadcast %766 : f32 to vector<14x14xf32>
    %768 = arith.mulf %767, %753 : vector<14x14xf32>
    %769 = arith.addf %735, %768 : vector<14x14xf32>
    %c4_359 = arith.constant 4 : index
    %c23_360 = arith.constant 23 : index
    %770 = memref.load %arg2[%c4_359, %c23_360] : memref<8x36xf32, #tpu.memory_space<smem>>
    %771 = vector.broadcast %770 : f32 to vector<14x14xf32>
    %772 = arith.mulf %771, %753 : vector<14x14xf32>
    %773 = arith.addf %739, %772 : vector<14x14xf32>
    %c5_361 = arith.constant 5 : index
    %c23_362 = arith.constant 23 : index
    %774 = memref.load %arg2[%c5_361, %c23_362] : memref<8x36xf32, #tpu.memory_space<smem>>
    %775 = vector.broadcast %774 : f32 to vector<14x14xf32>
    %776 = arith.mulf %775, %753 : vector<14x14xf32>
    %777 = arith.addf %743, %776 : vector<14x14xf32>
    %c6_363 = arith.constant 6 : index
    %c23_364 = arith.constant 23 : index
    %778 = memref.load %arg2[%c6_363, %c23_364] : memref<8x36xf32, #tpu.memory_space<smem>>
    %779 = vector.broadcast %778 : f32 to vector<14x14xf32>
    %780 = arith.mulf %779, %753 : vector<14x14xf32>
    %781 = arith.addf %747, %780 : vector<14x14xf32>
    %c7_365 = arith.constant 7 : index
    %c23_366 = arith.constant 23 : index
    %782 = memref.load %arg2[%c7_365, %c23_366] : memref<8x36xf32, #tpu.memory_space<smem>>
    %783 = vector.broadcast %782 : f32 to vector<14x14xf32>
    %784 = arith.mulf %783, %753 : vector<14x14xf32>
    %785 = arith.addf %751, %784 : vector<14x14xf32>
    %786 = vector.extract_strided_slice %683 {offsets = [3, 0, 0], sizes = [1, 14, 14], strides = [1, 1, 1]} : vector<4x14x14xf32> to vector<1x14x14xf32>
    %787 = vector.shape_cast %786 : vector<1x14x14xf32> to vector<14x14xf32>
    %c0_367 = arith.constant 0 : index
    %c32 = arith.constant 32 : index
    %788 = memref.load %arg2[%c0_367, %c32] : memref<8x36xf32, #tpu.memory_space<smem>>
    %789 = vector.broadcast %788 : f32 to vector<14x14xf32>
    %790 = arith.mulf %789, %787 : vector<14x14xf32>
    %791 = arith.addf %757, %790 : vector<14x14xf32>
    %c1_368 = arith.constant 1 : index
    %c32_369 = arith.constant 32 : index
    %792 = memref.load %arg2[%c1_368, %c32_369] : memref<8x36xf32, #tpu.memory_space<smem>>
    %793 = vector.broadcast %792 : f32 to vector<14x14xf32>
    %794 = arith.mulf %793, %787 : vector<14x14xf32>
    %795 = arith.addf %761, %794 : vector<14x14xf32>
    %c2_370 = arith.constant 2 : index
    %c32_371 = arith.constant 32 : index
    %796 = memref.load %arg2[%c2_370, %c32_371] : memref<8x36xf32, #tpu.memory_space<smem>>
    %797 = vector.broadcast %796 : f32 to vector<14x14xf32>
    %798 = arith.mulf %797, %787 : vector<14x14xf32>
    %799 = arith.addf %765, %798 : vector<14x14xf32>
    %c3_372 = arith.constant 3 : index
    %c32_373 = arith.constant 32 : index
    %800 = memref.load %arg2[%c3_372, %c32_373] : memref<8x36xf32, #tpu.memory_space<smem>>
    %801 = vector.broadcast %800 : f32 to vector<14x14xf32>
    %802 = arith.mulf %801, %787 : vector<14x14xf32>
    %803 = arith.addf %769, %802 : vector<14x14xf32>
    %c4_374 = arith.constant 4 : index
    %c32_375 = arith.constant 32 : index
    %804 = memref.load %arg2[%c4_374, %c32_375] : memref<8x36xf32, #tpu.memory_space<smem>>
    %805 = vector.broadcast %804 : f32 to vector<14x14xf32>
    %806 = arith.mulf %805, %787 : vector<14x14xf32>
    %807 = arith.addf %773, %806 : vector<14x14xf32>
    %c5_376 = arith.constant 5 : index
    %c32_377 = arith.constant 32 : index
    %808 = memref.load %arg2[%c5_376, %c32_377] : memref<8x36xf32, #tpu.memory_space<smem>>
    %809 = vector.broadcast %808 : f32 to vector<14x14xf32>
    %810 = arith.mulf %809, %787 : vector<14x14xf32>
    %811 = arith.addf %777, %810 : vector<14x14xf32>
    %c6_378 = arith.constant 6 : index
    %c32_379 = arith.constant 32 : index
    %812 = memref.load %arg2[%c6_378, %c32_379] : memref<8x36xf32, #tpu.memory_space<smem>>
    %813 = vector.broadcast %812 : f32 to vector<14x14xf32>
    %814 = arith.mulf %813, %787 : vector<14x14xf32>
    %815 = arith.addf %781, %814 : vector<14x14xf32>
    %c7_380 = arith.constant 7 : index
    %c32_381 = arith.constant 32 : index
    %816 = memref.load %arg2[%c7_380, %c32_381] : memref<8x36xf32, #tpu.memory_space<smem>>
    %817 = vector.broadcast %816 : f32 to vector<14x14xf32>
    %818 = arith.mulf %817, %787 : vector<14x14xf32>
    %819 = arith.addf %785, %818 : vector<14x14xf32>
    %c0_382 = arith.constant 0 : index
    %c0_383 = arith.constant 0 : index
    %c2_384 = arith.constant 2 : index
    %c0_385 = arith.constant 0 : index
    %820 = vector.load %arg1[%c0_382, %c0_383, %c2_384, %c0_385] : memref<1x4x16x16xf32, #tpu.memory_space<vmem>>, vector<1x4x14x14xf32>
    %821 = vector.shape_cast %820 : vector<1x4x14x14xf32> to vector<4x14x14xf32>
    %822 = vector.extract_strided_slice %821 {offsets = [0, 0, 0], sizes = [1, 14, 14], strides = [1, 1, 1]} : vector<4x14x14xf32> to vector<1x14x14xf32>
    %823 = vector.shape_cast %822 : vector<1x14x14xf32> to vector<14x14xf32>
    %c0_386 = arith.constant 0 : index
    %c6_387 = arith.constant 6 : index
    %824 = memref.load %arg2[%c0_386, %c6_387] : memref<8x36xf32, #tpu.memory_space<smem>>
    %825 = vector.broadcast %824 : f32 to vector<14x14xf32>
    %826 = arith.mulf %825, %823 : vector<14x14xf32>
    %827 = arith.addf %791, %826 : vector<14x14xf32>
    %c1_388 = arith.constant 1 : index
    %c6_389 = arith.constant 6 : index
    %828 = memref.load %arg2[%c1_388, %c6_389] : memref<8x36xf32, #tpu.memory_space<smem>>
    %829 = vector.broadcast %828 : f32 to vector<14x14xf32>
    %830 = arith.mulf %829, %823 : vector<14x14xf32>
    %831 = arith.addf %795, %830 : vector<14x14xf32>
    %c2_390 = arith.constant 2 : index
    %c6_391 = arith.constant 6 : index
    %832 = memref.load %arg2[%c2_390, %c6_391] : memref<8x36xf32, #tpu.memory_space<smem>>
    %833 = vector.broadcast %832 : f32 to vector<14x14xf32>
    %834 = arith.mulf %833, %823 : vector<14x14xf32>
    %835 = arith.addf %799, %834 : vector<14x14xf32>
    %c3_392 = arith.constant 3 : index
    %c6_393 = arith.constant 6 : index
    %836 = memref.load %arg2[%c3_392, %c6_393] : memref<8x36xf32, #tpu.memory_space<smem>>
    %837 = vector.broadcast %836 : f32 to vector<14x14xf32>
    %838 = arith.mulf %837, %823 : vector<14x14xf32>
    %839 = arith.addf %803, %838 : vector<14x14xf32>
    %c4_394 = arith.constant 4 : index
    %c6_395 = arith.constant 6 : index
    %840 = memref.load %arg2[%c4_394, %c6_395] : memref<8x36xf32, #tpu.memory_space<smem>>
    %841 = vector.broadcast %840 : f32 to vector<14x14xf32>
    %842 = arith.mulf %841, %823 : vector<14x14xf32>
    %843 = arith.addf %807, %842 : vector<14x14xf32>
    %c5_396 = arith.constant 5 : index
    %c6_397 = arith.constant 6 : index
    %844 = memref.load %arg2[%c5_396, %c6_397] : memref<8x36xf32, #tpu.memory_space<smem>>
    %845 = vector.broadcast %844 : f32 to vector<14x14xf32>
    %846 = arith.mulf %845, %823 : vector<14x14xf32>
    %847 = arith.addf %811, %846 : vector<14x14xf32>
    %c6_398 = arith.constant 6 : index
    %c6_399 = arith.constant 6 : index
    %848 = memref.load %arg2[%c6_398, %c6_399] : memref<8x36xf32, #tpu.memory_space<smem>>
    %849 = vector.broadcast %848 : f32 to vector<14x14xf32>
    %850 = arith.mulf %849, %823 : vector<14x14xf32>
    %851 = arith.addf %815, %850 : vector<14x14xf32>
    %c7_400 = arith.constant 7 : index
    %c6_401 = arith.constant 6 : index
    %852 = memref.load %arg2[%c7_400, %c6_401] : memref<8x36xf32, #tpu.memory_space<smem>>
    %853 = vector.broadcast %852 : f32 to vector<14x14xf32>
    %854 = arith.mulf %853, %823 : vector<14x14xf32>
    %855 = arith.addf %819, %854 : vector<14x14xf32>
    %856 = vector.extract_strided_slice %821 {offsets = [1, 0, 0], sizes = [1, 14, 14], strides = [1, 1, 1]} : vector<4x14x14xf32> to vector<1x14x14xf32>
    %857 = vector.shape_cast %856 : vector<1x14x14xf32> to vector<14x14xf32>
    %c0_402 = arith.constant 0 : index
    %c15 = arith.constant 15 : index
    %858 = memref.load %arg2[%c0_402, %c15] : memref<8x36xf32, #tpu.memory_space<smem>>
    %859 = vector.broadcast %858 : f32 to vector<14x14xf32>
    %860 = arith.mulf %859, %857 : vector<14x14xf32>
    %861 = arith.addf %827, %860 : vector<14x14xf32>
    %c1_403 = arith.constant 1 : index
    %c15_404 = arith.constant 15 : index
    %862 = memref.load %arg2[%c1_403, %c15_404] : memref<8x36xf32, #tpu.memory_space<smem>>
    %863 = vector.broadcast %862 : f32 to vector<14x14xf32>
    %864 = arith.mulf %863, %857 : vector<14x14xf32>
    %865 = arith.addf %831, %864 : vector<14x14xf32>
    %c2_405 = arith.constant 2 : index
    %c15_406 = arith.constant 15 : index
    %866 = memref.load %arg2[%c2_405, %c15_406] : memref<8x36xf32, #tpu.memory_space<smem>>
    %867 = vector.broadcast %866 : f32 to vector<14x14xf32>
    %868 = arith.mulf %867, %857 : vector<14x14xf32>
    %869 = arith.addf %835, %868 : vector<14x14xf32>
    %c3_407 = arith.constant 3 : index
    %c15_408 = arith.constant 15 : index
    %870 = memref.load %arg2[%c3_407, %c15_408] : memref<8x36xf32, #tpu.memory_space<smem>>
    %871 = vector.broadcast %870 : f32 to vector<14x14xf32>
    %872 = arith.mulf %871, %857 : vector<14x14xf32>
    %873 = arith.addf %839, %872 : vector<14x14xf32>
    %c4_409 = arith.constant 4 : index
    %c15_410 = arith.constant 15 : index
    %874 = memref.load %arg2[%c4_409, %c15_410] : memref<8x36xf32, #tpu.memory_space<smem>>
    %875 = vector.broadcast %874 : f32 to vector<14x14xf32>
    %876 = arith.mulf %875, %857 : vector<14x14xf32>
    %877 = arith.addf %843, %876 : vector<14x14xf32>
    %c5_411 = arith.constant 5 : index
    %c15_412 = arith.constant 15 : index
    %878 = memref.load %arg2[%c5_411, %c15_412] : memref<8x36xf32, #tpu.memory_space<smem>>
    %879 = vector.broadcast %878 : f32 to vector<14x14xf32>
    %880 = arith.mulf %879, %857 : vector<14x14xf32>
    %881 = arith.addf %847, %880 : vector<14x14xf32>
    %c6_413 = arith.constant 6 : index
    %c15_414 = arith.constant 15 : index
    %882 = memref.load %arg2[%c6_413, %c15_414] : memref<8x36xf32, #tpu.memory_space<smem>>
    %883 = vector.broadcast %882 : f32 to vector<14x14xf32>
    %884 = arith.mulf %883, %857 : vector<14x14xf32>
    %885 = arith.addf %851, %884 : vector<14x14xf32>
    %c7_415 = arith.constant 7 : index
    %c15_416 = arith.constant 15 : index
    %886 = memref.load %arg2[%c7_415, %c15_416] : memref<8x36xf32, #tpu.memory_space<smem>>
    %887 = vector.broadcast %886 : f32 to vector<14x14xf32>
    %888 = arith.mulf %887, %857 : vector<14x14xf32>
    %889 = arith.addf %855, %888 : vector<14x14xf32>
    %890 = vector.extract_strided_slice %821 {offsets = [2, 0, 0], sizes = [1, 14, 14], strides = [1, 1, 1]} : vector<4x14x14xf32> to vector<1x14x14xf32>
    %891 = vector.shape_cast %890 : vector<1x14x14xf32> to vector<14x14xf32>
    %c0_417 = arith.constant 0 : index
    %c24 = arith.constant 24 : index
    %892 = memref.load %arg2[%c0_417, %c24] : memref<8x36xf32, #tpu.memory_space<smem>>
    %893 = vector.broadcast %892 : f32 to vector<14x14xf32>
    %894 = arith.mulf %893, %891 : vector<14x14xf32>
    %895 = arith.addf %861, %894 : vector<14x14xf32>
    %c1_418 = arith.constant 1 : index
    %c24_419 = arith.constant 24 : index
    %896 = memref.load %arg2[%c1_418, %c24_419] : memref<8x36xf32, #tpu.memory_space<smem>>
    %897 = vector.broadcast %896 : f32 to vector<14x14xf32>
    %898 = arith.mulf %897, %891 : vector<14x14xf32>
    %899 = arith.addf %865, %898 : vector<14x14xf32>
    %c2_420 = arith.constant 2 : index
    %c24_421 = arith.constant 24 : index
    %900 = memref.load %arg2[%c2_420, %c24_421] : memref<8x36xf32, #tpu.memory_space<smem>>
    %901 = vector.broadcast %900 : f32 to vector<14x14xf32>
    %902 = arith.mulf %901, %891 : vector<14x14xf32>
    %903 = arith.addf %869, %902 : vector<14x14xf32>
    %c3_422 = arith.constant 3 : index
    %c24_423 = arith.constant 24 : index
    %904 = memref.load %arg2[%c3_422, %c24_423] : memref<8x36xf32, #tpu.memory_space<smem>>
    %905 = vector.broadcast %904 : f32 to vector<14x14xf32>
    %906 = arith.mulf %905, %891 : vector<14x14xf32>
    %907 = arith.addf %873, %906 : vector<14x14xf32>
    %c4_424 = arith.constant 4 : index
    %c24_425 = arith.constant 24 : index
    %908 = memref.load %arg2[%c4_424, %c24_425] : memref<8x36xf32, #tpu.memory_space<smem>>
    %909 = vector.broadcast %908 : f32 to vector<14x14xf32>
    %910 = arith.mulf %909, %891 : vector<14x14xf32>
    %911 = arith.addf %877, %910 : vector<14x14xf32>
    %c5_426 = arith.constant 5 : index
    %c24_427 = arith.constant 24 : index
    %912 = memref.load %arg2[%c5_426, %c24_427] : memref<8x36xf32, #tpu.memory_space<smem>>
    %913 = vector.broadcast %912 : f32 to vector<14x14xf32>
    %914 = arith.mulf %913, %891 : vector<14x14xf32>
    %915 = arith.addf %881, %914 : vector<14x14xf32>
    %c6_428 = arith.constant 6 : index
    %c24_429 = arith.constant 24 : index
    %916 = memref.load %arg2[%c6_428, %c24_429] : memref<8x36xf32, #tpu.memory_space<smem>>
    %917 = vector.broadcast %916 : f32 to vector<14x14xf32>
    %918 = arith.mulf %917, %891 : vector<14x14xf32>
    %919 = arith.addf %885, %918 : vector<14x14xf32>
    %c7_430 = arith.constant 7 : index
    %c24_431 = arith.constant 24 : index
    %920 = memref.load %arg2[%c7_430, %c24_431] : memref<8x36xf32, #tpu.memory_space<smem>>
    %921 = vector.broadcast %920 : f32 to vector<14x14xf32>
    %922 = arith.mulf %921, %891 : vector<14x14xf32>
    %923 = arith.addf %889, %922 : vector<14x14xf32>
    %924 = vector.extract_strided_slice %821 {offsets = [3, 0, 0], sizes = [1, 14, 14], strides = [1, 1, 1]} : vector<4x14x14xf32> to vector<1x14x14xf32>
    %925 = vector.shape_cast %924 : vector<1x14x14xf32> to vector<14x14xf32>
    %c0_432 = arith.constant 0 : index
    %c33 = arith.constant 33 : index
    %926 = memref.load %arg2[%c0_432, %c33] : memref<8x36xf32, #tpu.memory_space<smem>>
    %927 = vector.broadcast %926 : f32 to vector<14x14xf32>
    %928 = arith.mulf %927, %925 : vector<14x14xf32>
    %929 = arith.addf %895, %928 : vector<14x14xf32>
    %c1_433 = arith.constant 1 : index
    %c33_434 = arith.constant 33 : index
    %930 = memref.load %arg2[%c1_433, %c33_434] : memref<8x36xf32, #tpu.memory_space<smem>>
    %931 = vector.broadcast %930 : f32 to vector<14x14xf32>
    %932 = arith.mulf %931, %925 : vector<14x14xf32>
    %933 = arith.addf %899, %932 : vector<14x14xf32>
    %c2_435 = arith.constant 2 : index
    %c33_436 = arith.constant 33 : index
    %934 = memref.load %arg2[%c2_435, %c33_436] : memref<8x36xf32, #tpu.memory_space<smem>>
    %935 = vector.broadcast %934 : f32 to vector<14x14xf32>
    %936 = arith.mulf %935, %925 : vector<14x14xf32>
    %937 = arith.addf %903, %936 : vector<14x14xf32>
    %c3_437 = arith.constant 3 : index
    %c33_438 = arith.constant 33 : index
    %938 = memref.load %arg2[%c3_437, %c33_438] : memref<8x36xf32, #tpu.memory_space<smem>>
    %939 = vector.broadcast %938 : f32 to vector<14x14xf32>
    %940 = arith.mulf %939, %925 : vector<14x14xf32>
    %941 = arith.addf %907, %940 : vector<14x14xf32>
    %c4_439 = arith.constant 4 : index
    %c33_440 = arith.constant 33 : index
    %942 = memref.load %arg2[%c4_439, %c33_440] : memref<8x36xf32, #tpu.memory_space<smem>>
    %943 = vector.broadcast %942 : f32 to vector<14x14xf32>
    %944 = arith.mulf %943, %925 : vector<14x14xf32>
    %945 = arith.addf %911, %944 : vector<14x14xf32>
    %c5_441 = arith.constant 5 : index
    %c33_442 = arith.constant 33 : index
    %946 = memref.load %arg2[%c5_441, %c33_442] : memref<8x36xf32, #tpu.memory_space<smem>>
    %947 = vector.broadcast %946 : f32 to vector<14x14xf32>
    %948 = arith.mulf %947, %925 : vector<14x14xf32>
    %949 = arith.addf %915, %948 : vector<14x14xf32>
    %c6_443 = arith.constant 6 : index
    %c33_444 = arith.constant 33 : index
    %950 = memref.load %arg2[%c6_443, %c33_444] : memref<8x36xf32, #tpu.memory_space<smem>>
    %951 = vector.broadcast %950 : f32 to vector<14x14xf32>
    %952 = arith.mulf %951, %925 : vector<14x14xf32>
    %953 = arith.addf %919, %952 : vector<14x14xf32>
    %c7_445 = arith.constant 7 : index
    %c33_446 = arith.constant 33 : index
    %954 = memref.load %arg2[%c7_445, %c33_446] : memref<8x36xf32, #tpu.memory_space<smem>>
    %955 = vector.broadcast %954 : f32 to vector<14x14xf32>
    %956 = arith.mulf %955, %925 : vector<14x14xf32>
    %957 = arith.addf %923, %956 : vector<14x14xf32>
    %c0_447 = arith.constant 0 : index
    %c0_448 = arith.constant 0 : index
    %c2_449 = arith.constant 2 : index
    %c1_450 = arith.constant 1 : index
    %958 = vector.load %arg1[%c0_447, %c0_448, %c2_449, %c1_450] : memref<1x4x16x16xf32, #tpu.memory_space<vmem>>, vector<1x4x14x14xf32>
    %959 = vector.shape_cast %958 : vector<1x4x14x14xf32> to vector<4x14x14xf32>
    %960 = vector.extract_strided_slice %959 {offsets = [0, 0, 0], sizes = [1, 14, 14], strides = [1, 1, 1]} : vector<4x14x14xf32> to vector<1x14x14xf32>
    %961 = vector.shape_cast %960 : vector<1x14x14xf32> to vector<14x14xf32>
    %c0_451 = arith.constant 0 : index
    %c7_452 = arith.constant 7 : index
    %962 = memref.load %arg2[%c0_451, %c7_452] : memref<8x36xf32, #tpu.memory_space<smem>>
    %963 = vector.broadcast %962 : f32 to vector<14x14xf32>
    %964 = arith.mulf %963, %961 : vector<14x14xf32>
    %965 = arith.addf %929, %964 : vector<14x14xf32>
    %c1_453 = arith.constant 1 : index
    %c7_454 = arith.constant 7 : index
    %966 = memref.load %arg2[%c1_453, %c7_454] : memref<8x36xf32, #tpu.memory_space<smem>>
    %967 = vector.broadcast %966 : f32 to vector<14x14xf32>
    %968 = arith.mulf %967, %961 : vector<14x14xf32>
    %969 = arith.addf %933, %968 : vector<14x14xf32>
    %c2_455 = arith.constant 2 : index
    %c7_456 = arith.constant 7 : index
    %970 = memref.load %arg2[%c2_455, %c7_456] : memref<8x36xf32, #tpu.memory_space<smem>>
    %971 = vector.broadcast %970 : f32 to vector<14x14xf32>
    %972 = arith.mulf %971, %961 : vector<14x14xf32>
    %973 = arith.addf %937, %972 : vector<14x14xf32>
    %c3_457 = arith.constant 3 : index
    %c7_458 = arith.constant 7 : index
    %974 = memref.load %arg2[%c3_457, %c7_458] : memref<8x36xf32, #tpu.memory_space<smem>>
    %975 = vector.broadcast %974 : f32 to vector<14x14xf32>
    %976 = arith.mulf %975, %961 : vector<14x14xf32>
    %977 = arith.addf %941, %976 : vector<14x14xf32>
    %c4_459 = arith.constant 4 : index
    %c7_460 = arith.constant 7 : index
    %978 = memref.load %arg2[%c4_459, %c7_460] : memref<8x36xf32, #tpu.memory_space<smem>>
    %979 = vector.broadcast %978 : f32 to vector<14x14xf32>
    %980 = arith.mulf %979, %961 : vector<14x14xf32>
    %981 = arith.addf %945, %980 : vector<14x14xf32>
    %c5_461 = arith.constant 5 : index
    %c7_462 = arith.constant 7 : index
    %982 = memref.load %arg2[%c5_461, %c7_462] : memref<8x36xf32, #tpu.memory_space<smem>>
    %983 = vector.broadcast %982 : f32 to vector<14x14xf32>
    %984 = arith.mulf %983, %961 : vector<14x14xf32>
    %985 = arith.addf %949, %984 : vector<14x14xf32>
    %c6_463 = arith.constant 6 : index
    %c7_464 = arith.constant 7 : index
    %986 = memref.load %arg2[%c6_463, %c7_464] : memref<8x36xf32, #tpu.memory_space<smem>>
    %987 = vector.broadcast %986 : f32 to vector<14x14xf32>
    %988 = arith.mulf %987, %961 : vector<14x14xf32>
    %989 = arith.addf %953, %988 : vector<14x14xf32>
    %c7_465 = arith.constant 7 : index
    %c7_466 = arith.constant 7 : index
    %990 = memref.load %arg2[%c7_465, %c7_466] : memref<8x36xf32, #tpu.memory_space<smem>>
    %991 = vector.broadcast %990 : f32 to vector<14x14xf32>
    %992 = arith.mulf %991, %961 : vector<14x14xf32>
    %993 = arith.addf %957, %992 : vector<14x14xf32>
    %994 = vector.extract_strided_slice %959 {offsets = [1, 0, 0], sizes = [1, 14, 14], strides = [1, 1, 1]} : vector<4x14x14xf32> to vector<1x14x14xf32>
    %995 = vector.shape_cast %994 : vector<1x14x14xf32> to vector<14x14xf32>
    %c0_467 = arith.constant 0 : index
    %c16 = arith.constant 16 : index
    %996 = memref.load %arg2[%c0_467, %c16] : memref<8x36xf32, #tpu.memory_space<smem>>
    %997 = vector.broadcast %996 : f32 to vector<14x14xf32>
    %998 = arith.mulf %997, %995 : vector<14x14xf32>
    %999 = arith.addf %965, %998 : vector<14x14xf32>
    %c1_468 = arith.constant 1 : index
    %c16_469 = arith.constant 16 : index
    %1000 = memref.load %arg2[%c1_468, %c16_469] : memref<8x36xf32, #tpu.memory_space<smem>>
    %1001 = vector.broadcast %1000 : f32 to vector<14x14xf32>
    %1002 = arith.mulf %1001, %995 : vector<14x14xf32>
    %1003 = arith.addf %969, %1002 : vector<14x14xf32>
    %c2_470 = arith.constant 2 : index
    %c16_471 = arith.constant 16 : index
    %1004 = memref.load %arg2[%c2_470, %c16_471] : memref<8x36xf32, #tpu.memory_space<smem>>
    %1005 = vector.broadcast %1004 : f32 to vector<14x14xf32>
    %1006 = arith.mulf %1005, %995 : vector<14x14xf32>
    %1007 = arith.addf %973, %1006 : vector<14x14xf32>
    %c3_472 = arith.constant 3 : index
    %c16_473 = arith.constant 16 : index
    %1008 = memref.load %arg2[%c3_472, %c16_473] : memref<8x36xf32, #tpu.memory_space<smem>>
    %1009 = vector.broadcast %1008 : f32 to vector<14x14xf32>
    %1010 = arith.mulf %1009, %995 : vector<14x14xf32>
    %1011 = arith.addf %977, %1010 : vector<14x14xf32>
    %c4_474 = arith.constant 4 : index
    %c16_475 = arith.constant 16 : index
    %1012 = memref.load %arg2[%c4_474, %c16_475] : memref<8x36xf32, #tpu.memory_space<smem>>
    %1013 = vector.broadcast %1012 : f32 to vector<14x14xf32>
    %1014 = arith.mulf %1013, %995 : vector<14x14xf32>
    %1015 = arith.addf %981, %1014 : vector<14x14xf32>
    %c5_476 = arith.constant 5 : index
    %c16_477 = arith.constant 16 : index
    %1016 = memref.load %arg2[%c5_476, %c16_477] : memref<8x36xf32, #tpu.memory_space<smem>>
    %1017 = vector.broadcast %1016 : f32 to vector<14x14xf32>
    %1018 = arith.mulf %1017, %995 : vector<14x14xf32>
    %1019 = arith.addf %985, %1018 : vector<14x14xf32>
    %c6_478 = arith.constant 6 : index
    %c16_479 = arith.constant 16 : index
    %1020 = memref.load %arg2[%c6_478, %c16_479] : memref<8x36xf32, #tpu.memory_space<smem>>
    %1021 = vector.broadcast %1020 : f32 to vector<14x14xf32>
    %1022 = arith.mulf %1021, %995 : vector<14x14xf32>
    %1023 = arith.addf %989, %1022 : vector<14x14xf32>
    %c7_480 = arith.constant 7 : index
    %c16_481 = arith.constant 16 : index
    %1024 = memref.load %arg2[%c7_480, %c16_481] : memref<8x36xf32, #tpu.memory_space<smem>>
    %1025 = vector.broadcast %1024 : f32 to vector<14x14xf32>
    %1026 = arith.mulf %1025, %995 : vector<14x14xf32>
    %1027 = arith.addf %993, %1026 : vector<14x14xf32>
    %1028 = vector.extract_strided_slice %959 {offsets = [2, 0, 0], sizes = [1, 14, 14], strides = [1, 1, 1]} : vector<4x14x14xf32> to vector<1x14x14xf32>
    %1029 = vector.shape_cast %1028 : vector<1x14x14xf32> to vector<14x14xf32>
    %c0_482 = arith.constant 0 : index
    %c25 = arith.constant 25 : index
    %1030 = memref.load %arg2[%c0_482, %c25] : memref<8x36xf32, #tpu.memory_space<smem>>
    %1031 = vector.broadcast %1030 : f32 to vector<14x14xf32>
    %1032 = arith.mulf %1031, %1029 : vector<14x14xf32>
    %1033 = arith.addf %999, %1032 : vector<14x14xf32>
    %c1_483 = arith.constant 1 : index
    %c25_484 = arith.constant 25 : index
    %1034 = memref.load %arg2[%c1_483, %c25_484] : memref<8x36xf32, #tpu.memory_space<smem>>
    %1035 = vector.broadcast %1034 : f32 to vector<14x14xf32>
    %1036 = arith.mulf %1035, %1029 : vector<14x14xf32>
    %1037 = arith.addf %1003, %1036 : vector<14x14xf32>
    %c2_485 = arith.constant 2 : index
    %c25_486 = arith.constant 25 : index
    %1038 = memref.load %arg2[%c2_485, %c25_486] : memref<8x36xf32, #tpu.memory_space<smem>>
    %1039 = vector.broadcast %1038 : f32 to vector<14x14xf32>
    %1040 = arith.mulf %1039, %1029 : vector<14x14xf32>
    %1041 = arith.addf %1007, %1040 : vector<14x14xf32>
    %c3_487 = arith.constant 3 : index
    %c25_488 = arith.constant 25 : index
    %1042 = memref.load %arg2[%c3_487, %c25_488] : memref<8x36xf32, #tpu.memory_space<smem>>
    %1043 = vector.broadcast %1042 : f32 to vector<14x14xf32>
    %1044 = arith.mulf %1043, %1029 : vector<14x14xf32>
    %1045 = arith.addf %1011, %1044 : vector<14x14xf32>
    %c4_489 = arith.constant 4 : index
    %c25_490 = arith.constant 25 : index
    %1046 = memref.load %arg2[%c4_489, %c25_490] : memref<8x36xf32, #tpu.memory_space<smem>>
    %1047 = vector.broadcast %1046 : f32 to vector<14x14xf32>
    %1048 = arith.mulf %1047, %1029 : vector<14x14xf32>
    %1049 = arith.addf %1015, %1048 : vector<14x14xf32>
    %c5_491 = arith.constant 5 : index
    %c25_492 = arith.constant 25 : index
    %1050 = memref.load %arg2[%c5_491, %c25_492] : memref<8x36xf32, #tpu.memory_space<smem>>
    %1051 = vector.broadcast %1050 : f32 to vector<14x14xf32>
    %1052 = arith.mulf %1051, %1029 : vector<14x14xf32>
    %1053 = arith.addf %1019, %1052 : vector<14x14xf32>
    %c6_493 = arith.constant 6 : index
    %c25_494 = arith.constant 25 : index
    %1054 = memref.load %arg2[%c6_493, %c25_494] : memref<8x36xf32, #tpu.memory_space<smem>>
    %1055 = vector.broadcast %1054 : f32 to vector<14x14xf32>
    %1056 = arith.mulf %1055, %1029 : vector<14x14xf32>
    %1057 = arith.addf %1023, %1056 : vector<14x14xf32>
    %c7_495 = arith.constant 7 : index
    %c25_496 = arith.constant 25 : index
    %1058 = memref.load %arg2[%c7_495, %c25_496] : memref<8x36xf32, #tpu.memory_space<smem>>
    %1059 = vector.broadcast %1058 : f32 to vector<14x14xf32>
    %1060 = arith.mulf %1059, %1029 : vector<14x14xf32>
    %1061 = arith.addf %1027, %1060 : vector<14x14xf32>
    %1062 = vector.extract_strided_slice %959 {offsets = [3, 0, 0], sizes = [1, 14, 14], strides = [1, 1, 1]} : vector<4x14x14xf32> to vector<1x14x14xf32>
    %1063 = vector.shape_cast %1062 : vector<1x14x14xf32> to vector<14x14xf32>
    %c0_497 = arith.constant 0 : index
    %c34 = arith.constant 34 : index
    %1064 = memref.load %arg2[%c0_497, %c34] : memref<8x36xf32, #tpu.memory_space<smem>>
    %1065 = vector.broadcast %1064 : f32 to vector<14x14xf32>
    %1066 = arith.mulf %1065, %1063 : vector<14x14xf32>
    %1067 = arith.addf %1033, %1066 : vector<14x14xf32>
    %c1_498 = arith.constant 1 : index
    %c34_499 = arith.constant 34 : index
    %1068 = memref.load %arg2[%c1_498, %c34_499] : memref<8x36xf32, #tpu.memory_space<smem>>
    %1069 = vector.broadcast %1068 : f32 to vector<14x14xf32>
    %1070 = arith.mulf %1069, %1063 : vector<14x14xf32>
    %1071 = arith.addf %1037, %1070 : vector<14x14xf32>
    %c2_500 = arith.constant 2 : index
    %c34_501 = arith.constant 34 : index
    %1072 = memref.load %arg2[%c2_500, %c34_501] : memref<8x36xf32, #tpu.memory_space<smem>>
    %1073 = vector.broadcast %1072 : f32 to vector<14x14xf32>
    %1074 = arith.mulf %1073, %1063 : vector<14x14xf32>
    %1075 = arith.addf %1041, %1074 : vector<14x14xf32>
    %c3_502 = arith.constant 3 : index
    %c34_503 = arith.constant 34 : index
    %1076 = memref.load %arg2[%c3_502, %c34_503] : memref<8x36xf32, #tpu.memory_space<smem>>
    %1077 = vector.broadcast %1076 : f32 to vector<14x14xf32>
    %1078 = arith.mulf %1077, %1063 : vector<14x14xf32>
    %1079 = arith.addf %1045, %1078 : vector<14x14xf32>
    %c4_504 = arith.constant 4 : index
    %c34_505 = arith.constant 34 : index
    %1080 = memref.load %arg2[%c4_504, %c34_505] : memref<8x36xf32, #tpu.memory_space<smem>>
    %1081 = vector.broadcast %1080 : f32 to vector<14x14xf32>
    %1082 = arith.mulf %1081, %1063 : vector<14x14xf32>
    %1083 = arith.addf %1049, %1082 : vector<14x14xf32>
    %c5_506 = arith.constant 5 : index
    %c34_507 = arith.constant 34 : index
    %1084 = memref.load %arg2[%c5_506, %c34_507] : memref<8x36xf32, #tpu.memory_space<smem>>
    %1085 = vector.broadcast %1084 : f32 to vector<14x14xf32>
    %1086 = arith.mulf %1085, %1063 : vector<14x14xf32>
    %1087 = arith.addf %1053, %1086 : vector<14x14xf32>
    %c6_508 = arith.constant 6 : index
    %c34_509 = arith.constant 34 : index
    %1088 = memref.load %arg2[%c6_508, %c34_509] : memref<8x36xf32, #tpu.memory_space<smem>>
    %1089 = vector.broadcast %1088 : f32 to vector<14x14xf32>
    %1090 = arith.mulf %1089, %1063 : vector<14x14xf32>
    %1091 = arith.addf %1057, %1090 : vector<14x14xf32>
    %c7_510 = arith.constant 7 : index
    %c34_511 = arith.constant 34 : index
    %1092 = memref.load %arg2[%c7_510, %c34_511] : memref<8x36xf32, #tpu.memory_space<smem>>
    %1093 = vector.broadcast %1092 : f32 to vector<14x14xf32>
    %1094 = arith.mulf %1093, %1063 : vector<14x14xf32>
    %1095 = arith.addf %1061, %1094 : vector<14x14xf32>
    %c0_512 = arith.constant 0 : index
    %c0_513 = arith.constant 0 : index
    %c2_514 = arith.constant 2 : index
    %c2_515 = arith.constant 2 : index
    %1096 = vector.load %arg1[%c0_512, %c0_513, %c2_514, %c2_515] : memref<1x4x16x16xf32, #tpu.memory_space<vmem>>, vector<1x4x14x14xf32>
    %1097 = vector.shape_cast %1096 : vector<1x4x14x14xf32> to vector<4x14x14xf32>
    %1098 = vector.extract_strided_slice %1097 {offsets = [0, 0, 0], sizes = [1, 14, 14], strides = [1, 1, 1]} : vector<4x14x14xf32> to vector<1x14x14xf32>
    %1099 = vector.shape_cast %1098 : vector<1x14x14xf32> to vector<14x14xf32>
    %c0_516 = arith.constant 0 : index
    %c8 = arith.constant 8 : index
    %1100 = memref.load %arg2[%c0_516, %c8] : memref<8x36xf32, #tpu.memory_space<smem>>
    %1101 = vector.broadcast %1100 : f32 to vector<14x14xf32>
    %1102 = arith.mulf %1101, %1099 : vector<14x14xf32>
    %1103 = arith.addf %1067, %1102 : vector<14x14xf32>
    %c1_517 = arith.constant 1 : index
    %c8_518 = arith.constant 8 : index
    %1104 = memref.load %arg2[%c1_517, %c8_518] : memref<8x36xf32, #tpu.memory_space<smem>>
    %1105 = vector.broadcast %1104 : f32 to vector<14x14xf32>
    %1106 = arith.mulf %1105, %1099 : vector<14x14xf32>
    %1107 = arith.addf %1071, %1106 : vector<14x14xf32>
    %c2_519 = arith.constant 2 : index
    %c8_520 = arith.constant 8 : index
    %1108 = memref.load %arg2[%c2_519, %c8_520] : memref<8x36xf32, #tpu.memory_space<smem>>
    %1109 = vector.broadcast %1108 : f32 to vector<14x14xf32>
    %1110 = arith.mulf %1109, %1099 : vector<14x14xf32>
    %1111 = arith.addf %1075, %1110 : vector<14x14xf32>
    %c3_521 = arith.constant 3 : index
    %c8_522 = arith.constant 8 : index
    %1112 = memref.load %arg2[%c3_521, %c8_522] : memref<8x36xf32, #tpu.memory_space<smem>>
    %1113 = vector.broadcast %1112 : f32 to vector<14x14xf32>
    %1114 = arith.mulf %1113, %1099 : vector<14x14xf32>
    %1115 = arith.addf %1079, %1114 : vector<14x14xf32>
    %c4_523 = arith.constant 4 : index
    %c8_524 = arith.constant 8 : index
    %1116 = memref.load %arg2[%c4_523, %c8_524] : memref<8x36xf32, #tpu.memory_space<smem>>
    %1117 = vector.broadcast %1116 : f32 to vector<14x14xf32>
    %1118 = arith.mulf %1117, %1099 : vector<14x14xf32>
    %1119 = arith.addf %1083, %1118 : vector<14x14xf32>
    %c5_525 = arith.constant 5 : index
    %c8_526 = arith.constant 8 : index
    %1120 = memref.load %arg2[%c5_525, %c8_526] : memref<8x36xf32, #tpu.memory_space<smem>>
    %1121 = vector.broadcast %1120 : f32 to vector<14x14xf32>
    %1122 = arith.mulf %1121, %1099 : vector<14x14xf32>
    %1123 = arith.addf %1087, %1122 : vector<14x14xf32>
    %c6_527 = arith.constant 6 : index
    %c8_528 = arith.constant 8 : index
    %1124 = memref.load %arg2[%c6_527, %c8_528] : memref<8x36xf32, #tpu.memory_space<smem>>
    %1125 = vector.broadcast %1124 : f32 to vector<14x14xf32>
    %1126 = arith.mulf %1125, %1099 : vector<14x14xf32>
    %1127 = arith.addf %1091, %1126 : vector<14x14xf32>
    %c7_529 = arith.constant 7 : index
    %c8_530 = arith.constant 8 : index
    %1128 = memref.load %arg2[%c7_529, %c8_530] : memref<8x36xf32, #tpu.memory_space<smem>>
    %1129 = vector.broadcast %1128 : f32 to vector<14x14xf32>
    %1130 = arith.mulf %1129, %1099 : vector<14x14xf32>
    %1131 = arith.addf %1095, %1130 : vector<14x14xf32>
    %1132 = vector.extract_strided_slice %1097 {offsets = [1, 0, 0], sizes = [1, 14, 14], strides = [1, 1, 1]} : vector<4x14x14xf32> to vector<1x14x14xf32>
    %1133 = vector.shape_cast %1132 : vector<1x14x14xf32> to vector<14x14xf32>
    %c0_531 = arith.constant 0 : index
    %c17 = arith.constant 17 : index
    %1134 = memref.load %arg2[%c0_531, %c17] : memref<8x36xf32, #tpu.memory_space<smem>>
    %1135 = vector.broadcast %1134 : f32 to vector<14x14xf32>
    %1136 = arith.mulf %1135, %1133 : vector<14x14xf32>
    %1137 = arith.addf %1103, %1136 : vector<14x14xf32>
    %c1_532 = arith.constant 1 : index
    %c17_533 = arith.constant 17 : index
    %1138 = memref.load %arg2[%c1_532, %c17_533] : memref<8x36xf32, #tpu.memory_space<smem>>
    %1139 = vector.broadcast %1138 : f32 to vector<14x14xf32>
    %1140 = arith.mulf %1139, %1133 : vector<14x14xf32>
    %1141 = arith.addf %1107, %1140 : vector<14x14xf32>
    %c2_534 = arith.constant 2 : index
    %c17_535 = arith.constant 17 : index
    %1142 = memref.load %arg2[%c2_534, %c17_535] : memref<8x36xf32, #tpu.memory_space<smem>>
    %1143 = vector.broadcast %1142 : f32 to vector<14x14xf32>
    %1144 = arith.mulf %1143, %1133 : vector<14x14xf32>
    %1145 = arith.addf %1111, %1144 : vector<14x14xf32>
    %c3_536 = arith.constant 3 : index
    %c17_537 = arith.constant 17 : index
    %1146 = memref.load %arg2[%c3_536, %c17_537] : memref<8x36xf32, #tpu.memory_space<smem>>
    %1147 = vector.broadcast %1146 : f32 to vector<14x14xf32>
    %1148 = arith.mulf %1147, %1133 : vector<14x14xf32>
    %1149 = arith.addf %1115, %1148 : vector<14x14xf32>
    %c4_538 = arith.constant 4 : index
    %c17_539 = arith.constant 17 : index
    %1150 = memref.load %arg2[%c4_538, %c17_539] : memref<8x36xf32, #tpu.memory_space<smem>>
    %1151 = vector.broadcast %1150 : f32 to vector<14x14xf32>
    %1152 = arith.mulf %1151, %1133 : vector<14x14xf32>
    %1153 = arith.addf %1119, %1152 : vector<14x14xf32>
    %c5_540 = arith.constant 5 : index
    %c17_541 = arith.constant 17 : index
    %1154 = memref.load %arg2[%c5_540, %c17_541] : memref<8x36xf32, #tpu.memory_space<smem>>
    %1155 = vector.broadcast %1154 : f32 to vector<14x14xf32>
    %1156 = arith.mulf %1155, %1133 : vector<14x14xf32>
    %1157 = arith.addf %1123, %1156 : vector<14x14xf32>
    %c6_542 = arith.constant 6 : index
    %c17_543 = arith.constant 17 : index
    %1158 = memref.load %arg2[%c6_542, %c17_543] : memref<8x36xf32, #tpu.memory_space<smem>>
    %1159 = vector.broadcast %1158 : f32 to vector<14x14xf32>
    %1160 = arith.mulf %1159, %1133 : vector<14x14xf32>
    %1161 = arith.addf %1127, %1160 : vector<14x14xf32>
    %c7_544 = arith.constant 7 : index
    %c17_545 = arith.constant 17 : index
    %1162 = memref.load %arg2[%c7_544, %c17_545] : memref<8x36xf32, #tpu.memory_space<smem>>
    %1163 = vector.broadcast %1162 : f32 to vector<14x14xf32>
    %1164 = arith.mulf %1163, %1133 : vector<14x14xf32>
    %1165 = arith.addf %1131, %1164 : vector<14x14xf32>
    %1166 = vector.extract_strided_slice %1097 {offsets = [2, 0, 0], sizes = [1, 14, 14], strides = [1, 1, 1]} : vector<4x14x14xf32> to vector<1x14x14xf32>
    %1167 = vector.shape_cast %1166 : vector<1x14x14xf32> to vector<14x14xf32>
    %c0_546 = arith.constant 0 : index
    %c26 = arith.constant 26 : index
    %1168 = memref.load %arg2[%c0_546, %c26] : memref<8x36xf32, #tpu.memory_space<smem>>
    %1169 = vector.broadcast %1168 : f32 to vector<14x14xf32>
    %1170 = arith.mulf %1169, %1167 : vector<14x14xf32>
    %1171 = arith.addf %1137, %1170 : vector<14x14xf32>
    %c1_547 = arith.constant 1 : index
    %c26_548 = arith.constant 26 : index
    %1172 = memref.load %arg2[%c1_547, %c26_548] : memref<8x36xf32, #tpu.memory_space<smem>>
    %1173 = vector.broadcast %1172 : f32 to vector<14x14xf32>
    %1174 = arith.mulf %1173, %1167 : vector<14x14xf32>
    %1175 = arith.addf %1141, %1174 : vector<14x14xf32>
    %c2_549 = arith.constant 2 : index
    %c26_550 = arith.constant 26 : index
    %1176 = memref.load %arg2[%c2_549, %c26_550] : memref<8x36xf32, #tpu.memory_space<smem>>
    %1177 = vector.broadcast %1176 : f32 to vector<14x14xf32>
    %1178 = arith.mulf %1177, %1167 : vector<14x14xf32>
    %1179 = arith.addf %1145, %1178 : vector<14x14xf32>
    %c3_551 = arith.constant 3 : index
    %c26_552 = arith.constant 26 : index
    %1180 = memref.load %arg2[%c3_551, %c26_552] : memref<8x36xf32, #tpu.memory_space<smem>>
    %1181 = vector.broadcast %1180 : f32 to vector<14x14xf32>
    %1182 = arith.mulf %1181, %1167 : vector<14x14xf32>
    %1183 = arith.addf %1149, %1182 : vector<14x14xf32>
    %c4_553 = arith.constant 4 : index
    %c26_554 = arith.constant 26 : index
    %1184 = memref.load %arg2[%c4_553, %c26_554] : memref<8x36xf32, #tpu.memory_space<smem>>
    %1185 = vector.broadcast %1184 : f32 to vector<14x14xf32>
    %1186 = arith.mulf %1185, %1167 : vector<14x14xf32>
    %1187 = arith.addf %1153, %1186 : vector<14x14xf32>
    %c5_555 = arith.constant 5 : index
    %c26_556 = arith.constant 26 : index
    %1188 = memref.load %arg2[%c5_555, %c26_556] : memref<8x36xf32, #tpu.memory_space<smem>>
    %1189 = vector.broadcast %1188 : f32 to vector<14x14xf32>
    %1190 = arith.mulf %1189, %1167 : vector<14x14xf32>
    %1191 = arith.addf %1157, %1190 : vector<14x14xf32>
    %c6_557 = arith.constant 6 : index
    %c26_558 = arith.constant 26 : index
    %1192 = memref.load %arg2[%c6_557, %c26_558] : memref<8x36xf32, #tpu.memory_space<smem>>
    %1193 = vector.broadcast %1192 : f32 to vector<14x14xf32>
    %1194 = arith.mulf %1193, %1167 : vector<14x14xf32>
    %1195 = arith.addf %1161, %1194 : vector<14x14xf32>
    %c7_559 = arith.constant 7 : index
    %c26_560 = arith.constant 26 : index
    %1196 = memref.load %arg2[%c7_559, %c26_560] : memref<8x36xf32, #tpu.memory_space<smem>>
    %1197 = vector.broadcast %1196 : f32 to vector<14x14xf32>
    %1198 = arith.mulf %1197, %1167 : vector<14x14xf32>
    %1199 = arith.addf %1165, %1198 : vector<14x14xf32>
    %1200 = vector.extract_strided_slice %1097 {offsets = [3, 0, 0], sizes = [1, 14, 14], strides = [1, 1, 1]} : vector<4x14x14xf32> to vector<1x14x14xf32>
    %1201 = vector.shape_cast %1200 : vector<1x14x14xf32> to vector<14x14xf32>
    %c0_561 = arith.constant 0 : index
    %c35 = arith.constant 35 : index
    %1202 = memref.load %arg2[%c0_561, %c35] : memref<8x36xf32, #tpu.memory_space<smem>>
    %1203 = vector.broadcast %1202 : f32 to vector<14x14xf32>
    %1204 = arith.mulf %1203, %1201 : vector<14x14xf32>
    %1205 = arith.addf %1171, %1204 : vector<14x14xf32>
    %c1_562 = arith.constant 1 : index
    %c35_563 = arith.constant 35 : index
    %1206 = memref.load %arg2[%c1_562, %c35_563] : memref<8x36xf32, #tpu.memory_space<smem>>
    %1207 = vector.broadcast %1206 : f32 to vector<14x14xf32>
    %1208 = arith.mulf %1207, %1201 : vector<14x14xf32>
    %1209 = arith.addf %1175, %1208 : vector<14x14xf32>
    %c2_564 = arith.constant 2 : index
    %c35_565 = arith.constant 35 : index
    %1210 = memref.load %arg2[%c2_564, %c35_565] : memref<8x36xf32, #tpu.memory_space<smem>>
    %1211 = vector.broadcast %1210 : f32 to vector<14x14xf32>
    %1212 = arith.mulf %1211, %1201 : vector<14x14xf32>
    %1213 = arith.addf %1179, %1212 : vector<14x14xf32>
    %c3_566 = arith.constant 3 : index
    %c35_567 = arith.constant 35 : index
    %1214 = memref.load %arg2[%c3_566, %c35_567] : memref<8x36xf32, #tpu.memory_space<smem>>
    %1215 = vector.broadcast %1214 : f32 to vector<14x14xf32>
    %1216 = arith.mulf %1215, %1201 : vector<14x14xf32>
    %1217 = arith.addf %1183, %1216 : vector<14x14xf32>
    %c4_568 = arith.constant 4 : index
    %c35_569 = arith.constant 35 : index
    %1218 = memref.load %arg2[%c4_568, %c35_569] : memref<8x36xf32, #tpu.memory_space<smem>>
    %1219 = vector.broadcast %1218 : f32 to vector<14x14xf32>
    %1220 = arith.mulf %1219, %1201 : vector<14x14xf32>
    %1221 = arith.addf %1187, %1220 : vector<14x14xf32>
    %c5_570 = arith.constant 5 : index
    %c35_571 = arith.constant 35 : index
    %1222 = memref.load %arg2[%c5_570, %c35_571] : memref<8x36xf32, #tpu.memory_space<smem>>
    %1223 = vector.broadcast %1222 : f32 to vector<14x14xf32>
    %1224 = arith.mulf %1223, %1201 : vector<14x14xf32>
    %1225 = arith.addf %1191, %1224 : vector<14x14xf32>
    %c6_572 = arith.constant 6 : index
    %c35_573 = arith.constant 35 : index
    %1226 = memref.load %arg2[%c6_572, %c35_573] : memref<8x36xf32, #tpu.memory_space<smem>>
    %1227 = vector.broadcast %1226 : f32 to vector<14x14xf32>
    %1228 = arith.mulf %1227, %1201 : vector<14x14xf32>
    %1229 = arith.addf %1195, %1228 : vector<14x14xf32>
    %c7_574 = arith.constant 7 : index
    %c35_575 = arith.constant 35 : index
    %1230 = memref.load %arg2[%c7_574, %c35_575] : memref<8x36xf32, #tpu.memory_space<smem>>
    %1231 = vector.broadcast %1230 : f32 to vector<14x14xf32>
    %1232 = arith.mulf %1231, %1201 : vector<14x14xf32>
    %1233 = arith.addf %1199, %1232 : vector<14x14xf32>
    %c0_576 = arith.constant 0 : index
    %1234 = memref.load %arg3[%c0_576] : memref<8xf32, #tpu.memory_space<smem>>
    %1235 = vector.broadcast %1234 : f32 to vector<14x14xf32>
    %1236 = arith.addf %1205, %1235 : vector<14x14xf32>
    %cst = arith.constant 0.000000e+00 : f32
    %1237 = vector.broadcast %cst : f32 to vector<14x14xf32>
    %1238 = arith.maximumf %1236, %1237 : vector<14x14xf32>
    %c1_577 = arith.constant 1 : index
    %1239 = memref.load %arg3[%c1_577] : memref<8xf32, #tpu.memory_space<smem>>
    %1240 = vector.broadcast %1239 : f32 to vector<14x14xf32>
    %1241 = arith.addf %1209, %1240 : vector<14x14xf32>
    %cst_578 = arith.constant 0.000000e+00 : f32
    %1242 = vector.broadcast %cst_578 : f32 to vector<14x14xf32>
    %1243 = arith.maximumf %1241, %1242 : vector<14x14xf32>
    %c2_579 = arith.constant 2 : index
    %1244 = memref.load %arg3[%c2_579] : memref<8xf32, #tpu.memory_space<smem>>
    %1245 = vector.broadcast %1244 : f32 to vector<14x14xf32>
    %1246 = arith.addf %1213, %1245 : vector<14x14xf32>
    %cst_580 = arith.constant 0.000000e+00 : f32
    %1247 = vector.broadcast %cst_580 : f32 to vector<14x14xf32>
    %1248 = arith.maximumf %1246, %1247 : vector<14x14xf32>
    %c3_581 = arith.constant 3 : index
    %1249 = memref.load %arg3[%c3_581] : memref<8xf32, #tpu.memory_space<smem>>
    %1250 = vector.broadcast %1249 : f32 to vector<14x14xf32>
    %1251 = arith.addf %1217, %1250 : vector<14x14xf32>
    %cst_582 = arith.constant 0.000000e+00 : f32
    %1252 = vector.broadcast %cst_582 : f32 to vector<14x14xf32>
    %1253 = arith.maximumf %1251, %1252 : vector<14x14xf32>
    %c4_583 = arith.constant 4 : index
    %1254 = memref.load %arg3[%c4_583] : memref<8xf32, #tpu.memory_space<smem>>
    %1255 = vector.broadcast %1254 : f32 to vector<14x14xf32>
    %1256 = arith.addf %1221, %1255 : vector<14x14xf32>
    %cst_584 = arith.constant 0.000000e+00 : f32
    %1257 = vector.broadcast %cst_584 : f32 to vector<14x14xf32>
    %1258 = arith.maximumf %1256, %1257 : vector<14x14xf32>
    %c5_585 = arith.constant 5 : index
    %1259 = memref.load %arg3[%c5_585] : memref<8xf32, #tpu.memory_space<smem>>
    %1260 = vector.broadcast %1259 : f32 to vector<14x14xf32>
    %1261 = arith.addf %1225, %1260 : vector<14x14xf32>
    %cst_586 = arith.constant 0.000000e+00 : f32
    %1262 = vector.broadcast %cst_586 : f32 to vector<14x14xf32>
    %1263 = arith.maximumf %1261, %1262 : vector<14x14xf32>
    %c6_587 = arith.constant 6 : index
    %1264 = memref.load %arg3[%c6_587] : memref<8xf32, #tpu.memory_space<smem>>
    %1265 = vector.broadcast %1264 : f32 to vector<14x14xf32>
    %1266 = arith.addf %1229, %1265 : vector<14x14xf32>
    %cst_588 = arith.constant 0.000000e+00 : f32
    %1267 = vector.broadcast %cst_588 : f32 to vector<14x14xf32>
    %1268 = arith.maximumf %1266, %1267 : vector<14x14xf32>
    %c7_589 = arith.constant 7 : index
    %1269 = memref.load %arg3[%c7_589] : memref<8xf32, #tpu.memory_space<smem>>
    %1270 = vector.broadcast %1269 : f32 to vector<14x14xf32>
    %1271 = arith.addf %1233, %1270 : vector<14x14xf32>
    %cst_590 = arith.constant 0.000000e+00 : f32
    %1272 = vector.broadcast %cst_590 : f32 to vector<14x14xf32>
    %1273 = arith.maximumf %1271, %1272 : vector<14x14xf32>
    %1274 = tpu.iota {dimensions = array<i32: 1>} : vector<1x8xi32>
    %c0_591 = arith.constant 0 : index
    %c0_592 = arith.constant 0 : index
    %1275 = vector.load %arg5[%c0_591, %c0_592] : memref<1x8xf32, #tpu.memory_space<vmem>>, vector<1x8xf32>
    %c0_593 = arith.constant 0 : index
    %c0_594 = arith.constant 0 : index
    %c0_595 = arith.constant 0 : index
    %c0_596 = arith.constant 0 : index
    %1276 = vector.load %arg4[%c0_593, %c0_594, %c0_595, %c0_596] : memref<8x8x14x14xf32, #tpu.memory_space<vmem>>, vector<1x8x14x14xf32>
    %1277 = vector.shape_cast %1276 : vector<1x8x14x14xf32> to vector<8x14x14xf32>
    %1278 = vector.extract_strided_slice %1277 {offsets = [0, 0, 0], sizes = [1, 14, 14], strides = [1, 1, 1]} : vector<8x14x14xf32> to vector<1x14x14xf32>
    %1279 = vector.shape_cast %1278 : vector<1x14x14xf32> to vector<14x14xf32>
    %1280 = arith.mulf %1238, %1279 : vector<14x14xf32>
    %1281 = vector.extract_strided_slice %1277 {offsets = [1, 0, 0], sizes = [1, 14, 14], strides = [1, 1, 1]} : vector<8x14x14xf32> to vector<1x14x14xf32>
    %1282 = vector.shape_cast %1281 : vector<1x14x14xf32> to vector<14x14xf32>
    %1283 = arith.mulf %1243, %1282 : vector<14x14xf32>
    %1284 = arith.addf %1280, %1283 : vector<14x14xf32>
    %1285 = vector.extract_strided_slice %1277 {offsets = [2, 0, 0], sizes = [1, 14, 14], strides = [1, 1, 1]} : vector<8x14x14xf32> to vector<1x14x14xf32>
    %1286 = vector.shape_cast %1285 : vector<1x14x14xf32> to vector<14x14xf32>
    %1287 = arith.mulf %1248, %1286 : vector<14x14xf32>
    %1288 = arith.addf %1284, %1287 : vector<14x14xf32>
    %1289 = vector.extract_strided_slice %1277 {offsets = [3, 0, 0], sizes = [1, 14, 14], strides = [1, 1, 1]} : vector<8x14x14xf32> to vector<1x14x14xf32>
    %1290 = vector.shape_cast %1289 : vector<1x14x14xf32> to vector<14x14xf32>
    %1291 = arith.mulf %1253, %1290 : vector<14x14xf32>
    %1292 = arith.addf %1288, %1291 : vector<14x14xf32>
    %1293 = vector.extract_strided_slice %1277 {offsets = [4, 0, 0], sizes = [1, 14, 14], strides = [1, 1, 1]} : vector<8x14x14xf32> to vector<1x14x14xf32>
    %1294 = vector.shape_cast %1293 : vector<1x14x14xf32> to vector<14x14xf32>
    %1295 = arith.mulf %1258, %1294 : vector<14x14xf32>
    %1296 = arith.addf %1292, %1295 : vector<14x14xf32>
    %1297 = vector.extract_strided_slice %1277 {offsets = [5, 0, 0], sizes = [1, 14, 14], strides = [1, 1, 1]} : vector<8x14x14xf32> to vector<1x14x14xf32>
    %1298 = vector.shape_cast %1297 : vector<1x14x14xf32> to vector<14x14xf32>
    %1299 = arith.mulf %1263, %1298 : vector<14x14xf32>
    %1300 = arith.addf %1296, %1299 : vector<14x14xf32>
    %1301 = vector.extract_strided_slice %1277 {offsets = [6, 0, 0], sizes = [1, 14, 14], strides = [1, 1, 1]} : vector<8x14x14xf32> to vector<1x14x14xf32>
    %1302 = vector.shape_cast %1301 : vector<1x14x14xf32> to vector<14x14xf32>
    %1303 = arith.mulf %1268, %1302 : vector<14x14xf32>
    %1304 = arith.addf %1300, %1303 : vector<14x14xf32>
    %1305 = vector.extract_strided_slice %1277 {offsets = [7, 0, 0], sizes = [1, 14, 14], strides = [1, 1, 1]} : vector<8x14x14xf32> to vector<1x14x14xf32>
    %1306 = vector.shape_cast %1305 : vector<1x14x14xf32> to vector<14x14xf32>
    %1307 = arith.mulf %1273, %1306 : vector<14x14xf32>
    %1308 = arith.addf %1304, %1307 : vector<14x14xf32>
    %cst_597 = arith.constant dense<0.000000e+00> : vector<14xf32>
    %1309 = vector.multi_reduction <add>, %1308, %cst_597 [1] : vector<14x14xf32> to vector<14xf32>
    %1310 = vector.shape_cast %1309 : vector<14xf32> to vector<14x1xf32>
    %cst_598 = arith.constant dense<0.000000e+00> : vector<1xf32>
    %1311 = vector.multi_reduction <add>, %1310, %cst_598 [0] : vector<14x1xf32> to vector<1xf32>
    %1312 = vector.shape_cast %1311 : vector<1xf32> to vector<1x1xf32>
    %c0_i32 = arith.constant 0 : i32
    %1313 = vector.broadcast %c0_i32 : i32 to vector<1x8xi32>
    %1314 = arith.cmpi eq, %1274, %1313 : vector<1x8xi32>
    %cst_599 = arith.constant 0.000000e+00 : f32
    %1315 = vector.shape_cast %1312 : vector<1x1xf32> to vector<1x1xf32>
    %1316 = vector.broadcast %1315 : vector<1x1xf32> to vector<1x8xf32>
    %1317 = vector.broadcast %cst_599 : f32 to vector<1x8xf32>
    %1318 = arith.select %1314, %1316, %1317 : vector<1x8xi1>, vector<1x8xf32>
    %1319 = arith.addf %1275, %1318 : vector<1x8xf32>
    %c1_600 = arith.constant 1 : index
    %c0_601 = arith.constant 0 : index
    %c0_602 = arith.constant 0 : index
    %c0_603 = arith.constant 0 : index
    %1320 = vector.load %arg4[%c1_600, %c0_601, %c0_602, %c0_603] : memref<8x8x14x14xf32, #tpu.memory_space<vmem>>, vector<1x8x14x14xf32>
    %1321 = vector.shape_cast %1320 : vector<1x8x14x14xf32> to vector<8x14x14xf32>
    %1322 = vector.extract_strided_slice %1321 {offsets = [0, 0, 0], sizes = [1, 14, 14], strides = [1, 1, 1]} : vector<8x14x14xf32> to vector<1x14x14xf32>
    %1323 = vector.shape_cast %1322 : vector<1x14x14xf32> to vector<14x14xf32>
    %1324 = arith.mulf %1238, %1323 : vector<14x14xf32>
    %1325 = vector.extract_strided_slice %1321 {offsets = [1, 0, 0], sizes = [1, 14, 14], strides = [1, 1, 1]} : vector<8x14x14xf32> to vector<1x14x14xf32>
    %1326 = vector.shape_cast %1325 : vector<1x14x14xf32> to vector<14x14xf32>
    %1327 = arith.mulf %1243, %1326 : vector<14x14xf32>
    %1328 = arith.addf %1324, %1327 : vector<14x14xf32>
    %1329 = vector.extract_strided_slice %1321 {offsets = [2, 0, 0], sizes = [1, 14, 14], strides = [1, 1, 1]} : vector<8x14x14xf32> to vector<1x14x14xf32>
    %1330 = vector.shape_cast %1329 : vector<1x14x14xf32> to vector<14x14xf32>
    %1331 = arith.mulf %1248, %1330 : vector<14x14xf32>
    %1332 = arith.addf %1328, %1331 : vector<14x14xf32>
    %1333 = vector.extract_strided_slice %1321 {offsets = [3, 0, 0], sizes = [1, 14, 14], strides = [1, 1, 1]} : vector<8x14x14xf32> to vector<1x14x14xf32>
    %1334 = vector.shape_cast %1333 : vector<1x14x14xf32> to vector<14x14xf32>
    %1335 = arith.mulf %1253, %1334 : vector<14x14xf32>
    %1336 = arith.addf %1332, %1335 : vector<14x14xf32>
    %1337 = vector.extract_strided_slice %1321 {offsets = [4, 0, 0], sizes = [1, 14, 14], strides = [1, 1, 1]} : vector<8x14x14xf32> to vector<1x14x14xf32>
    %1338 = vector.shape_cast %1337 : vector<1x14x14xf32> to vector<14x14xf32>
    %1339 = arith.mulf %1258, %1338 : vector<14x14xf32>
    %1340 = arith.addf %1336, %1339 : vector<14x14xf32>
    %1341 = vector.extract_strided_slice %1321 {offsets = [5, 0, 0], sizes = [1, 14, 14], strides = [1, 1, 1]} : vector<8x14x14xf32> to vector<1x14x14xf32>
    %1342 = vector.shape_cast %1341 : vector<1x14x14xf32> to vector<14x14xf32>
    %1343 = arith.mulf %1263, %1342 : vector<14x14xf32>
    %1344 = arith.addf %1340, %1343 : vector<14x14xf32>
    %1345 = vector.extract_strided_slice %1321 {offsets = [6, 0, 0], sizes = [1, 14, 14], strides = [1, 1, 1]} : vector<8x14x14xf32> to vector<1x14x14xf32>
    %1346 = vector.shape_cast %1345 : vector<1x14x14xf32> to vector<14x14xf32>
    %1347 = arith.mulf %1268, %1346 : vector<14x14xf32>
    %1348 = arith.addf %1344, %1347 : vector<14x14xf32>
    %1349 = vector.extract_strided_slice %1321 {offsets = [7, 0, 0], sizes = [1, 14, 14], strides = [1, 1, 1]} : vector<8x14x14xf32> to vector<1x14x14xf32>
    %1350 = vector.shape_cast %1349 : vector<1x14x14xf32> to vector<14x14xf32>
    %1351 = arith.mulf %1273, %1350 : vector<14x14xf32>
    %1352 = arith.addf %1348, %1351 : vector<14x14xf32>
    %cst_604 = arith.constant dense<0.000000e+00> : vector<14xf32>
    %1353 = vector.multi_reduction <add>, %1352, %cst_604 [1] : vector<14x14xf32> to vector<14xf32>
    %1354 = vector.shape_cast %1353 : vector<14xf32> to vector<14x1xf32>
    %cst_605 = arith.constant dense<0.000000e+00> : vector<1xf32>
    %1355 = vector.multi_reduction <add>, %1354, %cst_605 [0] : vector<14x1xf32> to vector<1xf32>
    %1356 = vector.shape_cast %1355 : vector<1xf32> to vector<1x1xf32>
    %c1_i32 = arith.constant 1 : i32
    %1357 = vector.broadcast %c1_i32 : i32 to vector<1x8xi32>
    %1358 = arith.cmpi eq, %1274, %1357 : vector<1x8xi32>
    %cst_606 = arith.constant 0.000000e+00 : f32
    %1359 = vector.shape_cast %1356 : vector<1x1xf32> to vector<1x1xf32>
    %1360 = vector.broadcast %1359 : vector<1x1xf32> to vector<1x8xf32>
    %1361 = vector.broadcast %cst_606 : f32 to vector<1x8xf32>
    %1362 = arith.select %1358, %1360, %1361 : vector<1x8xi1>, vector<1x8xf32>
    %1363 = arith.addf %1319, %1362 : vector<1x8xf32>
    %c2_607 = arith.constant 2 : index
    %c0_608 = arith.constant 0 : index
    %c0_609 = arith.constant 0 : index
    %c0_610 = arith.constant 0 : index
    %1364 = vector.load %arg4[%c2_607, %c0_608, %c0_609, %c0_610] : memref<8x8x14x14xf32, #tpu.memory_space<vmem>>, vector<1x8x14x14xf32>
    %1365 = vector.shape_cast %1364 : vector<1x8x14x14xf32> to vector<8x14x14xf32>
    %1366 = vector.extract_strided_slice %1365 {offsets = [0, 0, 0], sizes = [1, 14, 14], strides = [1, 1, 1]} : vector<8x14x14xf32> to vector<1x14x14xf32>
    %1367 = vector.shape_cast %1366 : vector<1x14x14xf32> to vector<14x14xf32>
    %1368 = arith.mulf %1238, %1367 : vector<14x14xf32>
    %1369 = vector.extract_strided_slice %1365 {offsets = [1, 0, 0], sizes = [1, 14, 14], strides = [1, 1, 1]} : vector<8x14x14xf32> to vector<1x14x14xf32>
    %1370 = vector.shape_cast %1369 : vector<1x14x14xf32> to vector<14x14xf32>
    %1371 = arith.mulf %1243, %1370 : vector<14x14xf32>
    %1372 = arith.addf %1368, %1371 : vector<14x14xf32>
    %1373 = vector.extract_strided_slice %1365 {offsets = [2, 0, 0], sizes = [1, 14, 14], strides = [1, 1, 1]} : vector<8x14x14xf32> to vector<1x14x14xf32>
    %1374 = vector.shape_cast %1373 : vector<1x14x14xf32> to vector<14x14xf32>
    %1375 = arith.mulf %1248, %1374 : vector<14x14xf32>
    %1376 = arith.addf %1372, %1375 : vector<14x14xf32>
    %1377 = vector.extract_strided_slice %1365 {offsets = [3, 0, 0], sizes = [1, 14, 14], strides = [1, 1, 1]} : vector<8x14x14xf32> to vector<1x14x14xf32>
    %1378 = vector.shape_cast %1377 : vector<1x14x14xf32> to vector<14x14xf32>
    %1379 = arith.mulf %1253, %1378 : vector<14x14xf32>
    %1380 = arith.addf %1376, %1379 : vector<14x14xf32>
    %1381 = vector.extract_strided_slice %1365 {offsets = [4, 0, 0], sizes = [1, 14, 14], strides = [1, 1, 1]} : vector<8x14x14xf32> to vector<1x14x14xf32>
    %1382 = vector.shape_cast %1381 : vector<1x14x14xf32> to vector<14x14xf32>
    %1383 = arith.mulf %1258, %1382 : vector<14x14xf32>
    %1384 = arith.addf %1380, %1383 : vector<14x14xf32>
    %1385 = vector.extract_strided_slice %1365 {offsets = [5, 0, 0], sizes = [1, 14, 14], strides = [1, 1, 1]} : vector<8x14x14xf32> to vector<1x14x14xf32>
    %1386 = vector.shape_cast %1385 : vector<1x14x14xf32> to vector<14x14xf32>
    %1387 = arith.mulf %1263, %1386 : vector<14x14xf32>
    %1388 = arith.addf %1384, %1387 : vector<14x14xf32>
    %1389 = vector.extract_strided_slice %1365 {offsets = [6, 0, 0], sizes = [1, 14, 14], strides = [1, 1, 1]} : vector<8x14x14xf32> to vector<1x14x14xf32>
    %1390 = vector.shape_cast %1389 : vector<1x14x14xf32> to vector<14x14xf32>
    %1391 = arith.mulf %1268, %1390 : vector<14x14xf32>
    %1392 = arith.addf %1388, %1391 : vector<14x14xf32>
    %1393 = vector.extract_strided_slice %1365 {offsets = [7, 0, 0], sizes = [1, 14, 14], strides = [1, 1, 1]} : vector<8x14x14xf32> to vector<1x14x14xf32>
    %1394 = vector.shape_cast %1393 : vector<1x14x14xf32> to vector<14x14xf32>
    %1395 = arith.mulf %1273, %1394 : vector<14x14xf32>
    %1396 = arith.addf %1392, %1395 : vector<14x14xf32>
    %cst_611 = arith.constant dense<0.000000e+00> : vector<14xf32>
    %1397 = vector.multi_reduction <add>, %1396, %cst_611 [1] : vector<14x14xf32> to vector<14xf32>
    %1398 = vector.shape_cast %1397 : vector<14xf32> to vector<14x1xf32>
    %cst_612 = arith.constant dense<0.000000e+00> : vector<1xf32>
    %1399 = vector.multi_reduction <add>, %1398, %cst_612 [0] : vector<14x1xf32> to vector<1xf32>
    %1400 = vector.shape_cast %1399 : vector<1xf32> to vector<1x1xf32>
    %c2_i32 = arith.constant 2 : i32
    %1401 = vector.broadcast %c2_i32 : i32 to vector<1x8xi32>
    %1402 = arith.cmpi eq, %1274, %1401 : vector<1x8xi32>
    %cst_613 = arith.constant 0.000000e+00 : f32
    %1403 = vector.shape_cast %1400 : vector<1x1xf32> to vector<1x1xf32>
    %1404 = vector.broadcast %1403 : vector<1x1xf32> to vector<1x8xf32>
    %1405 = vector.broadcast %cst_613 : f32 to vector<1x8xf32>
    %1406 = arith.select %1402, %1404, %1405 : vector<1x8xi1>, vector<1x8xf32>
    %1407 = arith.addf %1363, %1406 : vector<1x8xf32>
    %c3_614 = arith.constant 3 : index
    %c0_615 = arith.constant 0 : index
    %c0_616 = arith.constant 0 : index
    %c0_617 = arith.constant 0 : index
    %1408 = vector.load %arg4[%c3_614, %c0_615, %c0_616, %c0_617] : memref<8x8x14x14xf32, #tpu.memory_space<vmem>>, vector<1x8x14x14xf32>
    %1409 = vector.shape_cast %1408 : vector<1x8x14x14xf32> to vector<8x14x14xf32>
    %1410 = vector.extract_strided_slice %1409 {offsets = [0, 0, 0], sizes = [1, 14, 14], strides = [1, 1, 1]} : vector<8x14x14xf32> to vector<1x14x14xf32>
    %1411 = vector.shape_cast %1410 : vector<1x14x14xf32> to vector<14x14xf32>
    %1412 = arith.mulf %1238, %1411 : vector<14x14xf32>
    %1413 = vector.extract_strided_slice %1409 {offsets = [1, 0, 0], sizes = [1, 14, 14], strides = [1, 1, 1]} : vector<8x14x14xf32> to vector<1x14x14xf32>
    %1414 = vector.shape_cast %1413 : vector<1x14x14xf32> to vector<14x14xf32>
    %1415 = arith.mulf %1243, %1414 : vector<14x14xf32>
    %1416 = arith.addf %1412, %1415 : vector<14x14xf32>
    %1417 = vector.extract_strided_slice %1409 {offsets = [2, 0, 0], sizes = [1, 14, 14], strides = [1, 1, 1]} : vector<8x14x14xf32> to vector<1x14x14xf32>
    %1418 = vector.shape_cast %1417 : vector<1x14x14xf32> to vector<14x14xf32>
    %1419 = arith.mulf %1248, %1418 : vector<14x14xf32>
    %1420 = arith.addf %1416, %1419 : vector<14x14xf32>
    %1421 = vector.extract_strided_slice %1409 {offsets = [3, 0, 0], sizes = [1, 14, 14], strides = [1, 1, 1]} : vector<8x14x14xf32> to vector<1x14x14xf32>
    %1422 = vector.shape_cast %1421 : vector<1x14x14xf32> to vector<14x14xf32>
    %1423 = arith.mulf %1253, %1422 : vector<14x14xf32>
    %1424 = arith.addf %1420, %1423 : vector<14x14xf32>
    %1425 = vector.extract_strided_slice %1409 {offsets = [4, 0, 0], sizes = [1, 14, 14], strides = [1, 1, 1]} : vector<8x14x14xf32> to vector<1x14x14xf32>
    %1426 = vector.shape_cast %1425 : vector<1x14x14xf32> to vector<14x14xf32>
    %1427 = arith.mulf %1258, %1426 : vector<14x14xf32>
    %1428 = arith.addf %1424, %1427 : vector<14x14xf32>
    %1429 = vector.extract_strided_slice %1409 {offsets = [5, 0, 0], sizes = [1, 14, 14], strides = [1, 1, 1]} : vector<8x14x14xf32> to vector<1x14x14xf32>
    %1430 = vector.shape_cast %1429 : vector<1x14x14xf32> to vector<14x14xf32>
    %1431 = arith.mulf %1263, %1430 : vector<14x14xf32>
    %1432 = arith.addf %1428, %1431 : vector<14x14xf32>
    %1433 = vector.extract_strided_slice %1409 {offsets = [6, 0, 0], sizes = [1, 14, 14], strides = [1, 1, 1]} : vector<8x14x14xf32> to vector<1x14x14xf32>
    %1434 = vector.shape_cast %1433 : vector<1x14x14xf32> to vector<14x14xf32>
    %1435 = arith.mulf %1268, %1434 : vector<14x14xf32>
    %1436 = arith.addf %1432, %1435 : vector<14x14xf32>
    %1437 = vector.extract_strided_slice %1409 {offsets = [7, 0, 0], sizes = [1, 14, 14], strides = [1, 1, 1]} : vector<8x14x14xf32> to vector<1x14x14xf32>
    %1438 = vector.shape_cast %1437 : vector<1x14x14xf32> to vector<14x14xf32>
    %1439 = arith.mulf %1273, %1438 : vector<14x14xf32>
    %1440 = arith.addf %1436, %1439 : vector<14x14xf32>
    %cst_618 = arith.constant dense<0.000000e+00> : vector<14xf32>
    %1441 = vector.multi_reduction <add>, %1440, %cst_618 [1] : vector<14x14xf32> to vector<14xf32>
    %1442 = vector.shape_cast %1441 : vector<14xf32> to vector<14x1xf32>
    %cst_619 = arith.constant dense<0.000000e+00> : vector<1xf32>
    %1443 = vector.multi_reduction <add>, %1442, %cst_619 [0] : vector<14x1xf32> to vector<1xf32>
    %1444 = vector.shape_cast %1443 : vector<1xf32> to vector<1x1xf32>
    %c3_i32 = arith.constant 3 : i32
    %1445 = vector.broadcast %c3_i32 : i32 to vector<1x8xi32>
    %1446 = arith.cmpi eq, %1274, %1445 : vector<1x8xi32>
    %cst_620 = arith.constant 0.000000e+00 : f32
    %1447 = vector.shape_cast %1444 : vector<1x1xf32> to vector<1x1xf32>
    %1448 = vector.broadcast %1447 : vector<1x1xf32> to vector<1x8xf32>
    %1449 = vector.broadcast %cst_620 : f32 to vector<1x8xf32>
    %1450 = arith.select %1446, %1448, %1449 : vector<1x8xi1>, vector<1x8xf32>
    %1451 = arith.addf %1407, %1450 : vector<1x8xf32>
    %c4_621 = arith.constant 4 : index
    %c0_622 = arith.constant 0 : index
    %c0_623 = arith.constant 0 : index
    %c0_624 = arith.constant 0 : index
    %1452 = vector.load %arg4[%c4_621, %c0_622, %c0_623, %c0_624] : memref<8x8x14x14xf32, #tpu.memory_space<vmem>>, vector<1x8x14x14xf32>
    %1453 = vector.shape_cast %1452 : vector<1x8x14x14xf32> to vector<8x14x14xf32>
    %1454 = vector.extract_strided_slice %1453 {offsets = [0, 0, 0], sizes = [1, 14, 14], strides = [1, 1, 1]} : vector<8x14x14xf32> to vector<1x14x14xf32>
    %1455 = vector.shape_cast %1454 : vector<1x14x14xf32> to vector<14x14xf32>
    %1456 = arith.mulf %1238, %1455 : vector<14x14xf32>
    %1457 = vector.extract_strided_slice %1453 {offsets = [1, 0, 0], sizes = [1, 14, 14], strides = [1, 1, 1]} : vector<8x14x14xf32> to vector<1x14x14xf32>
    %1458 = vector.shape_cast %1457 : vector<1x14x14xf32> to vector<14x14xf32>
    %1459 = arith.mulf %1243, %1458 : vector<14x14xf32>
    %1460 = arith.addf %1456, %1459 : vector<14x14xf32>
    %1461 = vector.extract_strided_slice %1453 {offsets = [2, 0, 0], sizes = [1, 14, 14], strides = [1, 1, 1]} : vector<8x14x14xf32> to vector<1x14x14xf32>
    %1462 = vector.shape_cast %1461 : vector<1x14x14xf32> to vector<14x14xf32>
    %1463 = arith.mulf %1248, %1462 : vector<14x14xf32>
    %1464 = arith.addf %1460, %1463 : vector<14x14xf32>
    %1465 = vector.extract_strided_slice %1453 {offsets = [3, 0, 0], sizes = [1, 14, 14], strides = [1, 1, 1]} : vector<8x14x14xf32> to vector<1x14x14xf32>
    %1466 = vector.shape_cast %1465 : vector<1x14x14xf32> to vector<14x14xf32>
    %1467 = arith.mulf %1253, %1466 : vector<14x14xf32>
    %1468 = arith.addf %1464, %1467 : vector<14x14xf32>
    %1469 = vector.extract_strided_slice %1453 {offsets = [4, 0, 0], sizes = [1, 14, 14], strides = [1, 1, 1]} : vector<8x14x14xf32> to vector<1x14x14xf32>
    %1470 = vector.shape_cast %1469 : vector<1x14x14xf32> to vector<14x14xf32>
    %1471 = arith.mulf %1258, %1470 : vector<14x14xf32>
    %1472 = arith.addf %1468, %1471 : vector<14x14xf32>
    %1473 = vector.extract_strided_slice %1453 {offsets = [5, 0, 0], sizes = [1, 14, 14], strides = [1, 1, 1]} : vector<8x14x14xf32> to vector<1x14x14xf32>
    %1474 = vector.shape_cast %1473 : vector<1x14x14xf32> to vector<14x14xf32>
    %1475 = arith.mulf %1263, %1474 : vector<14x14xf32>
    %1476 = arith.addf %1472, %1475 : vector<14x14xf32>
    %1477 = vector.extract_strided_slice %1453 {offsets = [6, 0, 0], sizes = [1, 14, 14], strides = [1, 1, 1]} : vector<8x14x14xf32> to vector<1x14x14xf32>
    %1478 = vector.shape_cast %1477 : vector<1x14x14xf32> to vector<14x14xf32>
    %1479 = arith.mulf %1268, %1478 : vector<14x14xf32>
    %1480 = arith.addf %1476, %1479 : vector<14x14xf32>
    %1481 = vector.extract_strided_slice %1453 {offsets = [7, 0, 0], sizes = [1, 14, 14], strides = [1, 1, 1]} : vector<8x14x14xf32> to vector<1x14x14xf32>
    %1482 = vector.shape_cast %1481 : vector<1x14x14xf32> to vector<14x14xf32>
    %1483 = arith.mulf %1273, %1482 : vector<14x14xf32>
    %1484 = arith.addf %1480, %1483 : vector<14x14xf32>
    %cst_625 = arith.constant dense<0.000000e+00> : vector<14xf32>
    %1485 = vector.multi_reduction <add>, %1484, %cst_625 [1] : vector<14x14xf32> to vector<14xf32>
    %1486 = vector.shape_cast %1485 : vector<14xf32> to vector<14x1xf32>
    %cst_626 = arith.constant dense<0.000000e+00> : vector<1xf32>
    %1487 = vector.multi_reduction <add>, %1486, %cst_626 [0] : vector<14x1xf32> to vector<1xf32>
    %1488 = vector.shape_cast %1487 : vector<1xf32> to vector<1x1xf32>
    %c4_i32 = arith.constant 4 : i32
    %1489 = vector.broadcast %c4_i32 : i32 to vector<1x8xi32>
    %1490 = arith.cmpi eq, %1274, %1489 : vector<1x8xi32>
    %cst_627 = arith.constant 0.000000e+00 : f32
    %1491 = vector.shape_cast %1488 : vector<1x1xf32> to vector<1x1xf32>
    %1492 = vector.broadcast %1491 : vector<1x1xf32> to vector<1x8xf32>
    %1493 = vector.broadcast %cst_627 : f32 to vector<1x8xf32>
    %1494 = arith.select %1490, %1492, %1493 : vector<1x8xi1>, vector<1x8xf32>
    %1495 = arith.addf %1451, %1494 : vector<1x8xf32>
    %c5_628 = arith.constant 5 : index
    %c0_629 = arith.constant 0 : index
    %c0_630 = arith.constant 0 : index
    %c0_631 = arith.constant 0 : index
    %1496 = vector.load %arg4[%c5_628, %c0_629, %c0_630, %c0_631] : memref<8x8x14x14xf32, #tpu.memory_space<vmem>>, vector<1x8x14x14xf32>
    %1497 = vector.shape_cast %1496 : vector<1x8x14x14xf32> to vector<8x14x14xf32>
    %1498 = vector.extract_strided_slice %1497 {offsets = [0, 0, 0], sizes = [1, 14, 14], strides = [1, 1, 1]} : vector<8x14x14xf32> to vector<1x14x14xf32>
    %1499 = vector.shape_cast %1498 : vector<1x14x14xf32> to vector<14x14xf32>
    %1500 = arith.mulf %1238, %1499 : vector<14x14xf32>
    %1501 = vector.extract_strided_slice %1497 {offsets = [1, 0, 0], sizes = [1, 14, 14], strides = [1, 1, 1]} : vector<8x14x14xf32> to vector<1x14x14xf32>
    %1502 = vector.shape_cast %1501 : vector<1x14x14xf32> to vector<14x14xf32>
    %1503 = arith.mulf %1243, %1502 : vector<14x14xf32>
    %1504 = arith.addf %1500, %1503 : vector<14x14xf32>
    %1505 = vector.extract_strided_slice %1497 {offsets = [2, 0, 0], sizes = [1, 14, 14], strides = [1, 1, 1]} : vector<8x14x14xf32> to vector<1x14x14xf32>
    %1506 = vector.shape_cast %1505 : vector<1x14x14xf32> to vector<14x14xf32>
    %1507 = arith.mulf %1248, %1506 : vector<14x14xf32>
    %1508 = arith.addf %1504, %1507 : vector<14x14xf32>
    %1509 = vector.extract_strided_slice %1497 {offsets = [3, 0, 0], sizes = [1, 14, 14], strides = [1, 1, 1]} : vector<8x14x14xf32> to vector<1x14x14xf32>
    %1510 = vector.shape_cast %1509 : vector<1x14x14xf32> to vector<14x14xf32>
    %1511 = arith.mulf %1253, %1510 : vector<14x14xf32>
    %1512 = arith.addf %1508, %1511 : vector<14x14xf32>
    %1513 = vector.extract_strided_slice %1497 {offsets = [4, 0, 0], sizes = [1, 14, 14], strides = [1, 1, 1]} : vector<8x14x14xf32> to vector<1x14x14xf32>
    %1514 = vector.shape_cast %1513 : vector<1x14x14xf32> to vector<14x14xf32>
    %1515 = arith.mulf %1258, %1514 : vector<14x14xf32>
    %1516 = arith.addf %1512, %1515 : vector<14x14xf32>
    %1517 = vector.extract_strided_slice %1497 {offsets = [5, 0, 0], sizes = [1, 14, 14], strides = [1, 1, 1]} : vector<8x14x14xf32> to vector<1x14x14xf32>
    %1518 = vector.shape_cast %1517 : vector<1x14x14xf32> to vector<14x14xf32>
    %1519 = arith.mulf %1263, %1518 : vector<14x14xf32>
    %1520 = arith.addf %1516, %1519 : vector<14x14xf32>
    %1521 = vector.extract_strided_slice %1497 {offsets = [6, 0, 0], sizes = [1, 14, 14], strides = [1, 1, 1]} : vector<8x14x14xf32> to vector<1x14x14xf32>
    %1522 = vector.shape_cast %1521 : vector<1x14x14xf32> to vector<14x14xf32>
    %1523 = arith.mulf %1268, %1522 : vector<14x14xf32>
    %1524 = arith.addf %1520, %1523 : vector<14x14xf32>
    %1525 = vector.extract_strided_slice %1497 {offsets = [7, 0, 0], sizes = [1, 14, 14], strides = [1, 1, 1]} : vector<8x14x14xf32> to vector<1x14x14xf32>
    %1526 = vector.shape_cast %1525 : vector<1x14x14xf32> to vector<14x14xf32>
    %1527 = arith.mulf %1273, %1526 : vector<14x14xf32>
    %1528 = arith.addf %1524, %1527 : vector<14x14xf32>
    %cst_632 = arith.constant dense<0.000000e+00> : vector<14xf32>
    %1529 = vector.multi_reduction <add>, %1528, %cst_632 [1] : vector<14x14xf32> to vector<14xf32>
    %1530 = vector.shape_cast %1529 : vector<14xf32> to vector<14x1xf32>
    %cst_633 = arith.constant dense<0.000000e+00> : vector<1xf32>
    %1531 = vector.multi_reduction <add>, %1530, %cst_633 [0] : vector<14x1xf32> to vector<1xf32>
    %1532 = vector.shape_cast %1531 : vector<1xf32> to vector<1x1xf32>
    %c5_i32 = arith.constant 5 : i32
    %1533 = vector.broadcast %c5_i32 : i32 to vector<1x8xi32>
    %1534 = arith.cmpi eq, %1274, %1533 : vector<1x8xi32>
    %cst_634 = arith.constant 0.000000e+00 : f32
    %1535 = vector.shape_cast %1532 : vector<1x1xf32> to vector<1x1xf32>
    %1536 = vector.broadcast %1535 : vector<1x1xf32> to vector<1x8xf32>
    %1537 = vector.broadcast %cst_634 : f32 to vector<1x8xf32>
    %1538 = arith.select %1534, %1536, %1537 : vector<1x8xi1>, vector<1x8xf32>
    %1539 = arith.addf %1495, %1538 : vector<1x8xf32>
    %c6_635 = arith.constant 6 : index
    %c0_636 = arith.constant 0 : index
    %c0_637 = arith.constant 0 : index
    %c0_638 = arith.constant 0 : index
    %1540 = vector.load %arg4[%c6_635, %c0_636, %c0_637, %c0_638] : memref<8x8x14x14xf32, #tpu.memory_space<vmem>>, vector<1x8x14x14xf32>
    %1541 = vector.shape_cast %1540 : vector<1x8x14x14xf32> to vector<8x14x14xf32>
    %1542 = vector.extract_strided_slice %1541 {offsets = [0, 0, 0], sizes = [1, 14, 14], strides = [1, 1, 1]} : vector<8x14x14xf32> to vector<1x14x14xf32>
    %1543 = vector.shape_cast %1542 : vector<1x14x14xf32> to vector<14x14xf32>
    %1544 = arith.mulf %1238, %1543 : vector<14x14xf32>
    %1545 = vector.extract_strided_slice %1541 {offsets = [1, 0, 0], sizes = [1, 14, 14], strides = [1, 1, 1]} : vector<8x14x14xf32> to vector<1x14x14xf32>
    %1546 = vector.shape_cast %1545 : vector<1x14x14xf32> to vector<14x14xf32>
    %1547 = arith.mulf %1243, %1546 : vector<14x14xf32>
    %1548 = arith.addf %1544, %1547 : vector<14x14xf32>
    %1549 = vector.extract_strided_slice %1541 {offsets = [2, 0, 0], sizes = [1, 14, 14], strides = [1, 1, 1]} : vector<8x14x14xf32> to vector<1x14x14xf32>
    %1550 = vector.shape_cast %1549 : vector<1x14x14xf32> to vector<14x14xf32>
    %1551 = arith.mulf %1248, %1550 : vector<14x14xf32>
    %1552 = arith.addf %1548, %1551 : vector<14x14xf32>
    %1553 = vector.extract_strided_slice %1541 {offsets = [3, 0, 0], sizes = [1, 14, 14], strides = [1, 1, 1]} : vector<8x14x14xf32> to vector<1x14x14xf32>
    %1554 = vector.shape_cast %1553 : vector<1x14x14xf32> to vector<14x14xf32>
    %1555 = arith.mulf %1253, %1554 : vector<14x14xf32>
    %1556 = arith.addf %1552, %1555 : vector<14x14xf32>
    %1557 = vector.extract_strided_slice %1541 {offsets = [4, 0, 0], sizes = [1, 14, 14], strides = [1, 1, 1]} : vector<8x14x14xf32> to vector<1x14x14xf32>
    %1558 = vector.shape_cast %1557 : vector<1x14x14xf32> to vector<14x14xf32>
    %1559 = arith.mulf %1258, %1558 : vector<14x14xf32>
    %1560 = arith.addf %1556, %1559 : vector<14x14xf32>
    %1561 = vector.extract_strided_slice %1541 {offsets = [5, 0, 0], sizes = [1, 14, 14], strides = [1, 1, 1]} : vector<8x14x14xf32> to vector<1x14x14xf32>
    %1562 = vector.shape_cast %1561 : vector<1x14x14xf32> to vector<14x14xf32>
    %1563 = arith.mulf %1263, %1562 : vector<14x14xf32>
    %1564 = arith.addf %1560, %1563 : vector<14x14xf32>
    %1565 = vector.extract_strided_slice %1541 {offsets = [6, 0, 0], sizes = [1, 14, 14], strides = [1, 1, 1]} : vector<8x14x14xf32> to vector<1x14x14xf32>
    %1566 = vector.shape_cast %1565 : vector<1x14x14xf32> to vector<14x14xf32>
    %1567 = arith.mulf %1268, %1566 : vector<14x14xf32>
    %1568 = arith.addf %1564, %1567 : vector<14x14xf32>
    %1569 = vector.extract_strided_slice %1541 {offsets = [7, 0, 0], sizes = [1, 14, 14], strides = [1, 1, 1]} : vector<8x14x14xf32> to vector<1x14x14xf32>
    %1570 = vector.shape_cast %1569 : vector<1x14x14xf32> to vector<14x14xf32>
    %1571 = arith.mulf %1273, %1570 : vector<14x14xf32>
    %1572 = arith.addf %1568, %1571 : vector<14x14xf32>
    %cst_639 = arith.constant dense<0.000000e+00> : vector<14xf32>
    %1573 = vector.multi_reduction <add>, %1572, %cst_639 [1] : vector<14x14xf32> to vector<14xf32>
    %1574 = vector.shape_cast %1573 : vector<14xf32> to vector<14x1xf32>
    %cst_640 = arith.constant dense<0.000000e+00> : vector<1xf32>
    %1575 = vector.multi_reduction <add>, %1574, %cst_640 [0] : vector<14x1xf32> to vector<1xf32>
    %1576 = vector.shape_cast %1575 : vector<1xf32> to vector<1x1xf32>
    %c6_i32 = arith.constant 6 : i32
    %1577 = vector.broadcast %c6_i32 : i32 to vector<1x8xi32>
    %1578 = arith.cmpi eq, %1274, %1577 : vector<1x8xi32>
    %cst_641 = arith.constant 0.000000e+00 : f32
    %1579 = vector.shape_cast %1576 : vector<1x1xf32> to vector<1x1xf32>
    %1580 = vector.broadcast %1579 : vector<1x1xf32> to vector<1x8xf32>
    %1581 = vector.broadcast %cst_641 : f32 to vector<1x8xf32>
    %1582 = arith.select %1578, %1580, %1581 : vector<1x8xi1>, vector<1x8xf32>
    %1583 = arith.addf %1539, %1582 : vector<1x8xf32>
    %c7_642 = arith.constant 7 : index
    %c0_643 = arith.constant 0 : index
    %c0_644 = arith.constant 0 : index
    %c0_645 = arith.constant 0 : index
    %1584 = vector.load %arg4[%c7_642, %c0_643, %c0_644, %c0_645] : memref<8x8x14x14xf32, #tpu.memory_space<vmem>>, vector<1x8x14x14xf32>
    %1585 = vector.shape_cast %1584 : vector<1x8x14x14xf32> to vector<8x14x14xf32>
    %1586 = vector.extract_strided_slice %1585 {offsets = [0, 0, 0], sizes = [1, 14, 14], strides = [1, 1, 1]} : vector<8x14x14xf32> to vector<1x14x14xf32>
    %1587 = vector.shape_cast %1586 : vector<1x14x14xf32> to vector<14x14xf32>
    %1588 = arith.mulf %1238, %1587 : vector<14x14xf32>
    %1589 = vector.extract_strided_slice %1585 {offsets = [1, 0, 0], sizes = [1, 14, 14], strides = [1, 1, 1]} : vector<8x14x14xf32> to vector<1x14x14xf32>
    %1590 = vector.shape_cast %1589 : vector<1x14x14xf32> to vector<14x14xf32>
    %1591 = arith.mulf %1243, %1590 : vector<14x14xf32>
    %1592 = arith.addf %1588, %1591 : vector<14x14xf32>
    %1593 = vector.extract_strided_slice %1585 {offsets = [2, 0, 0], sizes = [1, 14, 14], strides = [1, 1, 1]} : vector<8x14x14xf32> to vector<1x14x14xf32>
    %1594 = vector.shape_cast %1593 : vector<1x14x14xf32> to vector<14x14xf32>
    %1595 = arith.mulf %1248, %1594 : vector<14x14xf32>
    %1596 = arith.addf %1592, %1595 : vector<14x14xf32>
    %1597 = vector.extract_strided_slice %1585 {offsets = [3, 0, 0], sizes = [1, 14, 14], strides = [1, 1, 1]} : vector<8x14x14xf32> to vector<1x14x14xf32>
    %1598 = vector.shape_cast %1597 : vector<1x14x14xf32> to vector<14x14xf32>
    %1599 = arith.mulf %1253, %1598 : vector<14x14xf32>
    %1600 = arith.addf %1596, %1599 : vector<14x14xf32>
    %1601 = vector.extract_strided_slice %1585 {offsets = [4, 0, 0], sizes = [1, 14, 14], strides = [1, 1, 1]} : vector<8x14x14xf32> to vector<1x14x14xf32>
    %1602 = vector.shape_cast %1601 : vector<1x14x14xf32> to vector<14x14xf32>
    %1603 = arith.mulf %1258, %1602 : vector<14x14xf32>
    %1604 = arith.addf %1600, %1603 : vector<14x14xf32>
    %1605 = vector.extract_strided_slice %1585 {offsets = [5, 0, 0], sizes = [1, 14, 14], strides = [1, 1, 1]} : vector<8x14x14xf32> to vector<1x14x14xf32>
    %1606 = vector.shape_cast %1605 : vector<1x14x14xf32> to vector<14x14xf32>
    %1607 = arith.mulf %1263, %1606 : vector<14x14xf32>
    %1608 = arith.addf %1604, %1607 : vector<14x14xf32>
    %1609 = vector.extract_strided_slice %1585 {offsets = [6, 0, 0], sizes = [1, 14, 14], strides = [1, 1, 1]} : vector<8x14x14xf32> to vector<1x14x14xf32>
    %1610 = vector.shape_cast %1609 : vector<1x14x14xf32> to vector<14x14xf32>
    %1611 = arith.mulf %1268, %1610 : vector<14x14xf32>
    %1612 = arith.addf %1608, %1611 : vector<14x14xf32>
    %1613 = vector.extract_strided_slice %1585 {offsets = [7, 0, 0], sizes = [1, 14, 14], strides = [1, 1, 1]} : vector<8x14x14xf32> to vector<1x14x14xf32>
    %1614 = vector.shape_cast %1613 : vector<1x14x14xf32> to vector<14x14xf32>
    %1615 = arith.mulf %1273, %1614 : vector<14x14xf32>
    %1616 = arith.addf %1612, %1615 : vector<14x14xf32>
    %cst_646 = arith.constant dense<0.000000e+00> : vector<14xf32>
    %1617 = vector.multi_reduction <add>, %1616, %cst_646 [1] : vector<14x14xf32> to vector<14xf32>
    %1618 = vector.shape_cast %1617 : vector<14xf32> to vector<14x1xf32>
    %cst_647 = arith.constant dense<0.000000e+00> : vector<1xf32>
    %1619 = vector.multi_reduction <add>, %1618, %cst_647 [0] : vector<14x1xf32> to vector<1xf32>
    %1620 = vector.shape_cast %1619 : vector<1xf32> to vector<1x1xf32>
    %c7_i32 = arith.constant 7 : i32
    %1621 = vector.broadcast %c7_i32 : i32 to vector<1x8xi32>
    %1622 = arith.cmpi eq, %1274, %1621 : vector<1x8xi32>
    %cst_648 = arith.constant 0.000000e+00 : f32
    %1623 = vector.shape_cast %1620 : vector<1x1xf32> to vector<1x1xf32>
    %1624 = vector.broadcast %1623 : vector<1x1xf32> to vector<1x8xf32>
    %1625 = vector.broadcast %cst_648 : f32 to vector<1x8xf32>
    %1626 = arith.select %1622, %1624, %1625 : vector<1x8xi1>, vector<1x8xf32>
    %1627 = arith.addf %1583, %1626 : vector<1x8xf32>
    %c0_649 = arith.constant 0 : index
    %c0_650 = arith.constant 0 : index
    %c0_651 = arith.constant 0 : index
    %1628 = vector.load %arg6[%c0_649, %c0_650, %c0_651] : memref<1x1x8xf32, #tpu.memory_space<vmem>>, vector<1x1x8xf32>
    %1629 = vector.shape_cast %1628 : vector<1x1x8xf32> to vector<1x8xf32>
    %1630 = vector.shape_cast %1627 : vector<1x8xf32> to vector<1x1x8xf32>
    tpu.vector_store %arg6[%c0_649, %c0_650, %c0_651], %1630 {strides = array<i32>} : memref<1x1x8xf32, #tpu.memory_space<vmem>>, vector<1x1x8xf32>,
    return
  }
  func.func @transform_0(%arg0: i32) -> (i32, i32, i32, i32) {
    %c0_i32 = arith.constant 0 : i32
    %c0_i32_0 = arith.constant 0 : i32
    %c0_i32_1 = arith.constant 0 : i32
    %c0_i32_2 = arith.constant 0 : i32
    return %arg0, %c0_i32, %c0_i32_0, %c0_i32_1 : i32, i32, i32, i32
  }
  func.func @transform_1(%arg0: i32) -> (i32, i32) {
    %c0_i32 = arith.constant 0 : i32
    %c0_i32_0 = arith.constant 0 : i32
    %c0_i32_1 = arith.constant 0 : i32
    return %c0_i32, %c0_i32_0 : i32, i32
  }
  func.func @transform_2(%arg0: i32) -> i32 {
    %c0_i32 = arith.constant 0 : i32
    %c0_i32_0 = arith.constant 0 : i32
    return %c0_i32 : i32
  }
  func.func @transform_3(%arg0: i32) -> (i32, i32, i32, i32) {
    %c0_i32 = arith.constant 0 : i32
    %c0_i32_0 = arith.constant 0 : i32
    %c0_i32_1 = arith.constant 0 : i32
    %c0_i32_2 = arith.constant 0 : i32
    %c0_i32_3 = arith.constant 0 : i32
    return %c0_i32, %c0_i32_0, %c0_i32_1, %c0_i32_2 : i32, i32, i32, i32
  }
  func.func @transform_4(%arg0: i32) -> (i32, i32) {
    %c0_i32 = arith.constant 0 : i32
    %c0_i32_0 = arith.constant 0 : i32
    %c0_i32_1 = arith.constant 0 : i32
    return %c0_i32, %c0_i32_0 : i32, i32
  }
  func.func @transform_5(%arg0: i32) -> (i32, i32, i32) {
    %c0_i32 = arith.constant 0 : i32
    %c0_i32_0 = arith.constant 0 : i32
    %c0_i32_1 = arith.constant 0 : i32
    return %arg0, %c0_i32, %c0_i32_0 : i32, i32, i32
  }
}

</mosaic_0001>

<llo_original>
// kernel: tpu_custom_call.1
$region0: #{tpu_custom_call.1}
  #allocation0 [shape = 'u32[]', space=smem, size = 0x4, offset = 0x4, fixed_abs, tag = 'smem constant byte address 0x4 - core index']
  #allocation1 [shape = 'u32[144,128]{1,0:T(1,128)}', space=vmem, size = 0x12000, scoped, tag = 'internal scratch']
  %s0 = inlined_call_operand.vmem [shape: f32[2,4,16,16], index: 0, kind: input, shape index: {}]
  %s1 = inlined_call_operand.vmem [shape: f32[8,36], index: 1, kind: input, shape index: {}]
  %s2 = inlined_call_operand.vmem [shape: f32[8], index: 2, kind: input, shape index: {}]
  %s3 = inlined_call_operand.vmem [shape: f32[8,8,14,14], index: 3, kind: input, shape index: {}]
  %s4 = inlined_call_operand.vmem [shape: f32[1,8], index: 4, kind: input, shape index: {}]
  %s5 = inlined_call_operand.hbm [shape: f32[2,1,8], index: 5, kind: output, shape index: {}]
  %s6 = sld [smem:[#allocation0]]
  $region61: #{tpu_custom_call.1} parent=0
    _
  %s8 = ssub.s32 1, %s6
  %s9 = scalar_select 0, %s8, %s6
  $region1: #{tpu_custom_call.1} parent=0
    #allocation2 [shape = 'u8[4096]{0}', space=smem, size = 0x1000, scoped, tag = 'input window, operand 1, single buffered']
    #allocation3 [shape = 's32[2]{0}', space=sflag, size = 0x8, scoped, tag = 'scoped memory for tpu_custom_call.1']
    #allocation4 [shape = 's32[2]{0}', space=sflag, size = 0x8, scoped, tag = 'scoped memory for tpu_custom_call.1']
    #allocation5 [shape = 'u8[512]{0}', space=smem, size = 0x200, scoped, tag = 'input window, operand 2, single buffered']
    #allocation6 [shape = 's32[1]{0}', space=sflag, size = 0x4, scoped, tag = 'scoped memory for tpu_custom_call.1']
    #allocation7 [shape = 'u8[1024]{0}', space=vmem, size = 0x400, scoped, tag = 'output window, operand 0']
    %10 = vsyncpa [#allocation4], 0
    %11 = vsyncpa [#allocation6], 0
    %12 = vsyncpa [#allocation3], 0
    %s13 = scalar_lea.sflag [#allocation3], 1
    %14 = vsyncpa %s13, 0
    loop: start=0, step=1, limit=4
    $region2: #{tpu_custom_call.1} parent=1 // loop_pre_header
      _
    $region3: #{tpu_custom_call.1} parent=1 // loop_header
      %s16 = sphi 0, %s20
      %p17 = scmp.ge.s32.totalorder %s16, 4
      %s26 = sphi 0, %s28
      %s29 = sphi 0, %s26
      %s30 = sphi 0, %s29
      %s46 = sphi 0, %s30
      %s50 = sphi 0, %s50
      %s52 = sphi 0, %s50
      %s53 = sphi 0, %s52
      %s67 = sphi 0, %s53
      %s71 = sphi 0, %s71
      %s73 = sphi 0, %s71
      %s74 = sphi 0, %s73
      %s88 = sphi 0, %s74
      %s92 = sphi 0, %s92
      %s94 = sphi 0, %s92
      %s95 = sphi 0, %s94
      %s109 = sphi 0, %s95
      %s113 = sphi 0, %s113
      %s115 = sphi 0, %s113
      %s116 = sphi 0, %s115
      %s130 = sphi 0, %s116
      %s136 = sphi 0, %s138
      %s139 = sphi 0, %s136
      %s140 = sphi 0, %s139
      %s156 = sphi 0, %s140
    $region4: #{tpu_custom_call.1} parent=1 // loop_header_branch
      %19 = sbr.rel (%p17) target = $region8
    $region5: #{tpu_custom_call.1} parent=1 // loop_body
      %s21 = ssub.s32 %s16, 1
      %s22 = ssub.s32 %s16, 2
      %s23 = sadd.s32 %s16, 1
      %s24 = ssub.s32 %s16, %s23
      %p25 = scmp.eq.s32.totalorder %s24, 0
      %s27 = sadd.s32 %s26, 1
      %s28 = scalar_select %p25, %s26, %s27
      %p31 = pneg %p25
      %p32 = scmp.eq.s32.totalorder %s16, 1
      %p33 = por %p31, %p32
      %p34 = scmp.ne.s32.totalorder %s26, %s29
      %p35 = scmp.eq.s32.totalorder %s16, 0
      %p36 = por %p34, %p35
      %p37 = scmp.ne.s32.totalorder %s26, %s29
      %p38 = scmp.eq.s32.totalorder %s21, 1
      %p39 = por %p37, %p38
      %p40 = scmp.ne.s32.totalorder %s29, %s30
      %p41 = scmp.eq.s32.totalorder %s21, 0
      %p42 = por %p40, %p41
      %p43 = scmp.ne.s32.totalorder %s29, %s30
      %p44 = scmp.eq.s32.totalorder %s22, 1
      %p45 = por %p43, %p44
      %p47 = scmp.ne.s32.totalorder %s30, %s46
      %p48 = scmp.eq.s32.totalorder %s22, 0
      %p49 = por %p47, %p48
      %s51 = sadd.s32 %s50, 1
      %p54 = scmp.eq.s32.totalorder %s16, 1
      %p55 = scmp.ne.s32.totalorder %s50, %s52
      %p56 = scmp.eq.s32.totalorder %s16, 0
      %p57 = por %p55, %p56
      %p58 = scmp.ne.s32.totalorder %s50, %s52
      %p59 = scmp.eq.s32.totalorder %s21, 1
      %p60 = por %p58, %p59
      %p61 = scmp.ne.s32.totalorder %s52, %s53
      %p62 = scmp.eq.s32.totalorder %s21, 0
      %p63 = por %p61, %p62
      %p64 = scmp.ne.s32.totalorder %s52, %s53
      %p65 = scmp.eq.s32.totalorder %s22, 1
      %p66 = por %p64, %p65
      %p68 = scmp.ne.s32.totalorder %s53, %s67
      %p69 = scmp.eq.s32.totalorder %s22, 0
      %p70 = por %p68, %p69
      %s72 = sadd.s32 %s71, 1
      %p75 = scmp.eq.s32.totalorder %s16, 1
      %p76 = scmp.ne.s32.totalorder %s71, %s73
      %p77 = scmp.eq.s32.totalorder %s16, 0
      %p78 = por %p76, %p77
      %p79 = scmp.ne.s32.totalorder %s71, %s73
      %p80 = scmp.eq.s32.totalorder %s21, 1
      %p81 = por %p79, %p80
      %p82 = scmp.ne.s32.totalorder %s73, %s74
      %p83 = scmp.eq.s32.totalorder %s21, 0
      %p84 = por %p82, %p83
      %p85 = scmp.ne.s32.totalorder %s73, %s74
      %p86 = scmp.eq.s32.totalorder %s22, 1
      %p87 = por %p85, %p86
      %p89 = scmp.ne.s32.totalorder %s74, %s88
      %p90 = scmp.eq.s32.totalorder %s22, 0
      %p91 = por %p89, %p90
      %s93 = sadd.s32 %s92, 1
      %p96 = scmp.eq.s32.totalorder %s16, 1
      %p97 = scmp.ne.s32.totalorder %s92, %s94
      %p98 = scmp.eq.s32.totalorder %s16, 0
      %p99 = por %p97, %p98
      %p100 = scmp.ne.s32.totalorder %s92, %s94
      %p101 = scmp.eq.s32.totalorder %s21, 1
      %p102 = por %p100, %p101
      %p103 = scmp.ne.s32.totalorder %s94, %s95
      %p104 = scmp.eq.s32.totalorder %s21, 0
      %p105 = por %p103, %p104
      %p106 = scmp.ne.s32.totalorder %s94, %s95
      %p107 = scmp.eq.s32.totalorder %s22, 1
      %p108 = por %p106, %p107
      %p110 = scmp.ne.s32.totalorder %s95, %s109
      %p111 = scmp.eq.s32.totalorder %s22, 0
      %p112 = por %p110, %p111
      %s114 = sadd.s32 %s113, 1
      %p117 = scmp.eq.s32.totalorder %s16, 1
      %p118 = scmp.ne.s32.totalorder %s113, %s115
      %p119 = scmp.eq.s32.totalorder %s16, 0
      %p120 = por %p118, %p119
      %p121 = scmp.ne.s32.totalorder %s113, %s115
      %p122 = scmp.eq.s32.totalorder %s21, 1
      %p123 = por %p121, %p122
      %p124 = scmp.ne.s32.totalorder %s115, %s116
      %p125 = scmp.eq.s32.totalorder %s21, 0
      %p126 = por %p124, %p125
      %p127 = scmp.ne.s32.totalorder %s115, %s116
      %p128 = scmp.eq.s32.totalorder %s22, 1
      %p129 = por %p127, %p128
      %p131 = scmp.ne.s32.totalorder %s116, %s130
      %p132 = scmp.eq.s32.totalorder %s22, 0
      %p133 = por %p131, %p132
      %s134 = ssub.s32 %s16, %s23
      %p135 = scmp.eq.s32.totalorder %s134, 0
      %s137 = sadd.s32 %s136, 1
      %s138 = scalar_select %p135, %s136, %s137
      %p141 = pneg %p135
      %p142 = scmp.eq.s32.totalorder %s16, 1
      %p143 = por %p141, %p142
      %p144 = scmp.ne.s32.totalorder %s136, %s139
      %p145 = scmp.eq.s32.totalorder %s16, 0
      %p146 = por %p144, %p145
      %p147 = scmp.ne.s32.totalorder %s136, %s139
      %p148 = scmp.eq.s32.totalorder %s21, 1
      %p149 = por %p147, %p148
      %p150 = scmp.ne.s32.totalorder %s139, %s140
      %p151 = scmp.eq.s32.totalorder %s21, 0
      %p152 = por %p150, %p151
      %p153 = scmp.ne.s32.totalorder %s139, %s140
      %p154 = scmp.eq.s32.totalorder %s22, 1
      %p155 = por %p153, %p154
      %p157 = scmp.ne.s32.totalorder %s140, %s156
      %p158 = scmp.eq.s32.totalorder %s22, 0
      %p159 = por %p157, %p158
      %p160 = scmp.le.s32.totalorder 1, %s16
      %p161 = scmp.lt.s32.totalorder %s16, 3
      %p162 = pnand %p160, %p161
      %p163 = pneg %p162
      // Predicated region
      $region9: #{tpu_custom_call.1} parent=5 // pred_check
        _
      $region10: #{tpu_custom_call.1} parent=5 // pred_check_branch
        %165 = sbr.rel (%p162) target = $region12
      $region11: #{tpu_custom_call.1} parent=5 // pred_region
        %s166 = ssub.s32 %s16, 1
        // Predicated region
        $region13: #{tpu_custom_call.1} parent=11 // pred_check
          %p167 = pneg %p63
        $region14: #{tpu_custom_call.1} parent=11 // pred_check_branch
          %169 = sbr.rel (%p167) target = $region16
        $region15: #{tpu_custom_call.1} parent=11 // pred_region
          %s171 = ssub.s32 128, 128
          %172 = vsyncadd [#allocation4], %s171
          %s174 = sshll.u32 %s1, 4
          %s175 = int_to_ptr.vmem [resolvable:$true] %s174
          %177 = dma.vmem_to_smem %s175, 128, [#allocation2], [#allocation4]
        $region16: #{tpu_custom_call.1} parent=11 // pred_fallthru
          _
        // Predicated region
        $region17: #{tpu_custom_call.1} parent=11 // pred_check
          %p178 = pneg %p84
        $region18: #{tpu_custom_call.1} parent=11 // pred_check_branch
          %180 = sbr.rel (%p178) target = $region20
        $region19: #{tpu_custom_call.1} parent=11 // pred_region
          %s182 = ssub.s32 16, 16
          %183 = vsyncadd [#allocation6], %s182
          %s185 = sshll.u32 %s2, 4
          %s186 = int_to_ptr.vmem [resolvable:$true] %s185
          %188 = dma.vmem_to_smem %s186, 16, [#allocation5], [#allocation6]
        $region20: #{tpu_custom_call.1} parent=11 // pred_fallthru
          _
        // Predicated region
        $region21: #{tpu_custom_call.1} parent=11 // pred_check
          %p189 = pneg %p105
        $region22: #{tpu_custom_call.1} parent=11 // pred_check_branch
          %191 = sbr.rel (%p189) target = $region24
        $region23: #{tpu_custom_call.1} parent=11 // pred_region
          _
        $region24: #{tpu_custom_call.1} parent=11 // pred_fallthru
          _
        // Predicated region
        $region25: #{tpu_custom_call.1} parent=11 // pred_check
          %p192 = pneg %p126
        $region26: #{tpu_custom_call.1} parent=11 // pred_check_branch
          %194 = sbr.rel (%p192) target = $region28
        $region27: #{tpu_custom_call.1} parent=11 // pred_region
          _
        $region28: #{tpu_custom_call.1} parent=11 // pred_fallthru
          _
      $region12: #{tpu_custom_call.1} parent=5 // pred_fallthru
        _
      %p195 = scmp.lt.s32.totalorder %s16, 2
      // Predicated region
      $region29: #{tpu_custom_call.1} parent=5 // pred_check
        %p196 = pneg %p195
      $region30: #{tpu_custom_call.1} parent=5 // pred_check_branch
        %198 = sbr.rel (%p196) target = $region32
      $region31: #{tpu_custom_call.1} parent=5 // pred_region
        // Predicated region
        $region33: #{tpu_custom_call.1} parent=31 // pred_check
          %p199 = pneg %p36
        $region34: #{tpu_custom_call.1} parent=31 // pred_check_branch
          %201 = sbr.rel (%p199) target = $region36
        $region35: #{tpu_custom_call.1} parent=31 // pred_region
          %p202 = scmp.lt.s32.totalorder %s16, 1
          %s203 = scalar_select %p202, %s16, 1
          %s204 = smul.addr %s203, 8
          %s205 = smul.addr %s204, 8
          %s206 = scalar_lea.vmem %s0, %s205
        $region36: #{tpu_custom_call.1} parent=31 // pred_fallthru
          _
      $region32: #{tpu_custom_call.1} parent=5 // pred_fallthru
        _
      %p207 = scmp.le.s32.totalorder 1, %s16
      %p208 = scmp.lt.s32.totalorder %s16, 3
      %p209 = pnand %p207, %p208
      %p210 = pneg %p209
      // Predicated region
      $region37: #{tpu_custom_call.1} parent=5 // pred_check
        _
      $region38: #{tpu_custom_call.1} parent=5 // pred_check_branch
        %212 = sbr.rel (%p209) target = $region40
      $region39: #{tpu_custom_call.1} parent=5 // pred_region
        %s213 = ssub.s32 %s16, 1
        // Predicated region
        $region41: #{tpu_custom_call.1} parent=39 // pred_check
          %p214 = pneg %p63
        $region42: #{tpu_custom_call.1} parent=39 // pred_check_branch
          %216 = sbr.rel (%p214) target = $region44
        $region43: #{tpu_custom_call.1} parent=39 // pred_region
          %217 = dma.done [#allocation4], 128
        $region44: #{tpu_custom_call.1} parent=39 // pred_fallthru
          _
        // Predicated region
        $region45: #{tpu_custom_call.1} parent=39 // pred_check
          %p218 = pneg %p84
        $region46: #{tpu_custom_call.1} parent=39 // pred_check_branch
          %220 = sbr.rel (%p218) target = $region48
        $region47: #{tpu_custom_call.1} parent=39 // pred_region
          %221 = dma.done [#allocation6], 16
        $region48: #{tpu_custom_call.1} parent=39 // pred_fallthru
          _
        %222 = sfence
        %p223 = scmp.lt.s32.totalorder %s21, 1
        %s224 = scalar_select %p223, %s21, 1
        %s225 = smul.addr %s224, 8
        %s226 = smul.addr %s225, 8
        %s227 = scalar_lea.vmem %s0, %s226
        %p228 = pneg %p42
        %p229 = pneg %p39
        %p230 = pneg %p63
        %p231 = pneg %p60
        %p232 = pneg %p84
        %p233 = pneg %p81
        %p234 = pneg %p105
        %p235 = pneg %p102
        %p236 = pneg %p126
        %p237 = pneg %p123
        %p238 = pneg %p152
        %p239 = pneg %p149
        %s240 = sand.u32 %s139, 1
        %s241 = scalar_lea.sflag [#allocation3], %s240
        %s242 = sand.u32 %s139, 1
        %s243 = scalar_lea.vmem [#allocation7], %s242
        %p244 = scmp.lt.s32.totalorder %s21, 1
        %s245 = scalar_select %p244, %s21, 1
        %s246 = smul.addr %s245, 8
        %s247 = smul.addr %s246, 8
        %s248 = scalar_lea.vmem %s0, %s247
        %v249 = vld [vmem:[%s248] sm:$0xff]
        %v250 = vld [vmem:[%s248 + $0x8] sm:$0x3f]
        %v251 = vld [vmem:[%s248 + $0x10] sm:$0xff]
        %v252 = vld [vmem:[%s248 + $0x18] sm:$0x3f]
        %v253 = vld [vmem:[%s248 + $0x20] sm:$0xff]
        %v254 = vld [vmem:[%s248 + $0x28] sm:$0x3f]
        %v255 = vld [vmem:[%s248 + $0x30] sm:$0xff]
        %v256 = vld [vmem:[%s248 + $0x38] sm:$0x3f]
        %s257 = sld [smem:[#allocation2]]
        %v258 = vstv %s257
        %v259 = vmul.f32 %v258, %v249
        %v260 = vmul.f32 %v258, %v250
        %s261 = sld [smem:[#allocation2 + $0x80]]
        %v262 = vstv %s261
        %v263 = vmul.f32 %v262, %v249
        %v264 = vmul.f32 %v262, %v250
        %s265 = sld [smem:[#allocation2 + $0x100]]
        %v266 = vstv %s265
        %v267 = vmul.f32 %v266, %v249
        %v268 = vmul.f32 %v266, %v250
        %s269 = sld [smem:[#allocation2 + $0x180]]
        %v270 = vstv %s269
        %v271 = vmul.f32 %v270, %v249
        %v272 = vmul.f32 %v270, %v250
        %s273 = sld [smem:[#allocation2 + $0x200]]
        %v274 = vstv %s273
        %v275 = vmul.f32 %v274, %v249
        %v276 = vmul.f32 %v274, %v250
        %s277 = sld [smem:[#allocation2 + $0x280]]
        %v278 = vstv %s277
        %v279 = vmul.f32 %v278, %v249
        %v280 = vmul.f32 %v278, %v250
        %s281 = sld [smem:[#allocation2 + $0x300]]
        %v282 = vstv %s281
        %v283 = vmul.f32 %v282, %v249
        %v284 = vmul.f32 %v282, %v250
        %s285 = sld [smem:[#allocation2 + $0x380]]
        %v286 = vstv %s285
        %v287 = vmul.f32 %v286, %v249
        %v288 = vmul.f32 %v286, %v250
        %s289 = sld [smem:[#allocation2 + $0x9]]
        %v290 = vstv %s289
        %v291 = vmul.f32 %v290, %v251
        %v292 = vmul.f32 %v290, %v252
        %v293 = vadd.f32 %v259, %v291
        %v294 = vadd.f32 %v260, %v292
        %s295 = sld [smem:[#allocation2 + $0x89]]
        %v296 = vstv %s295
        %v297 = vmul.f32 %v296, %v251
        %v298 = vmul.f32 %v296, %v252
        %v299 = vadd.f32 %v263, %v297
        %v300 = vadd.f32 %v264, %v298
        %s301 = sld [smem:[#allocation2 + $0x109]]
        %v302 = vstv %s301
        %v303 = vmul.f32 %v302, %v251
        %v304 = vmul.f32 %v302, %v252
        %v305 = vadd.f32 %v267, %v303
        %v306 = vadd.f32 %v268, %v304
        %s307 = sld [smem:[#allocation2 + $0x189]]
        %v308 = vstv %s307
        %v309 = vmul.f32 %v308, %v251
        %v310 = vmul.f32 %v308, %v252
        %v311 = vadd.f32 %v271, %v309
        %v312 = vadd.f32 %v272, %v310
        %s313 = sld [smem:[#allocation2 + $0x209]]
        %v314 = vstv %s313
        %v315 = vmul.f32 %v314, %v251
        %v316 = vmul.f32 %v314, %v252
        %v317 = vadd.f32 %v275, %v315
        %v318 = vadd.f32 %v276, %v316
        %s319 = sld [smem:[#allocation2 + $0x289]]
        %v320 = vstv %s319
        %v321 = vmul.f32 %v320, %v251
        %v322 = vmul.f32 %v320, %v252
        %v323 = vadd.f32 %v279, %v321
        %v324 = vadd.f32 %v280, %v322
        %s325 = sld [smem:[#allocation2 + $0x309]]
        %v326 = vstv %s325
        %v327 = vmul.f32 %v326, %v251
        %v328 = vmul.f32 %v326, %v252
        %v329 = vadd.f32 %v283, %v327
        %v330 = vadd.f32 %v284, %v328
        %s331 = sld [smem:[#allocation2 + $0x389]]
        %v332 = vstv %s331
        %v333 = vmul.f32 %v332, %v251
        %v334 = vmul.f32 %v332, %v252
        %v335 = vadd.f32 %v287, %v333
        %v336 = vadd.f32 %v288, %v334
        %s337 = sld [smem:[#allocation2 + $0x12]]
        %v338 = vstv %s337
        %v339 = vmul.f32 %v338, %v253
        %v340 = vmul.f32 %v338, %v254
        %v341 = vadd.f32 %v293, %v339
        %v342 = vadd.f32 %v294, %v340
        %s343 = sld [smem:[#allocation2 + $0x92]]
        %v344 = vstv %s343
        %v345 = vmul.f32 %v344, %v253
        %v346 = vmul.f32 %v344, %v254
        %v347 = vadd.f32 %v299, %v345
        %v348 = vadd.f32 %v300, %v346
        %s349 = sld [smem:[#allocation2 + $0x112]]
        %v350 = vstv %s349
        %v351 = vmul.f32 %v350, %v253
        %v352 = vmul.f32 %v350, %v254
        %v353 = vadd.f32 %v305, %v351
        %v354 = vadd.f32 %v306, %v352
        %s355 = sld [smem:[#allocation2 + $0x192]]
        %v356 = vstv %s355
        %v357 = vmul.f32 %v356, %v253
        %v358 = vmul.f32 %v356, %v254
        %v359 = vadd.f32 %v311, %v357
        %v360 = vadd.f32 %v312, %v358
        %s361 = sld [smem:[#allocation2 + $0x212]]
        %v362 = vstv %s361
        %v363 = vmul.f32 %v362, %v253
        %v364 = vmul.f32 %v362, %v254
        %v365 = vadd.f32 %v317, %v363
        %v366 = vadd.f32 %v318, %v364
        %s367 = sld [smem:[#allocation2 + $0x292]]
        %v368 = vstv %s367
        %v369 = vmul.f32 %v368, %v253
        %v370 = vmul.f32 %v368, %v254
        %v371 = vadd.f32 %v323, %v369
        %v372 = vadd.f32 %v324, %v370
        %s373 = sld [smem:[#allocation2 + $0x312]]
        %v374 = vstv %s373
        %v375 = vmul.f32 %v374, %v253
        %v376 = vmul.f32 %v374, %v254
        %v377 = vadd.f32 %v329, %v375
        %v378 = vadd.f32 %v330, %v376
        %s379 = sld [smem:[#allocation2 + $0x392]]
        %v380 = vstv %s379
        %v381 = vmul.f32 %v380, %v253
        %v382 = vmul.f32 %v380, %v254
        %v383 = vadd.f32 %v335, %v381
        %v384 = vadd.f32 %v336, %v382
        %s385 = sld [smem:[#allocation2 + $0x1b]]
        %v386 = vstv %s385
        %v387 = vmul.f32 %v386, %v255
        %v388 = vmul.f32 %v386, %v256
        %v389 = vadd.f32 %v341, %v387
        %v390 = vadd.f32 %v342, %v388
        %s391 = sld [smem:[#allocation2 + $0x9b]]
        %v392 = vstv %s391
        %v393 = vmul.f32 %v392, %v255
        %v394 = vmul.f32 %v392, %v256
        %v395 = vadd.f32 %v347, %v393
        %v396 = vadd.f32 %v348, %v394
        %s397 = sld [smem:[#allocation2 + $0x11b]]
        %v398 = vstv %s397
        %v399 = vmul.f32 %v398, %v255
        %v400 = vmul.f32 %v398, %v256
        %v401 = vadd.f32 %v353, %v399
        %v402 = vadd.f32 %v354, %v400
        %s403 = sld [smem:[#allocation2 + $0x19b]]
        %v404 = vstv %s403
        %v405 = vmul.f32 %v404, %v255
        %v406 = vmul.f32 %v404, %v256
        %v407 = vadd.f32 %v359, %v405
        %v408 = vadd.f32 %v360, %v406
        %s409 = sld [smem:[#allocation2 + $0x21b]]
        %v410 = vstv %s409
        %v411 = vmul.f32 %v410, %v255
        %v412 = vmul.f32 %v410, %v256
        %v413 = vadd.f32 %v365, %v411
        %v414 = vadd.f32 %v366, %v412
        %s415 = sld [smem:[#allocation2 + $0x29b]]
        %v416 = vstv %s415
        %v417 = vmul.f32 %v416, %v255
        %v418 = vmul.f32 %v416, %v256
        %v419 = vadd.f32 %v371, %v417
        %v420 = vadd.f32 %v372, %v418
        %s421 = sld [smem:[#allocation2 + $0x31b]]
        %v422 = vstv %s421
        %v423 = vmul.f32 %v422, %v255
        %v424 = vmul.f32 %v422, %v256
        %v425 = vadd.f32 %v377, %v423
        %v426 = vadd.f32 %v378, %v424
        %s427 = sld [smem:[#allocation2 + $0x39b]]
        %v428 = vstv %s427
        %v429 = vmul.f32 %v428, %v255
        %v430 = vmul.f32 %v428, %v256
        %v431 = vadd.f32 %v383, %v429
        %v432 = vadd.f32 %v384, %v430
        %s433 = sld [smem:[#allocation2 + $0x1]]
        %v434 = vstv %s433
        %v435 = vmul.f32 %v434, %v249
        %v436 = vmul.f32 %v434, %v250
        %439 = vrot.lane.b32.xlu0 %v435, 127
        %v440 = vpop.permute.xlu0 %439
        %441 = vrot.lane.b32.xlu0 %v436, 127
        %v442 = vpop.permute.xlu0 %441
        %v445 = vadd.f32 %v389, %v440
        %v446 = vadd.f32 %v390, %v442
        %s447 = sld [smem:[#allocation2 + $0x81]]
        %v448 = vstv %s447
        %v449 = vmul.f32 %v448, %v249
        %v450 = vmul.f32 %v448, %v250
        %453 = vrot.lane.b32.xlu0 %v449, 127
        %v454 = vpop.permute.xlu0 %453
        %455 = vrot.lane.b32.xlu0 %v450, 127
        %v456 = vpop.permute.xlu0 %455
        %v459 = vadd.f32 %v395, %v454
        %v460 = vadd.f32 %v396, %v456
        %s461 = sld [smem:[#allocation2 + $0x101]]
        %v462 = vstv %s461
        %v463 = vmul.f32 %v462, %v249
        %v464 = vmul.f32 %v462, %v250
        %467 = vrot.lane.b32.xlu0 %v463, 127
        %v468 = vpop.permute.xlu0 %467
        %469 = vrot.lane.b32.xlu0 %v464, 127
        %v470 = vpop.permute.xlu0 %469
        %v473 = vadd.f32 %v401, %v468
        %v474 = vadd.f32 %v402, %v470
        %s475 = sld [smem:[#allocation2 + $0x181]]
        %v476 = vstv %s475
        %v477 = vmul.f32 %v476, %v249
        %v478 = vmul.f32 %v476, %v250
        %481 = vrot.lane.b32.xlu0 %v477, 127
        %v482 = vpop.permute.xlu0 %481
        %483 = vrot.lane.b32.xlu0 %v478, 127
        %v484 = vpop.permute.xlu0 %483
        %v487 = vadd.f32 %v407, %v482
        %v488 = vadd.f32 %v408, %v484
        %s489 = sld [smem:[#allocation2 + $0x201]]
        %v490 = vstv %s489
        %v491 = vmul.f32 %v490, %v249
        %v492 = vmul.f32 %v490, %v250
        %495 = vrot.lane.b32.xlu0 %v491, 127
        %v496 = vpop.permute.xlu0 %495
        %497 = vrot.lane.b32.xlu0 %v492, 127
        %v498 = vpop.permute.xlu0 %497
        %v501 = vadd.f32 %v413, %v496
        %v502 = vadd.f32 %v414, %v498
        %s503 = sld [smem:[#allocation2 + $0x281]]
        %v504 = vstv %s503
        %v505 = vmul.f32 %v504, %v249
        %v506 = vmul.f32 %v504, %v250
        %509 = vrot.lane.b32.xlu0 %v505, 127
        %v510 = vpop.permute.xlu0 %509
        %511 = vrot.lane.b32.xlu0 %v506, 127
        %v512 = vpop.permute.xlu0 %511
        %v515 = vadd.f32 %v419, %v510
        %v516 = vadd.f32 %v420, %v512
        %s517 = sld [smem:[#allocation2 + $0x301]]
        %v518 = vstv %s517
        %v519 = vmul.f32 %v518, %v249
        %v520 = vmul.f32 %v518, %v250
        %523 = vrot.lane.b32.xlu0 %v519, 127
        %v524 = vpop.permute.xlu0 %523
        %525 = vrot.lane.b32.xlu0 %v520, 127
        %v526 = vpop.permute.xlu0 %525
        %v529 = vadd.f32 %v425, %v524
        %v530 = vadd.f32 %v426, %v526
        %s531 = sld [smem:[#allocation2 + $0x381]]
        %v532 = vstv %s531
        %v533 = vmul.f32 %v532, %v249
        %v534 = vmul.f32 %v532, %v250
        %537 = vrot.lane.b32.xlu0 %v533, 127
        %v538 = vpop.permute.xlu0 %537
        %539 = vrot.lane.b32.xlu0 %v534, 127
        %v540 = vpop.permute.xlu0 %539
        %v543 = vadd.f32 %v431, %v538
        %v544 = vadd.f32 %v432, %v540
        %s545 = sld [smem:[#allocation2 + $0xa]]
        %v546 = vstv %s545
        %v547 = vmul.f32 %v546, %v251
        %v548 = vmul.f32 %v546, %v252
        %551 = vrot.lane.b32.xlu0 %v547, 127
        %v552 = vpop.permute.xlu0 %551
        %553 = vrot.lane.b32.xlu0 %v548, 127
        %v554 = vpop.permute.xlu0 %553
        %v557 = vadd.f32 %v445, %v552
        %v558 = vadd.f32 %v446, %v554
        %s559 = sld [smem:[#allocation2 + $0x8a]]
        %v560 = vstv %s559
        %v561 = vmul.f32 %v560, %v251
        %v562 = vmul.f32 %v560, %v252
        %565 = vrot.lane.b32.xlu0 %v561, 127
        %v566 = vpop.permute.xlu0 %565
        %567 = vrot.lane.b32.xlu0 %v562, 127
        %v568 = vpop.permute.xlu0 %567
        %v571 = vadd.f32 %v459, %v566
        %v572 = vadd.f32 %v460, %v568
        %s573 = sld [smem:[#allocation2 + $0x10a]]
        %v574 = vstv %s573
        %v575 = vmul.f32 %v574, %v251
        %v576 = vmul.f32 %v574, %v252
        %579 = vrot.lane.b32.xlu0 %v575, 127
        %v580 = vpop.permute.xlu0 %579
        %581 = vrot.lane.b32.xlu0 %v576, 127
        %v582 = vpop.permute.xlu0 %581
        %v585 = vadd.f32 %v473, %v580
        %v586 = vadd.f32 %v474, %v582
        %s587 = sld [smem:[#allocation2 + $0x18a]]
        %v588 = vstv %s587
        %v589 = vmul.f32 %v588, %v251
        %v590 = vmul.f32 %v588, %v252
        %593 = vrot.lane.b32.xlu0 %v589, 127
        %v594 = vpop.permute.xlu0 %593
        %595 = vrot.lane.b32.xlu0 %v590, 127
        %v596 = vpop.permute.xlu0 %595
        %v599 = vadd.f32 %v487, %v594
        %v600 = vadd.f32 %v488, %v596
        %s601 = sld [smem:[#allocation2 + $0x20a]]
        %v602 = vstv %s601
        %v603 = vmul.f32 %v602, %v251
        %v604 = vmul.f32 %v602, %v252
        %607 = vrot.lane.b32.xlu0 %v603, 127
        %v608 = vpop.permute.xlu0 %607
        %609 = vrot.lane.b32.xlu0 %v604, 127
        %v610 = vpop.permute.xlu0 %609
        %v613 = vadd.f32 %v501, %v608
        %v614 = vadd.f32 %v502, %v610
        %s615 = sld [smem:[#allocation2 + $0x28a]]
        %v616 = vstv %s615
        %v617 = vmul.f32 %v616, %v251
        %v618 = vmul.f32 %v616, %v252
        %621 = vrot.lane.b32.xlu0 %v617, 127
        %v622 = vpop.permute.xlu0 %621
        %623 = vrot.lane.b32.xlu0 %v618, 127
        %v624 = vpop.permute.xlu0 %623
        %v627 = vadd.f32 %v515, %v622
        %v628 = vadd.f32 %v516, %v624
        %s629 = sld [smem:[#allocation2 + $0x30a]]
        %v630 = vstv %s629
        %v631 = vmul.f32 %v630, %v251
        %v632 = vmul.f32 %v630, %v252
        %635 = vrot.lane.b32.xlu0 %v631, 127
        %v636 = vpop.permute.xlu0 %635
        %637 = vrot.lane.b32.xlu0 %v632, 127
        %v638 = vpop.permute.xlu0 %637
        %v641 = vadd.f32 %v529, %v636
        %v642 = vadd.f32 %v530, %v638
        %s643 = sld [smem:[#allocation2 + $0x38a]]
        %v644 = vstv %s643
        %v645 = vmul.f32 %v644, %v251
        %v646 = vmul.f32 %v644, %v252
        %649 = vrot.lane.b32.xlu0 %v645, 127
        %v650 = vpop.permute.xlu0 %649
        %651 = vrot.lane.b32.xlu0 %v646, 127
        %v652 = vpop.permute.xlu0 %651
        %v655 = vadd.f32 %v543, %v650
        %v656 = vadd.f32 %v544, %v652
        %s657 = sld [smem:[#allocation2 + $0x13]]
        %v658 = vstv %s657
        %v659 = vmul.f32 %v658, %v253
        %v660 = vmul.f32 %v658, %v254
        %663 = vrot.lane.b32.xlu0 %v659, 127
        %v664 = vpop.permute.xlu0 %663
        %665 = vrot.lane.b32.xlu0 %v660, 127
        %v666 = vpop.permute.xlu0 %665
        %v669 = vadd.f32 %v557, %v664
        %v670 = vadd.f32 %v558, %v666
        %s671 = sld [smem:[#allocation2 + $0x93]]
        %v672 = vstv %s671
        %v673 = vmul.f32 %v672, %v253
        %v674 = vmul.f32 %v672, %v254
        %677 = vrot.lane.b32.xlu0 %v673, 127
        %v678 = vpop.permute.xlu0 %677
        %679 = vrot.lane.b32.xlu0 %v674, 127
        %v680 = vpop.permute.xlu0 %679
        %v683 = vadd.f32 %v571, %v678
        %v684 = vadd.f32 %v572, %v680
        %s685 = sld [smem:[#allocation2 + $0x113]]
        %v686 = vstv %s685
        %v687 = vmul.f32 %v686, %v253
        %v688 = vmul.f32 %v686, %v254
        %691 = vrot.lane.b32.xlu0 %v687, 127
        %v692 = vpop.permute.xlu0 %691
        %693 = vrot.lane.b32.xlu0 %v688, 127
        %v694 = vpop.permute.xlu0 %693
        %v697 = vadd.f32 %v585, %v692
        %v698 = vadd.f32 %v586, %v694
        %s699 = sld [smem:[#allocation2 + $0x193]]
        %v700 = vstv %s699
        %v701 = vmul.f32 %v700, %v253
        %v702 = vmul.f32 %v700, %v254
        %705 = vrot.lane.b32.xlu0 %v701, 127
        %v706 = vpop.permute.xlu0 %705
        %707 = vrot.lane.b32.xlu0 %v702, 127
        %v708 = vpop.permute.xlu0 %707
        %v711 = vadd.f32 %v599, %v706
        %v712 = vadd.f32 %v600, %v708
        %s713 = sld [smem:[#allocation2 + $0x213]]
        %v714 = vstv %s713
        %v715 = vmul.f32 %v714, %v253
        %v716 = vmul.f32 %v714, %v254
        %719 = vrot.lane.b32.xlu0 %v715, 127
        %v720 = vpop.permute.xlu0 %719
        %721 = vrot.lane.b32.xlu0 %v716, 127
        %v722 = vpop.permute.xlu0 %721
        %v725 = vadd.f32 %v613, %v720
        %v726 = vadd.f32 %v614, %v722
        %s727 = sld [smem:[#allocation2 + $0x293]]
        %v728 = vstv %s727
        %v729 = vmul.f32 %v728, %v253
        %v730 = vmul.f32 %v728, %v254
        %733 = vrot.lane.b32.xlu0 %v729, 127
        %v734 = vpop.permute.xlu0 %733
        %735 = vrot.lane.b32.xlu0 %v730, 127
        %v736 = vpop.permute.xlu0 %735
        %v739 = vadd.f32 %v627, %v734
        %v740 = vadd.f32 %v628, %v736
        %s741 = sld [smem:[#allocation2 + $0x313]]
        %v742 = vstv %s741
        %v743 = vmul.f32 %v742, %v253
        %v744 = vmul.f32 %v742, %v254
        %747 = vrot.lane.b32.xlu0 %v743, 127
        %v748 = vpop.permute.xlu0 %747
        %749 = vrot.lane.b32.xlu0 %v744, 127
        %v750 = vpop.permute.xlu0 %749
        %v753 = vadd.f32 %v641, %v748
        %v754 = vadd.f32 %v642, %v750
        %s755 = sld [smem:[#allocation2 + $0x393]]
        %v756 = vstv %s755
        %v757 = vmul.f32 %v756, %v253
        %v758 = vmul.f32 %v756, %v254
        %761 = vrot.lane.b32.xlu0 %v757, 127
        %v762 = vpop.permute.xlu0 %761
        %763 = vrot.lane.b32.xlu0 %v758, 127
        %v764 = vpop.permute.xlu0 %763
        %v767 = vadd.f32 %v655, %v762
        %v768 = vadd.f32 %v656, %v764
        %s769 = sld [smem:[#allocation2 + $0x1c]]
        %v770 = vstv %s769
        %v771 = vmul.f32 %v770, %v255
        %v772 = vmul.f32 %v770, %v256
        %775 = vrot.lane.b32.xlu0 %v771, 127
        %v776 = vpop.permute.xlu0 %775
        %777 = vrot.lane.b32.xlu0 %v772, 127
        %v778 = vpop.permute.xlu0 %777
        %v781 = vadd.f32 %v669, %v776
        %v782 = vadd.f32 %v670, %v778
        %s783 = sld [smem:[#allocation2 + $0x9c]]
        %v784 = vstv %s783
        %v785 = vmul.f32 %v784, %v255
        %v786 = vmul.f32 %v784, %v256
        %789 = vrot.lane.b32.xlu0 %v785, 127
        %v790 = vpop.permute.xlu0 %789
        %791 = vrot.lane.b32.xlu0 %v786, 127
        %v792 = vpop.permute.xlu0 %791
        %v795 = vadd.f32 %v683, %v790
        %v796 = vadd.f32 %v684, %v792
        %s797 = sld [smem:[#allocation2 + $0x11c]]
        %v798 = vstv %s797
        %v799 = vmul.f32 %v798, %v255
        %v800 = vmul.f32 %v798, %v256
        %803 = vrot.lane.b32.xlu0 %v799, 127
        %v804 = vpop.permute.xlu0 %803
        %805 = vrot.lane.b32.xlu0 %v800, 127
        %v806 = vpop.permute.xlu0 %805
        %v809 = vadd.f32 %v697, %v804
        %v810 = vadd.f32 %v698, %v806
        %s811 = sld [smem:[#allocation2 + $0x19c]]
        %v812 = vstv %s811
        %v813 = vmul.f32 %v812, %v255
        %v814 = vmul.f32 %v812, %v256
        %817 = vrot.lane.b32.xlu0 %v813, 127
        %v818 = vpop.permute.xlu0 %817
        %819 = vrot.lane.b32.xlu0 %v814, 127
        %v820 = vpop.permute.xlu0 %819
        %v823 = vadd.f32 %v711, %v818
        %v824 = vadd.f32 %v712, %v820
        %s825 = sld [smem:[#allocation2 + $0x21c]]
        %v826 = vstv %s825
        %v827 = vmul.f32 %v826, %v255
        %v828 = vmul.f32 %v826, %v256
        %831 = vrot.lane.b32.xlu0 %v827, 127
        %v832 = vpop.permute.xlu0 %831
        %833 = vrot.lane.b32.xlu0 %v828, 127
        %v834 = vpop.permute.xlu0 %833
        %v837 = vadd.f32 %v725, %v832
        %v838 = vadd.f32 %v726, %v834
        %s839 = sld [smem:[#allocation2 + $0x29c]]
        %v840 = vstv %s839
        %v841 = vmul.f32 %v840, %v255
        %v842 = vmul.f32 %v840, %v256
        %845 = vrot.lane.b32.xlu0 %v841, 127
        %v846 = vpop.permute.xlu0 %845
        %847 = vrot.lane.b32.xlu0 %v842, 127
        %v848 = vpop.permute.xlu0 %847
        %v851 = vadd.f32 %v739, %v846
        %v852 = vadd.f32 %v740, %v848
        %s853 = sld [smem:[#allocation2 + $0x31c]]
        %v854 = vstv %s853
        %v855 = vmul.f32 %v854, %v255
        %v856 = vmul.f32 %v854, %v256
        %859 = vrot.lane.b32.xlu0 %v855, 127
        %v860 = vpop.permute.xlu0 %859
        %861 = vrot.lane.b32.xlu0 %v856, 127
        %v862 = vpop.permute.xlu0 %861
        %v865 = vadd.f32 %v753, %v860
        %v866 = vadd.f32 %v754, %v862
        %s867 = sld [smem:[#allocation2 + $0x39c]]
        %v868 = vstv %s867
        %v869 = vmul.f32 %v868, %v255
        %v870 = vmul.f32 %v868, %v256
        %873 = vrot.lane.b32.xlu0 %v869, 127
        %v874 = vpop.permute.xlu0 %873
        %875 = vrot.lane.b32.xlu0 %v870, 127
        %v876 = vpop.permute.xlu0 %875
        %v879 = vadd.f32 %v767, %v874
        %v880 = vadd.f32 %v768, %v876
        %s881 = sld [smem:[#allocation2 + $0x2]]
        %v882 = vstv %s881
        %v883 = vmul.f32 %v882, %v249
        %v884 = vmul.f32 %v882, %v250
        %887 = vrot.lane.b32.xlu0 %v883, 126
        %v888 = vpop.permute.xlu0 %887
        %889 = vrot.lane.b32.xlu0 %v884, 126
        %v890 = vpop.permute.xlu0 %889
        %v893 = vadd.f32 %v781, %v888
        %v894 = vadd.f32 %v782, %v890
        %s895 = sld [smem:[#allocation2 + $0x82]]
        %v896 = vstv %s895
        %v897 = vmul.f32 %v896, %v249
        %v898 = vmul.f32 %v896, %v250
        %901 = vrot.lane.b32.xlu0 %v897, 126
        %v902 = vpop.permute.xlu0 %901
        %903 = vrot.lane.b32.xlu0 %v898, 126
        %v904 = vpop.permute.xlu0 %903
        %v907 = vadd.f32 %v795, %v902
        %v908 = vadd.f32 %v796, %v904
        %s909 = sld [smem:[#allocation2 + $0x102]]
        %v910 = vstv %s909
        %v911 = vmul.f32 %v910, %v249
        %v912 = vmul.f32 %v910, %v250
        %915 = vrot.lane.b32.xlu0 %v911, 126
        %v916 = vpop.permute.xlu0 %915
        %917 = vrot.lane.b32.xlu0 %v912, 126
        %v918 = vpop.permute.xlu0 %917
        %v921 = vadd.f32 %v809, %v916
        %v922 = vadd.f32 %v810, %v918
        %s923 = sld [smem:[#allocation2 + $0x182]]
        %v924 = vstv %s923
        %v925 = vmul.f32 %v924, %v249
        %v926 = vmul.f32 %v924, %v250
        %929 = vrot.lane.b32.xlu0 %v925, 126
        %v930 = vpop.permute.xlu0 %929
        %931 = vrot.lane.b32.xlu0 %v926, 126
        %v932 = vpop.permute.xlu0 %931
        %v935 = vadd.f32 %v823, %v930
        %v936 = vadd.f32 %v824, %v932
        %s937 = sld [smem:[#allocation2 + $0x202]]
        %v938 = vstv %s937
        %v939 = vmul.f32 %v938, %v249
        %v940 = vmul.f32 %v938, %v250
        %943 = vrot.lane.b32.xlu0 %v939, 126
        %v944 = vpop.permute.xlu0 %943
        %945 = vrot.lane.b32.xlu0 %v940, 126
        %v946 = vpop.permute.xlu0 %945
        %v949 = vadd.f32 %v837, %v944
        %v950 = vadd.f32 %v838, %v946
        %s951 = sld [smem:[#allocation2 + $0x282]]
        %v952 = vstv %s951
        %v953 = vmul.f32 %v952, %v249
        %v954 = vmul.f32 %v952, %v250
        %957 = vrot.lane.b32.xlu0 %v953, 126
        %v958 = vpop.permute.xlu0 %957
        %959 = vrot.lane.b32.xlu0 %v954, 126
        %v960 = vpop.permute.xlu0 %959
        %v963 = vadd.f32 %v851, %v958
        %v964 = vadd.f32 %v852, %v960
        %s965 = sld [smem:[#allocation2 + $0x302]]
        %v966 = vstv %s965
        %v967 = vmul.f32 %v966, %v249
        %v968 = vmul.f32 %v966, %v250
        %971 = vrot.lane.b32.xlu0 %v967, 126
        %v972 = vpop.permute.xlu0 %971
        %973 = vrot.lane.b32.xlu0 %v968, 126
        %v974 = vpop.permute.xlu0 %973
        %v977 = vadd.f32 %v865, %v972
        %v978 = vadd.f32 %v866, %v974
        %s979 = sld [smem:[#allocation2 + $0x382]]
        %v980 = vstv %s979
        %v981 = vmul.f32 %v980, %v249
        %v982 = vmul.f32 %v980, %v250
        %985 = vrot.lane.b32.xlu0 %v981, 126
        %v986 = vpop.permute.xlu0 %985
        %987 = vrot.lane.b32.xlu0 %v982, 126
        %v988 = vpop.permute.xlu0 %987
        %v991 = vadd.f32 %v879, %v986
        %v992 = vadd.f32 %v880, %v988
        %s993 = sld [smem:[#allocation2 + $0xb]]
        %v994 = vstv %s993
        %v995 = vmul.f32 %v994, %v251
        %v996 = vmul.f32 %v994, %v252
        %999 = vrot.lane.b32.xlu0 %v995, 126
        %v1000 = vpop.permute.xlu0 %999
        %1001 = vrot.lane.b32.xlu0 %v996, 126
        %v1002 = vpop.permute.xlu0 %1001
        %v1005 = vadd.f32 %v893, %v1000
        %v1006 = vadd.f32 %v894, %v1002
        %s1007 = sld [smem:[#allocation2 + $0x8b]]
        %v1008 = vstv %s1007
        %v1009 = vmul.f32 %v1008, %v251
        %v1010 = vmul.f32 %v1008, %v252
        %1013 = vrot.lane.b32.xlu0 %v1009, 126
        %v1014 = vpop.permute.xlu0 %1013
        %1015 = vrot.lane.b32.xlu0 %v1010, 126
        %v1016 = vpop.permute.xlu0 %1015
        %v1019 = vadd.f32 %v907, %v1014
        %v1020 = vadd.f32 %v908, %v1016
        %s1021 = sld [smem:[#allocation2 + $0x10b]]
        %v1022 = vstv %s1021
        %v1023 = vmul.f32 %v1022, %v251
        %v1024 = vmul.f32 %v1022, %v252
        %1027 = vrot.lane.b32.xlu0 %v1023, 126
        %v1028 = vpop.permute.xlu0 %1027
        %1029 = vrot.lane.b32.xlu0 %v1024, 126
        %v1030 = vpop.permute.xlu0 %1029
        %v1033 = vadd.f32 %v921, %v1028
        %v1034 = vadd.f32 %v922, %v1030
        %s1035 = sld [smem:[#allocation2 + $0x18b]]
        %v1036 = vstv %s1035
        %v1037 = vmul.f32 %v1036, %v251
        %v1038 = vmul.f32 %v1036, %v252
        %1041 = vrot.lane.b32.xlu0 %v1037, 126
        %v1042 = vpop.permute.xlu0 %1041
        %1043 = vrot.lane.b32.xlu0 %v1038, 126
        %v1044 = vpop.permute.xlu0 %1043
        %v1047 = vadd.f32 %v935, %v1042
        %v1048 = vadd.f32 %v936, %v1044
        %s1049 = sld [smem:[#allocation2 + $0x20b]]
        %v1050 = vstv %s1049
        %v1051 = vmul.f32 %v1050, %v251
        %v1052 = vmul.f32 %v1050, %v252
        %1055 = vrot.lane.b32.xlu0 %v1051, 126
        %v1056 = vpop.permute.xlu0 %1055
        %1057 = vrot.lane.b32.xlu0 %v1052, 126
        %v1058 = vpop.permute.xlu0 %1057
        %v1061 = vadd.f32 %v949, %v1056
        %v1062 = vadd.f32 %v950, %v1058
        %s1063 = sld [smem:[#allocation2 + $0x28b]]
        %v1064 = vstv %s1063
        %v1065 = vmul.f32 %v1064, %v251
        %v1066 = vmul.f32 %v1064, %v252
        %1069 = vrot.lane.b32.xlu0 %v1065, 126
        %v1070 = vpop.permute.xlu0 %1069
        %1071 = vrot.lane.b32.xlu0 %v1066, 126
        %v1072 = vpop.permute.xlu0 %1071
        %v1075 = vadd.f32 %v963, %v1070
        %v1076 = vadd.f32 %v964, %v1072
        %s1077 = sld [smem:[#allocation2 + $0x30b]]
        %v1078 = vstv %s1077
        %v1079 = vmul.f32 %v1078, %v251
        %v1080 = vmul.f32 %v1078, %v252
        %1083 = vrot.lane.b32.xlu0 %v1079, 126
        %v1084 = vpop.permute.xlu0 %1083
        %1085 = vrot.lane.b32.xlu0 %v1080, 126
        %v1086 = vpop.permute.xlu0 %1085
        %v1089 = vadd.f32 %v977, %v1084
        %v1090 = vadd.f32 %v978, %v1086
        %s1091 = sld [smem:[#allocation2 + $0x38b]]
        %v1092 = vstv %s1091
        %v1093 = vmul.f32 %v1092, %v251
        %v1094 = vmul.f32 %v1092, %v252
        %1097 = vrot.lane.b32.xlu0 %v1093, 126
        %v1098 = vpop.permute.xlu0 %1097
        %1099 = vrot.lane.b32.xlu0 %v1094, 126
        %v1100 = vpop.permute.xlu0 %1099
        %v1103 = vadd.f32 %v991, %v1098
        %v1104 = vadd.f32 %v992, %v1100
        %s1105 = sld [smem:[#allocation2 + $0x14]]
        %v1106 = vstv %s1105
        %v1107 = vmul.f32 %v1106, %v253
        %v1108 = vmul.f32 %v1106, %v254
        %1111 = vrot.lane.b32.xlu0 %v1107, 126
        %v1112 = vpop.permute.xlu0 %1111
        %1113 = vrot.lane.b32.xlu0 %v1108, 126
        %v1114 = vpop.permute.xlu0 %1113
        %v1117 = vadd.f32 %v1005, %v1112
        %v1118 = vadd.f32 %v1006, %v1114
        %s1119 = sld [smem:[#allocation2 + $0x94]]
        %v1120 = vstv %s1119
        %v1121 = vmul.f32 %v1120, %v253
        %v1122 = vmul.f32 %v1120, %v254
        %1125 = vrot.lane.b32.xlu0 %v1121, 126
        %v1126 = vpop.permute.xlu0 %1125
        %1127 = vrot.lane.b32.xlu0 %v1122, 126
        %v1128 = vpop.permute.xlu0 %1127
        %v1131 = vadd.f32 %v1019, %v1126
        %v1132 = vadd.f32 %v1020, %v1128
        %s1133 = sld [smem:[#allocation2 + $0x114]]
        %v1134 = vstv %s1133
        %v1135 = vmul.f32 %v1134, %v253
        %v1136 = vmul.f32 %v1134, %v254
        %1139 = vrot.lane.b32.xlu0 %v1135, 126
        %v1140 = vpop.permute.xlu0 %1139
        %1141 = vrot.lane.b32.xlu0 %v1136, 126
        %v1142 = vpop.permute.xlu0 %1141
        %v1145 = vadd.f32 %v1033, %v1140
        %v1146 = vadd.f32 %v1034, %v1142
        %s1147 = sld [smem:[#allocation2 + $0x194]]
        %v1148 = vstv %s1147
        %v1149 = vmul.f32 %v1148, %v253
        %v1150 = vmul.f32 %v1148, %v254
        %1153 = vrot.lane.b32.xlu0 %v1149, 126
        %v1154 = vpop.permute.xlu0 %1153
        %1155 = vrot.lane.b32.xlu0 %v1150, 126
        %v1156 = vpop.permute.xlu0 %1155
        %v1159 = vadd.f32 %v1047, %v1154
        %v1160 = vadd.f32 %v1048, %v1156
        %s1161 = sld [smem:[#allocation2 + $0x214]]
        %v1162 = vstv %s1161
        %v1163 = vmul.f32 %v1162, %v253
        %v1164 = vmul.f32 %v1162, %v254
        %1167 = vrot.lane.b32.xlu0 %v1163, 126
        %v1168 = vpop.permute.xlu0 %1167
        %1169 = vrot.lane.b32.xlu0 %v1164, 126
        %v1170 = vpop.permute.xlu0 %1169
        %v1173 = vadd.f32 %v1061, %v1168
        %v1174 = vadd.f32 %v1062, %v1170
        %s1175 = sld [smem:[#allocation2 + $0x294]]
        %v1176 = vstv %s1175
        %v1177 = vmul.f32 %v1176, %v253
        %v1178 = vmul.f32 %v1176, %v254
        %1181 = vrot.lane.b32.xlu0 %v1177, 126
        %v1182 = vpop.permute.xlu0 %1181
        %1183 = vrot.lane.b32.xlu0 %v1178, 126
        %v1184 = vpop.permute.xlu0 %1183
        %v1187 = vadd.f32 %v1075, %v1182
        %v1188 = vadd.f32 %v1076, %v1184
        %s1189 = sld [smem:[#allocation2 + $0x314]]
        %v1190 = vstv %s1189
        %v1191 = vmul.f32 %v1190, %v253
        %v1192 = vmul.f32 %v1190, %v254
        %1195 = vrot.lane.b32.xlu0 %v1191, 126
        %v1196 = vpop.permute.xlu0 %1195
        %1197 = vrot.lane.b32.xlu0 %v1192, 126
        %v1198 = vpop.permute.xlu0 %1197
        %v1201 = vadd.f32 %v1089, %v1196
        %v1202 = vadd.f32 %v1090, %v1198
        %s1203 = sld [smem:[#allocation2 + $0x394]]
        %v1204 = vstv %s1203
        %v1205 = vmul.f32 %v1204, %v253
        %v1206 = vmul.f32 %v1204, %v254
        %1209 = vrot.lane.b32.xlu0 %v1205, 126
        %v1210 = vpop.permute.xlu0 %1209
        %1211 = vrot.lane.b32.xlu0 %v1206, 126
        %v1212 = vpop.permute.xlu0 %1211
        %v1215 = vadd.f32 %v1103, %v1210
        %v1216 = vadd.f32 %v1104, %v1212
        %s1217 = sld [smem:[#allocation2 + $0x1d]]
        %v1218 = vstv %s1217
        %v1219 = vmul.f32 %v1218, %v255
        %v1220 = vmul.f32 %v1218, %v256
        %1223 = vrot.lane.b32.xlu0 %v1219, 126
        %v1224 = vpop.permute.xlu0 %1223
        %1225 = vrot.lane.b32.xlu0 %v1220, 126
        %v1226 = vpop.permute.xlu0 %1225
        %v1229 = vadd.f32 %v1117, %v1224
        %v1230 = vadd.f32 %v1118, %v1226
        %s1231 = sld [smem:[#allocation2 + $0x9d]]
        %v1232 = vstv %s1231
        %v1233 = vmul.f32 %v1232, %v255
        %v1234 = vmul.f32 %v1232, %v256
        %1237 = vrot.lane.b32.xlu0 %v1233, 126
        %v1238 = vpop.permute.xlu0 %1237
        %1239 = vrot.lane.b32.xlu0 %v1234, 126
        %v1240 = vpop.permute.xlu0 %1239
        %v1243 = vadd.f32 %v1131, %v1238
        %v1244 = vadd.f32 %v1132, %v1240
        %s1245 = sld [smem:[#allocation2 + $0x11d]]
        %v1246 = vstv %s1245
        %v1247 = vmul.f32 %v1246, %v255
        %v1248 = vmul.f32 %v1246, %v256
        %1251 = vrot.lane.b32.xlu0 %v1247, 126
        %v1252 = vpop.permute.xlu0 %1251
        %1253 = vrot.lane.b32.xlu0 %v1248, 126
        %v1254 = vpop.permute.xlu0 %1253
        %v1257 = vadd.f32 %v1145, %v1252
        %v1258 = vadd.f32 %v1146, %v1254
        %s1259 = sld [smem:[#allocation2 + $0x19d]]
        %v1260 = vstv %s1259
        %v1261 = vmul.f32 %v1260, %v255
        %v1262 = vmul.f32 %v1260, %v256
        %1265 = vrot.lane.b32.xlu0 %v1261, 126
        %v1266 = vpop.permute.xlu0 %1265
        %1267 = vrot.lane.b32.xlu0 %v1262, 126
        %v1268 = vpop.permute.xlu0 %1267
        %v1271 = vadd.f32 %v1159, %v1266
        %v1272 = vadd.f32 %v1160, %v1268
        %s1273 = sld [smem:[#allocation2 + $0x21d]]
        %v1274 = vstv %s1273
        %v1275 = vmul.f32 %v1274, %v255
        %v1276 = vmul.f32 %v1274, %v256
        %1279 = vrot.lane.b32.xlu0 %v1275, 126
        %v1280 = vpop.permute.xlu0 %1279
        %1281 = vrot.lane.b32.xlu0 %v1276, 126
        %v1282 = vpop.permute.xlu0 %1281
        %v1285 = vadd.f32 %v1173, %v1280
        %v1286 = vadd.f32 %v1174, %v1282
        %s1287 = sld [smem:[#allocation2 + $0x29d]]
        %v1288 = vstv %s1287
        %v1289 = vmul.f32 %v1288, %v255
        %v1290 = vmul.f32 %v1288, %v256
        %1293 = vrot.lane.b32.xlu0 %v1289, 126
        %v1294 = vpop.permute.xlu0 %1293
        %1295 = vrot.lane.b32.xlu0 %v1290, 126
        %v1296 = vpop.permute.xlu0 %1295
        %v1299 = vadd.f32 %v1187, %v1294
        %v1300 = vadd.f32 %v1188, %v1296
        %s1301 = sld [smem:[#allocation2 + $0x31d]]
        %v1302 = vstv %s1301
        %v1303 = vmul.f32 %v1302, %v255
        %v1304 = vmul.f32 %v1302, %v256
        %1307 = vrot.lane.b32.xlu0 %v1303, 126
        %v1308 = vpop.permute.xlu0 %1307
        %1309 = vrot.lane.b32.xlu0 %v1304, 126
        %v1310 = vpop.permute.xlu0 %1309
        %v1313 = vadd.f32 %v1201, %v1308
        %v1314 = vadd.f32 %v1202, %v1310
        %s1315 = sld [smem:[#allocation2 + $0x39d]]
        %v1316 = vstv %s1315
        %v1317 = vmul.f32 %v1316, %v255
        %v1318 = vmul.f32 %v1316, %v256
        %1321 = vrot.lane.b32.xlu0 %v1317, 126
        %v1322 = vpop.permute.xlu0 %1321
        %1323 = vrot.lane.b32.xlu0 %v1318, 126
        %v1324 = vpop.permute.xlu0 %1323
        %v1327 = vadd.f32 %v1215, %v1322
        %v1328 = vadd.f32 %v1216, %v1324
        %v1329 = vld [vmem:[%s248 + $0x1] sm:$0xff]
        %v1330 = vld [vmem:[%s248 + $0x9] sm:$0x3f]
        %v1331 = vld [vmem:[%s248 + $0x11] sm:$0xff]
        %v1332 = vld [vmem:[%s248 + $0x19] sm:$0x3f]
        %v1333 = vld [vmem:[%s248 + $0x21] sm:$0xff]
        %v1334 = vld [vmem:[%s248 + $0x29] sm:$0x3f]
        %v1335 = vld [vmem:[%s248 + $0x31] sm:$0xff]
        %v1336 = vld [vmem:[%s248 + $0x39] sm:$0x3f]
        %s1337 = sld [smem:[#allocation2 + $0x3]]
        %v1338 = vstv %s1337
        %v1339 = vmul.f32 %v1338, %v1329
        %v1340 = vmul.f32 %v1338, %v1330
        %v1341 = vadd.f32 %v1229, %v1339
        %v1342 = vadd.f32 %v1230, %v1340
        %s1343 = sld [smem:[#allocation2 + $0x83]]
        %v1344 = vstv %s1343
        %v1345 = vmul.f32 %v1344, %v1329
        %v1346 = vmul.f32 %v1344, %v1330
        %v1347 = vadd.f32 %v1243, %v1345
        %v1348 = vadd.f32 %v1244, %v1346
        %s1349 = sld [smem:[#allocation2 + $0x103]]
        %v1350 = vstv %s1349
        %v1351 = vmul.f32 %v1350, %v1329
        %v1352 = vmul.f32 %v1350, %v1330
        %v1353 = vadd.f32 %v1257, %v1351
        %v1354 = vadd.f32 %v1258, %v1352
        %s1355 = sld [smem:[#allocation2 + $0x183]]
        %v1356 = vstv %s1355
        %v1357 = vmul.f32 %v1356, %v1329
        %v1358 = vmul.f32 %v1356, %v1330
        %v1359 = vadd.f32 %v1271, %v1357
        %v1360 = vadd.f32 %v1272, %v1358
        %s1361 = sld [smem:[#allocation2 + $0x203]]
        %v1362 = vstv %s1361
        %v1363 = vmul.f32 %v1362, %v1329
        %v1364 = vmul.f32 %v1362, %v1330
        %v1365 = vadd.f32 %v1285, %v1363
        %v1366 = vadd.f32 %v1286, %v1364
        %s1367 = sld [smem:[#allocation2 + $0x283]]
        %v1368 = vstv %s1367
        %v1369 = vmul.f32 %v1368, %v1329
        %v1370 = vmul.f32 %v1368, %v1330
        %v1371 = vadd.f32 %v1299, %v1369
        %v1372 = vadd.f32 %v1300, %v1370
        %s1373 = sld [smem:[#allocation2 + $0x303]]
        %v1374 = vstv %s1373
        %v1375 = vmul.f32 %v1374, %v1329
        %v1376 = vmul.f32 %v1374, %v1330
        %v1377 = vadd.f32 %v1313, %v1375
        %v1378 = vadd.f32 %v1314, %v1376
        %s1379 = sld [smem:[#allocation2 + $0x383]]
        %v1380 = vstv %s1379
        %v1381 = vmul.f32 %v1380, %v1329
        %v1382 = vmul.f32 %v1380, %v1330
        %v1383 = vadd.f32 %v1327, %v1381
        %v1384 = vadd.f32 %v1328, %v1382
        %s1385 = sld [smem:[#allocation2 + $0xc]]
        %v1386 = vstv %s1385
        %v1387 = vmul.f32 %v1386, %v1331
        %v1388 = vmul.f32 %v1386, %v1332
        %v1389 = vadd.f32 %v1341, %v1387
        %v1390 = vadd.f32 %v1342, %v1388
        %s1391 = sld [smem:[#allocation2 + $0x8c]]
        %v1392 = vstv %s1391
        %v1393 = vmul.f32 %v1392, %v1331
        %v1394 = vmul.f32 %v1392, %v1332
        %v1395 = vadd.f32 %v1347, %v1393
        %v1396 = vadd.f32 %v1348, %v1394
        %s1397 = sld [smem:[#allocation2 + $0x10c]]
        %v1398 = vstv %s1397
        %v1399 = vmul.f32 %v1398, %v1331
        %v1400 = vmul.f32 %v1398, %v1332
        %v1401 = vadd.f32 %v1353, %v1399
        %v1402 = vadd.f32 %v1354, %v1400
        %s1403 = sld [smem:[#allocation2 + $0x18c]]
        %v1404 = vstv %s1403
        %v1405 = vmul.f32 %v1404, %v1331
        %v1406 = vmul.f32 %v1404, %v1332
        %v1407 = vadd.f32 %v1359, %v1405
        %v1408 = vadd.f32 %v1360, %v1406
        %s1409 = sld [smem:[#allocation2 + $0x20c]]
        %v1410 = vstv %s1409
        %v1411 = vmul.f32 %v1410, %v1331
        %v1412 = vmul.f32 %v1410, %v1332
        %v1413 = vadd.f32 %v1365, %v1411
        %v1414 = vadd.f32 %v1366, %v1412
        %s1415 = sld [smem:[#allocation2 + $0x28c]]
        %v1416 = vstv %s1415
        %v1417 = vmul.f32 %v1416, %v1331
        %v1418 = vmul.f32 %v1416, %v1332
        %v1419 = vadd.f32 %v1371, %v1417
        %v1420 = vadd.f32 %v1372, %v1418
        %s1421 = sld [smem:[#allocation2 + $0x30c]]
        %v1422 = vstv %s1421
        %v1423 = vmul.f32 %v1422, %v1331
        %v1424 = vmul.f32 %v1422, %v1332
        %v1425 = vadd.f32 %v1377, %v1423
        %v1426 = vadd.f32 %v1378, %v1424
        %s1427 = sld [smem:[#allocation2 + $0x38c]]
        %v1428 = vstv %s1427
        %v1429 = vmul.f32 %v1428, %v1331
        %v1430 = vmul.f32 %v1428, %v1332
        %v1431 = vadd.f32 %v1383, %v1429
        %v1432 = vadd.f32 %v1384, %v1430
        %s1433 = sld [smem:[#allocation2 + $0x15]]
        %v1434 = vstv %s1433
        %v1435 = vmul.f32 %v1434, %v1333
        %v1436 = vmul.f32 %v1434, %v1334
        %v1437 = vadd.f32 %v1389, %v1435
        %v1438 = vadd.f32 %v1390, %v1436
        %s1439 = sld [smem:[#allocation2 + $0x95]]
        %v1440 = vstv %s1439
        %v1441 = vmul.f32 %v1440, %v1333
        %v1442 = vmul.f32 %v1440, %v1334
        %v1443 = vadd.f32 %v1395, %v1441
        %v1444 = vadd.f32 %v1396, %v1442
        %s1445 = sld [smem:[#allocation2 + $0x115]]
        %v1446 = vstv %s1445
        %v1447 = vmul.f32 %v1446, %v1333
        %v1448 = vmul.f32 %v1446, %v1334
        %v1449 = vadd.f32 %v1401, %v1447
        %v1450 = vadd.f32 %v1402, %v1448
        %s1451 = sld [smem:[#allocation2 + $0x195]]
        %v1452 = vstv %s1451
        %v1453 = vmul.f32 %v1452, %v1333
        %v1454 = vmul.f32 %v1452, %v1334
        %v1455 = vadd.f32 %v1407, %v1453
        %v1456 = vadd.f32 %v1408, %v1454
        %s1457 = sld [smem:[#allocation2 + $0x215]]
        %v1458 = vstv %s1457
        %v1459 = vmul.f32 %v1458, %v1333
        %v1460 = vmul.f32 %v1458, %v1334
        %v1461 = vadd.f32 %v1413, %v1459
        %v1462 = vadd.f32 %v1414, %v1460
        %s1463 = sld [smem:[#allocation2 + $0x295]]
        %v1464 = vstv %s1463
        %v1465 = vmul.f32 %v1464, %v1333
        %v1466 = vmul.f32 %v1464, %v1334
        %v1467 = vadd.f32 %v1419, %v1465
        %v1468 = vadd.f32 %v1420, %v1466
        %s1469 = sld [smem:[#allocation2 + $0x315]]
        %v1470 = vstv %s1469
        %v1471 = vmul.f32 %v1470, %v1333
        %v1472 = vmul.f32 %v1470, %v1334
        %v1473 = vadd.f32 %v1425, %v1471
        %v1474 = vadd.f32 %v1426, %v1472
        %s1475 = sld [smem:[#allocation2 + $0x395]]
        %v1476 = vstv %s1475
        %v1477 = vmul.f32 %v1476, %v1333
        %v1478 = vmul.f32 %v1476, %v1334
        %v1479 = vadd.f32 %v1431, %v1477
        %v1480 = vadd.f32 %v1432, %v1478
        %s1481 = sld [smem:[#allocation2 + $0x1e]]
        %v1482 = vstv %s1481
        %v1483 = vmul.f32 %v1482, %v1335
        %v1484 = vmul.f32 %v1482, %v1336
        %v1485 = vadd.f32 %v1437, %v1483
        %v1486 = vadd.f32 %v1438, %v1484
        %s1487 = sld [smem:[#allocation2 + $0x9e]]
        %v1488 = vstv %s1487
        %v1489 = vmul.f32 %v1488, %v1335
        %v1490 = vmul.f32 %v1488, %v1336
        %v1491 = vadd.f32 %v1443, %v1489
        %v1492 = vadd.f32 %v1444, %v1490
        %s1493 = sld [smem:[#allocation2 + $0x11e]]
        %v1494 = vstv %s1493
        %v1495 = vmul.f32 %v1494, %v1335
        %v1496 = vmul.f32 %v1494, %v1336
        %v1497 = vadd.f32 %v1449, %v1495
        %v1498 = vadd.f32 %v1450, %v1496
        %s1499 = sld [smem:[#allocation2 + $0x19e]]
        %v1500 = vstv %s1499
        %v1501 = vmul.f32 %v1500, %v1335
        %v1502 = vmul.f32 %v1500, %v1336
        %v1503 = vadd.f32 %v1455, %v1501
        %v1504 = vadd.f32 %v1456, %v1502
        %s1505 = sld [smem:[#allocation2 + $0x21e]]
        %v1506 = vstv %s1505
        %v1507 = vmul.f32 %v1506, %v1335
        %v1508 = vmul.f32 %v1506, %v1336
        %v1509 = vadd.f32 %v1461, %v1507
        %v1510 = vadd.f32 %v1462, %v1508
        %s1511 = sld [smem:[#allocation2 + $0x29e]]
        %v1512 = vstv %s1511
        %v1513 = vmul.f32 %v1512, %v1335
        %v1514 = vmul.f32 %v1512, %v1336
        %v1515 = vadd.f32 %v1467, %v1513
        %v1516 = vadd.f32 %v1468, %v1514
        %s1517 = sld [smem:[#allocation2 + $0x31e]]
        %v1518 = vstv %s1517
        %v1519 = vmul.f32 %v1518, %v1335
        %v1520 = vmul.f32 %v1518, %v1336
        %v1521 = vadd.f32 %v1473, %v1519
        %v1522 = vadd.f32 %v1474, %v1520
        %s1523 = sld [smem:[#allocation2 + $0x39e]]
        %v1524 = vstv %s1523
        %v1525 = vmul.f32 %v1524, %v1335
        %v1526 = vmul.f32 %v1524, %v1336
        %v1527 = vadd.f32 %v1479, %v1525
        %v1528 = vadd.f32 %v1480, %v1526
        %s1529 = sld [smem:[#allocation2 + $0x4]]
        %v1530 = vstv %s1529
        %v1531 = vmul.f32 %v1530, %v1329
        %v1532 = vmul.f32 %v1530, %v1330
        %1535 = vrot.lane.b32.xlu0 %v1531, 127
        %v1536 = vpop.permute.xlu0 %1535
        %1537 = vrot.lane.b32.xlu0 %v1532, 127
        %v1538 = vpop.permute.xlu0 %1537
        %v1541 = vadd.f32 %v1485, %v1536
        %v1542 = vadd.f32 %v1486, %v1538
        %s1543 = sld [smem:[#allocation2 + $0x84]]
        %v1544 = vstv %s1543
        %v1545 = vmul.f32 %v1544, %v1329
        %v1546 = vmul.f32 %v1544, %v1330
        %1549 = vrot.lane.b32.xlu0 %v1545, 127
        %v1550 = vpop.permute.xlu0 %1549
        %1551 = vrot.lane.b32.xlu0 %v1546, 127
        %v1552 = vpop.permute.xlu0 %1551
        %v1555 = vadd.f32 %v1491, %v1550
        %v1556 = vadd.f32 %v1492, %v1552
        %s1557 = sld [smem:[#allocation2 + $0x104]]
        %v1558 = vstv %s1557
        %v1559 = vmul.f32 %v1558, %v1329
        %v1560 = vmul.f32 %v1558, %v1330
        %1563 = vrot.lane.b32.xlu0 %v1559, 127
        %v1564 = vpop.permute.xlu0 %1563
        %1565 = vrot.lane.b32.xlu0 %v1560, 127
        %v1566 = vpop.permute.xlu0 %1565
        %v1569 = vadd.f32 %v1497, %v1564
        %v1570 = vadd.f32 %v1498, %v1566
        %s1571 = sld [smem:[#allocation2 + $0x184]]
        %v1572 = vstv %s1571
        %v1573 = vmul.f32 %v1572, %v1329
        %v1574 = vmul.f32 %v1572, %v1330
        %1577 = vrot.lane.b32.xlu0 %v1573, 127
        %v1578 = vpop.permute.xlu0 %1577
        %1579 = vrot.lane.b32.xlu0 %v1574, 127
        %v1580 = vpop.permute.xlu0 %1579
        %v1583 = vadd.f32 %v1503, %v1578
        %v1584 = vadd.f32 %v1504, %v1580
        %s1585 = sld [smem:[#allocation2 + $0x204]]
        %v1586 = vstv %s1585
        %v1587 = vmul.f32 %v1586, %v1329
        %v1588 = vmul.f32 %v1586, %v1330
        %1591 = vrot.lane.b32.xlu0 %v1587, 127
        %v1592 = vpop.permute.xlu0 %1591
        %1593 = vrot.lane.b32.xlu0 %v1588, 127
        %v1594 = vpop.permute.xlu0 %1593
        %v1597 = vadd.f32 %v1509, %v1592
        %v1598 = vadd.f32 %v1510, %v1594
        %s1599 = sld [smem:[#allocation2 + $0x284]]
        %v1600 = vstv %s1599
        %v1601 = vmul.f32 %v1600, %v1329
        %v1602 = vmul.f32 %v1600, %v1330
        %1605 = vrot.lane.b32.xlu0 %v1601, 127
        %v1606 = vpop.permute.xlu0 %1605
        %1607 = vrot.lane.b32.xlu0 %v1602, 127
        %v1608 = vpop.permute.xlu0 %1607
        %v1611 = vadd.f32 %v1515, %v1606
        %v1612 = vadd.f32 %v1516, %v1608
        %s1613 = sld [smem:[#allocation2 + $0x304]]
        %v1614 = vstv %s1613
        %v1615 = vmul.f32 %v1614, %v1329
        %v1616 = vmul.f32 %v1614, %v1330
        %1619 = vrot.lane.b32.xlu0 %v1615, 127
        %v1620 = vpop.permute.xlu0 %1619
        %1621 = vrot.lane.b32.xlu0 %v1616, 127
        %v1622 = vpop.permute.xlu0 %1621
        %v1625 = vadd.f32 %v1521, %v1620
        %v1626 = vadd.f32 %v1522, %v1622
        %s1627 = sld [smem:[#allocation2 + $0x384]]
        %v1628 = vstv %s1627
        %v1629 = vmul.f32 %v1628, %v1329
        %v1630 = vmul.f32 %v1628, %v1330
        %1633 = vrot.lane.b32.xlu0 %v1629, 127
        %v1634 = vpop.permute.xlu0 %1633
        %1635 = vrot.lane.b32.xlu0 %v1630, 127
        %v1636 = vpop.permute.xlu0 %1635
        %v1639 = vadd.f32 %v1527, %v1634
        %v1640 = vadd.f32 %v1528, %v1636
        %s1641 = sld [smem:[#allocation2 + $0xd]]
        %v1642 = vstv %s1641
        %v1643 = vmul.f32 %v1642, %v1331
        %v1644 = vmul.f32 %v1642, %v1332
        %1647 = vrot.lane.b32.xlu0 %v1643, 127
        %v1648 = vpop.permute.xlu0 %1647
        %1649 = vrot.lane.b32.xlu0 %v1644, 127
        %v1650 = vpop.permute.xlu0 %1649
        %v1653 = vadd.f32 %v1541, %v1648
        %v1654 = vadd.f32 %v1542, %v1650
        %s1655 = sld [smem:[#allocation2 + $0x8d]]
        %v1656 = vstv %s1655
        %v1657 = vmul.f32 %v1656, %v1331
        %v1658 = vmul.f32 %v1656, %v1332
        %1661 = vrot.lane.b32.xlu0 %v1657, 127
        %v1662 = vpop.permute.xlu0 %1661
        %1663 = vrot.lane.b32.xlu0 %v1658, 127
        %v1664 = vpop.permute.xlu0 %1663
        %v1667 = vadd.f32 %v1555, %v1662
        %v1668 = vadd.f32 %v1556, %v1664
        %s1669 = sld [smem:[#allocation2 + $0x10d]]
        %v1670 = vstv %s1669
        %v1671 = vmul.f32 %v1670, %v1331
        %v1672 = vmul.f32 %v1670, %v1332
        %1675 = vrot.lane.b32.xlu0 %v1671, 127
        %v1676 = vpop.permute.xlu0 %1675
        %1677 = vrot.lane.b32.xlu0 %v1672, 127
        %v1678 = vpop.permute.xlu0 %1677
        %v1681 = vadd.f32 %v1569, %v1676
        %v1682 = vadd.f32 %v1570, %v1678
        %s1683 = sld [smem:[#allocation2 + $0x18d]]
        %v1684 = vstv %s1683
        %v1685 = vmul.f32 %v1684, %v1331
        %v1686 = vmul.f32 %v1684, %v1332
        %1689 = vrot.lane.b32.xlu0 %v1685, 127
        %v1690 = vpop.permute.xlu0 %1689
        %1691 = vrot.lane.b32.xlu0 %v1686, 127
        %v1692 = vpop.permute.xlu0 %1691
        %v1695 = vadd.f32 %v1583, %v1690
        %v1696 = vadd.f32 %v1584, %v1692
        %s1697 = sld [smem:[#allocation2 + $0x20d]]
        %v1698 = vstv %s1697
        %v1699 = vmul.f32 %v1698, %v1331
        %v1700 = vmul.f32 %v1698, %v1332
        %1703 = vrot.lane.b32.xlu0 %v1699, 127
        %v1704 = vpop.permute.xlu0 %1703
        %1705 = vrot.lane.b32.xlu0 %v1700, 127
        %v1706 = vpop.permute.xlu0 %1705
        %v1709 = vadd.f32 %v1597, %v1704
        %v1710 = vadd.f32 %v1598, %v1706
        %s1711 = sld [smem:[#allocation2 + $0x28d]]
        %v1712 = vstv %s1711
        %v1713 = vmul.f32 %v1712, %v1331
        %v1714 = vmul.f32 %v1712, %v1332
        %1717 = vrot.lane.b32.xlu0 %v1713, 127
        %v1718 = vpop.permute.xlu0 %1717
        %1719 = vrot.lane.b32.xlu0 %v1714, 127
        %v1720 = vpop.permute.xlu0 %1719
        %v1723 = vadd.f32 %v1611, %v1718
        %v1724 = vadd.f32 %v1612, %v1720
        %s1725 = sld [smem:[#allocation2 + $0x30d]]
        %v1726 = vstv %s1725
        %v1727 = vmul.f32 %v1726, %v1331
        %v1728 = vmul.f32 %v1726, %v1332
        %1731 = vrot.lane.b32.xlu0 %v1727, 127
        %v1732 = vpop.permute.xlu0 %1731
        %1733 = vrot.lane.b32.xlu0 %v1728, 127
        %v1734 = vpop.permute.xlu0 %1733
        %v1737 = vadd.f32 %v1625, %v1732
        %v1738 = vadd.f32 %v1626, %v1734
        %s1739 = sld [smem:[#allocation2 + $0x38d]]
        %v1740 = vstv %s1739
        %v1741 = vmul.f32 %v1740, %v1331
        %v1742 = vmul.f32 %v1740, %v1332
        %1745 = vrot.lane.b32.xlu0 %v1741, 127
        %v1746 = vpop.permute.xlu0 %1745
        %1747 = vrot.lane.b32.xlu0 %v1742, 127
        %v1748 = vpop.permute.xlu0 %1747
        %v1751 = vadd.f32 %v1639, %v1746
        %v1752 = vadd.f32 %v1640, %v1748
        %s1753 = sld [smem:[#allocation2 + $0x16]]
        %v1754 = vstv %s1753
        %v1755 = vmul.f32 %v1754, %v1333
        %v1756 = vmul.f32 %v1754, %v1334
        %1759 = vrot.lane.b32.xlu0 %v1755, 127
        %v1760 = vpop.permute.xlu0 %1759
        %1761 = vrot.lane.b32.xlu0 %v1756, 127
        %v1762 = vpop.permute.xlu0 %1761
        %v1765 = vadd.f32 %v1653, %v1760
        %v1766 = vadd.f32 %v1654, %v1762
        %s1767 = sld [smem:[#allocation2 + $0x96]]
        %v1768 = vstv %s1767
        %v1769 = vmul.f32 %v1768, %v1333
        %v1770 = vmul.f32 %v1768, %v1334
        %1773 = vrot.lane.b32.xlu0 %v1769, 127
        %v1774 = vpop.permute.xlu0 %1773
        %1775 = vrot.lane.b32.xlu0 %v1770, 127
        %v1776 = vpop.permute.xlu0 %1775
        %v1779 = vadd.f32 %v1667, %v1774
        %v1780 = vadd.f32 %v1668, %v1776
        %s1781 = sld [smem:[#allocation2 + $0x116]]
        %v1782 = vstv %s1781
        %v1783 = vmul.f32 %v1782, %v1333
        %v1784 = vmul.f32 %v1782, %v1334
        %1787 = vrot.lane.b32.xlu0 %v1783, 127
        %v1788 = vpop.permute.xlu0 %1787
        %1789 = vrot.lane.b32.xlu0 %v1784, 127
        %v1790 = vpop.permute.xlu0 %1789
        %v1793 = vadd.f32 %v1681, %v1788
        %v1794 = vadd.f32 %v1682, %v1790
        %s1795 = sld [smem:[#allocation2 + $0x196]]
        %v1796 = vstv %s1795
        %v1797 = vmul.f32 %v1796, %v1333
        %v1798 = vmul.f32 %v1796, %v1334
        %1801 = vrot.lane.b32.xlu0 %v1797, 127
        %v1802 = vpop.permute.xlu0 %1801
        %1803 = vrot.lane.b32.xlu0 %v1798, 127
        %v1804 = vpop.permute.xlu0 %1803
        %v1807 = vadd.f32 %v1695, %v1802
        %v1808 = vadd.f32 %v1696, %v1804
        %s1809 = sld [smem:[#allocation2 + $0x216]]
        %v1810 = vstv %s1809
        %v1811 = vmul.f32 %v1810, %v1333
        %v1812 = vmul.f32 %v1810, %v1334
        %1815 = vrot.lane.b32.xlu0 %v1811, 127
        %v1816 = vpop.permute.xlu0 %1815
        %1817 = vrot.lane.b32.xlu0 %v1812, 127
        %v1818 = vpop.permute.xlu0 %1817
        %v1821 = vadd.f32 %v1709, %v1816
        %v1822 = vadd.f32 %v1710, %v1818
        %s1823 = sld [smem:[#allocation2 + $0x296]]
        %v1824 = vstv %s1823
        %v1825 = vmul.f32 %v1824, %v1333
        %v1826 = vmul.f32 %v1824, %v1334
        %1829 = vrot.lane.b32.xlu0 %v1825, 127
        %v1830 = vpop.permute.xlu0 %1829
        %1831 = vrot.lane.b32.xlu0 %v1826, 127
        %v1832 = vpop.permute.xlu0 %1831
        %v1835 = vadd.f32 %v1723, %v1830
        %v1836 = vadd.f32 %v1724, %v1832
        %s1837 = sld [smem:[#allocation2 + $0x316]]
        %v1838 = vstv %s1837
        %v1839 = vmul.f32 %v1838, %v1333
        %v1840 = vmul.f32 %v1838, %v1334
        %1843 = vrot.lane.b32.xlu0 %v1839, 127
        %v1844 = vpop.permute.xlu0 %1843
        %1845 = vrot.lane.b32.xlu0 %v1840, 127
        %v1846 = vpop.permute.xlu0 %1845
        %v1849 = vadd.f32 %v1737, %v1844
        %v1850 = vadd.f32 %v1738, %v1846
        %s1851 = sld [smem:[#allocation2 + $0x396]]
        %v1852 = vstv %s1851
        %v1853 = vmul.f32 %v1852, %v1333
        %v1854 = vmul.f32 %v1852, %v1334
        %1857 = vrot.lane.b32.xlu0 %v1853, 127
        %v1858 = vpop.permute.xlu0 %1857
        %1859 = vrot.lane.b32.xlu0 %v1854, 127
        %v1860 = vpop.permute.xlu0 %1859
        %v1863 = vadd.f32 %v1751, %v1858
        %v1864 = vadd.f32 %v1752, %v1860
        %s1865 = sld [smem:[#allocation2 + $0x1f]]
        %v1866 = vstv %s1865
        %v1867 = vmul.f32 %v1866, %v1335
        %v1868 = vmul.f32 %v1866, %v1336
        %1871 = vrot.lane.b32.xlu0 %v1867, 127
        %v1872 = vpop.permute.xlu0 %1871
        %1873 = vrot.lane.b32.xlu0 %v1868, 127
        %v1874 = vpop.permute.xlu0 %1873
        %v1877 = vadd.f32 %v1765, %v1872
        %v1878 = vadd.f32 %v1766, %v1874
        %s1879 = sld [smem:[#allocation2 + $0x9f]]
        %v1880 = vstv %s1879
        %v1881 = vmul.f32 %v1880, %v1335
        %v1882 = vmul.f32 %v1880, %v1336
        %1885 = vrot.lane.b32.xlu0 %v1881, 127
        %v1886 = vpop.permute.xlu0 %1885
        %1887 = vrot.lane.b32.xlu0 %v1882, 127
        %v1888 = vpop.permute.xlu0 %1887
        %v1891 = vadd.f32 %v1779, %v1886
        %v1892 = vadd.f32 %v1780, %v1888
        %s1893 = sld [smem:[#allocation2 + $0x11f]]
        %v1894 = vstv %s1893
        %v1895 = vmul.f32 %v1894, %v1335
        %v1896 = vmul.f32 %v1894, %v1336
        %1899 = vrot.lane.b32.xlu0 %v1895, 127
        %v1900 = vpop.permute.xlu0 %1899
        %1901 = vrot.lane.b32.xlu0 %v1896, 127
        %v1902 = vpop.permute.xlu0 %1901
        %v1905 = vadd.f32 %v1793, %v1900
        %v1906 = vadd.f32 %v1794, %v1902
        %s1907 = sld [smem:[#allocation2 + $0x19f]]
        %v1908 = vstv %s1907
        %v1909 = vmul.f32 %v1908, %v1335
        %v1910 = vmul.f32 %v1908, %v1336
        %1913 = vrot.lane.b32.xlu0 %v1909, 127
        %v1914 = vpop.permute.xlu0 %1913
        %1915 = vrot.lane.b32.xlu0 %v1910, 127
        %v1916 = vpop.permute.xlu0 %1915
        %v1919 = vadd.f32 %v1807, %v1914
        %v1920 = vadd.f32 %v1808, %v1916
        %s1921 = sld [smem:[#allocation2 + $0x21f]]
        %v1922 = vstv %s1921
        %v1923 = vmul.f32 %v1922, %v1335
        %v1924 = vmul.f32 %v1922, %v1336
        %1927 = vrot.lane.b32.xlu0 %v1923, 127
        %v1928 = vpop.permute.xlu0 %1927
        %1929 = vrot.lane.b32.xlu0 %v1924, 127
        %v1930 = vpop.permute.xlu0 %1929
        %v1933 = vadd.f32 %v1821, %v1928
        %v1934 = vadd.f32 %v1822, %v1930
        %s1935 = sld [smem:[#allocation2 + $0x29f]]
        %v1936 = vstv %s1935
        %v1937 = vmul.f32 %v1936, %v1335
        %v1938 = vmul.f32 %v1936, %v1336
        %1941 = vrot.lane.b32.xlu0 %v1937, 127
        %v1942 = vpop.permute.xlu0 %1941
        %1943 = vrot.lane.b32.xlu0 %v1938, 127
        %v1944 = vpop.permute.xlu0 %1943
        %v1947 = vadd.f32 %v1835, %v1942
        %v1948 = vadd.f32 %v1836, %v1944
        %s1949 = sld [smem:[#allocation2 + $0x31f]]
        %v1950 = vstv %s1949
        %v1951 = vmul.f32 %v1950, %v1335
        %v1952 = vmul.f32 %v1950, %v1336
        %1955 = vrot.lane.b32.xlu0 %v1951, 127
        %v1956 = vpop.permute.xlu0 %1955
        %1957 = vrot.lane.b32.xlu0 %v1952, 127
        %v1958 = vpop.permute.xlu0 %1957
        %v1961 = vadd.f32 %v1849, %v1956
        %v1962 = vadd.f32 %v1850, %v1958
        %s1963 = sld [smem:[#allocation2 + $0x39f]]
        %v1964 = vstv %s1963
        %v1965 = vmul.f32 %v1964, %v1335
        %v1966 = vmul.f32 %v1964, %v1336
        %1969 = vrot.lane.b32.xlu0 %v1965, 127
        %v1970 = vpop.permute.xlu0 %1969
        %1971 = vrot.lane.b32.xlu0 %v1966, 127
        %v1972 = vpop.permute.xlu0 %1971
        %v1975 = vadd.f32 %v1863, %v1970
        %v1976 = vadd.f32 %v1864, %v1972
        %s1977 = sld [smem:[#allocation2 + $0x5]]
        %v1978 = vstv %s1977
        %v1979 = vmul.f32 %v1978, %v1329
        %v1980 = vmul.f32 %v1978, %v1330
        %1983 = vrot.lane.b32.xlu0 %v1979, 126
        %v1984 = vpop.permute.xlu0 %1983
        %1985 = vrot.lane.b32.xlu0 %v1980, 126
        %v1986 = vpop.permute.xlu0 %1985
        %v1989 = vadd.f32 %v1877, %v1984
        %v1990 = vadd.f32 %v1878, %v1986
        %s1991 = sld [smem:[#allocation2 + $0x85]]
        %v1992 = vstv %s1991
        %v1993 = vmul.f32 %v1992, %v1329
        %v1994 = vmul.f32 %v1992, %v1330
        %1997 = vrot.lane.b32.xlu0 %v1993, 126
        %v1998 = vpop.permute.xlu0 %1997
        %1999 = vrot.lane.b32.xlu0 %v1994, 126
        %v2000 = vpop.permute.xlu0 %1999
        %v2003 = vadd.f32 %v1891, %v1998
        %v2004 = vadd.f32 %v1892, %v2000
        %s2005 = sld [smem:[#allocation2 + $0x105]]
        %v2006 = vstv %s2005
        %v2007 = vmul.f32 %v2006, %v1329
        %v2008 = vmul.f32 %v2006, %v1330
        %2011 = vrot.lane.b32.xlu0 %v2007, 126
        %v2012 = vpop.permute.xlu0 %2011
        %2013 = vrot.lane.b32.xlu0 %v2008, 126
        %v2014 = vpop.permute.xlu0 %2013
        %v2017 = vadd.f32 %v1905, %v2012
        %v2018 = vadd.f32 %v1906, %v2014
        %s2019 = sld [smem:[#allocation2 + $0x185]]
        %v2020 = vstv %s2019
        %v2021 = vmul.f32 %v2020, %v1329
        %v2022 = vmul.f32 %v2020, %v1330
        %2025 = vrot.lane.b32.xlu0 %v2021, 126
        %v2026 = vpop.permute.xlu0 %2025
        %2027 = vrot.lane.b32.xlu0 %v2022, 126
        %v2028 = vpop.permute.xlu0 %2027
        %v2031 = vadd.f32 %v1919, %v2026
        %v2032 = vadd.f32 %v1920, %v2028
        %s2033 = sld [smem:[#allocation2 + $0x205]]
        %v2034 = vstv %s2033
        %v2035 = vmul.f32 %v2034, %v1329
        %v2036 = vmul.f32 %v2034, %v1330
        %2039 = vrot.lane.b32.xlu0 %v2035, 126
        %v2040 = vpop.permute.xlu0 %2039
        %2041 = vrot.lane.b32.xlu0 %v2036, 126
        %v2042 = vpop.permute.xlu0 %2041
        %v2045 = vadd.f32 %v1933, %v2040
        %v2046 = vadd.f32 %v1934, %v2042
        %s2047 = sld [smem:[#allocation2 + $0x285]]
        %v2048 = vstv %s2047
        %v2049 = vmul.f32 %v2048, %v1329
        %v2050 = vmul.f32 %v2048, %v1330
        %2053 = vrot.lane.b32.xlu0 %v2049, 126
        %v2054 = vpop.permute.xlu0 %2053
        %2055 = vrot.lane.b32.xlu0 %v2050, 126
        %v2056 = vpop.permute.xlu0 %2055
        %v2059 = vadd.f32 %v1947, %v2054
        %v2060 = vadd.f32 %v1948, %v2056
        %s2061 = sld [smem:[#allocation2 + $0x305]]
        %v2062 = vstv %s2061
        %v2063 = vmul.f32 %v2062, %v1329
        %v2064 = vmul.f32 %v2062, %v1330
        %2067 = vrot.lane.b32.xlu0 %v2063, 126
        %v2068 = vpop.permute.xlu0 %2067
        %2069 = vrot.lane.b32.xlu0 %v2064, 126
        %v2070 = vpop.permute.xlu0 %2069
        %v2073 = vadd.f32 %v1961, %v2068
        %v2074 = vadd.f32 %v1962, %v2070
        %s2075 = sld [smem:[#allocation2 + $0x385]]
        %v2076 = vstv %s2075
        %v2077 = vmul.f32 %v2076, %v1329
        %v2078 = vmul.f32 %v2076, %v1330
        %2081 = vrot.lane.b32.xlu0 %v2077, 126
        %v2082 = vpop.permute.xlu0 %2081
        %2083 = vrot.lane.b32.xlu0 %v2078, 126
        %v2084 = vpop.permute.xlu0 %2083
        %v2087 = vadd.f32 %v1975, %v2082
        %v2088 = vadd.f32 %v1976, %v2084
        %s2089 = sld [smem:[#allocation2 + $0xe]]
        %v2090 = vstv %s2089
        %v2091 = vmul.f32 %v2090, %v1331
        %v2092 = vmul.f32 %v2090, %v1332
        %2095 = vrot.lane.b32.xlu0 %v2091, 126
        %v2096 = vpop.permute.xlu0 %2095
        %2097 = vrot.lane.b32.xlu0 %v2092, 126
        %v2098 = vpop.permute.xlu0 %2097
        %v2101 = vadd.f32 %v1989, %v2096
        %v2102 = vadd.f32 %v1990, %v2098
        %s2103 = sld [smem:[#allocation2 + $0x8e]]
        %v2104 = vstv %s2103
        %v2105 = vmul.f32 %v2104, %v1331
        %v2106 = vmul.f32 %v2104, %v1332
        %2109 = vrot.lane.b32.xlu0 %v2105, 126
        %v2110 = vpop.permute.xlu0 %2109
        %2111 = vrot.lane.b32.xlu0 %v2106, 126
        %v2112 = vpop.permute.xlu0 %2111
        %v2115 = vadd.f32 %v2003, %v2110
        %v2116 = vadd.f32 %v2004, %v2112
        %s2117 = sld [smem:[#allocation2 + $0x10e]]
        %v2118 = vstv %s2117
        %v2119 = vmul.f32 %v2118, %v1331
        %v2120 = vmul.f32 %v2118, %v1332
        %2123 = vrot.lane.b32.xlu0 %v2119, 126
        %v2124 = vpop.permute.xlu0 %2123
        %2125 = vrot.lane.b32.xlu0 %v2120, 126
        %v2126 = vpop.permute.xlu0 %2125
        %v2129 = vadd.f32 %v2017, %v2124
        %v2130 = vadd.f32 %v2018, %v2126
        %s2131 = sld [smem:[#allocation2 + $0x18e]]
        %v2132 = vstv %s2131
        %v2133 = vmul.f32 %v2132, %v1331
        %v2134 = vmul.f32 %v2132, %v1332
        %2137 = vrot.lane.b32.xlu0 %v2133, 126
        %v2138 = vpop.permute.xlu0 %2137
        %2139 = vrot.lane.b32.xlu0 %v2134, 126
        %v2140 = vpop.permute.xlu0 %2139
        %v2143 = vadd.f32 %v2031, %v2138
        %v2144 = vadd.f32 %v2032, %v2140
        %s2145 = sld [smem:[#allocation2 + $0x20e]]
        %v2146 = vstv %s2145
        %v2147 = vmul.f32 %v2146, %v1331
        %v2148 = vmul.f32 %v2146, %v1332
        %2151 = vrot.lane.b32.xlu0 %v2147, 126
        %v2152 = vpop.permute.xlu0 %2151
        %2153 = vrot.lane.b32.xlu0 %v2148, 126
        %v2154 = vpop.permute.xlu0 %2153
        %v2157 = vadd.f32 %v2045, %v2152
        %v2158 = vadd.f32 %v2046, %v2154
        %s2159 = sld [smem:[#allocation2 + $0x28e]]
        %v2160 = vstv %s2159
        %v2161 = vmul.f32 %v2160, %v1331
        %v2162 = vmul.f32 %v2160, %v1332
        %2165 = vrot.lane.b32.xlu0 %v2161, 126
        %v2166 = vpop.permute.xlu0 %2165
        %2167 = vrot.lane.b32.xlu0 %v2162, 126
        %v2168 = vpop.permute.xlu0 %2167
        %v2171 = vadd.f32 %v2059, %v2166
        %v2172 = vadd.f32 %v2060, %v2168
        %s2173 = sld [smem:[#allocation2 + $0x30e]]
        %v2174 = vstv %s2173
        %v2175 = vmul.f32 %v2174, %v1331
        %v2176 = vmul.f32 %v2174, %v1332
        %2179 = vrot.lane.b32.xlu0 %v2175, 126
        %v2180 = vpop.permute.xlu0 %2179
        %2181 = vrot.lane.b32.xlu0 %v2176, 126
        %v2182 = vpop.permute.xlu0 %2181
        %v2185 = vadd.f32 %v2073, %v2180
        %v2186 = vadd.f32 %v2074, %v2182
        %s2187 = sld [smem:[#allocation2 + $0x38e]]
        %v2188 = vstv %s2187
        %v2189 = vmul.f32 %v2188, %v1331
        %v2190 = vmul.f32 %v2188, %v1332
        %2193 = vrot.lane.b32.xlu0 %v2189, 126
        %v2194 = vpop.permute.xlu0 %2193
        %2195 = vrot.lane.b32.xlu0 %v2190, 126
        %v2196 = vpop.permute.xlu0 %2195
        %v2199 = vadd.f32 %v2087, %v2194
        %v2200 = vadd.f32 %v2088, %v2196
        %s2201 = sld [smem:[#allocation2 + $0x17]]
        %v2202 = vstv %s2201
        %v2203 = vmul.f32 %v2202, %v1333
        %v2204 = vmul.f32 %v2202, %v1334
        %2207 = vrot.lane.b32.xlu0 %v2203, 126
        %v2208 = vpop.permute.xlu0 %2207
        %2209 = vrot.lane.b32.xlu0 %v2204, 126
        %v2210 = vpop.permute.xlu0 %2209
        %v2213 = vadd.f32 %v2101, %v2208
        %v2214 = vadd.f32 %v2102, %v2210
        %s2215 = sld [smem:[#allocation2 + $0x97]]
        %v2216 = vstv %s2215
        %v2217 = vmul.f32 %v2216, %v1333
        %v2218 = vmul.f32 %v2216, %v1334
        %2221 = vrot.lane.b32.xlu0 %v2217, 126
        %v2222 = vpop.permute.xlu0 %2221
        %2223 = vrot.lane.b32.xlu0 %v2218, 126
        %v2224 = vpop.permute.xlu0 %2223
        %v2227 = vadd.f32 %v2115, %v2222
        %v2228 = vadd.f32 %v2116, %v2224
        %s2229 = sld [smem:[#allocation2 + $0x117]]
        %v2230 = vstv %s2229
        %v2231 = vmul.f32 %v2230, %v1333
        %v2232 = vmul.f32 %v2230, %v1334
        %2235 = vrot.lane.b32.xlu0 %v2231, 126
        %v2236 = vpop.permute.xlu0 %2235
        %2237 = vrot.lane.b32.xlu0 %v2232, 126
        %v2238 = vpop.permute.xlu0 %2237
        %v2241 = vadd.f32 %v2129, %v2236
        %v2242 = vadd.f32 %v2130, %v2238
        %s2243 = sld [smem:[#allocation2 + $0x197]]
        %v2244 = vstv %s2243
        %v2245 = vmul.f32 %v2244, %v1333
        %v2246 = vmul.f32 %v2244, %v1334
        %2249 = vrot.lane.b32.xlu0 %v2245, 126
        %v2250 = vpop.permute.xlu0 %2249
        %2251 = vrot.lane.b32.xlu0 %v2246, 126
        %v2252 = vpop.permute.xlu0 %2251
        %v2255 = vadd.f32 %v2143, %v2250
        %v2256 = vadd.f32 %v2144, %v2252
        %s2257 = sld [smem:[#allocation2 + $0x217]]
        %v2258 = vstv %s2257
        %v2259 = vmul.f32 %v2258, %v1333
        %v2260 = vmul.f32 %v2258, %v1334
        %2263 = vrot.lane.b32.xlu0 %v2259, 126
        %v2264 = vpop.permute.xlu0 %2263
        %2265 = vrot.lane.b32.xlu0 %v2260, 126
        %v2266 = vpop.permute.xlu0 %2265
        %v2269 = vadd.f32 %v2157, %v2264
        %v2270 = vadd.f32 %v2158, %v2266
        %s2271 = sld [smem:[#allocation2 + $0x297]]
        %v2272 = vstv %s2271
        %v2273 = vmul.f32 %v2272, %v1333
        %v2274 = vmul.f32 %v2272, %v1334
        %2277 = vrot.lane.b32.xlu0 %v2273, 126
        %v2278 = vpop.permute.xlu0 %2277
        %2279 = vrot.lane.b32.xlu0 %v2274, 126
        %v2280 = vpop.permute.xlu0 %2279
        %v2283 = vadd.f32 %v2171, %v2278
        %v2284 = vadd.f32 %v2172, %v2280
        %s2285 = sld [smem:[#allocation2 + $0x317]]
        %v2286 = vstv %s2285
        %v2287 = vmul.f32 %v2286, %v1333
        %v2288 = vmul.f32 %v2286, %v1334
        %2291 = vrot.lane.b32.xlu0 %v2287, 126
        %v2292 = vpop.permute.xlu0 %2291
        %2293 = vrot.lane.b32.xlu0 %v2288, 126
        %v2294 = vpop.permute.xlu0 %2293
        %v2297 = vadd.f32 %v2185, %v2292
        %v2298 = vadd.f32 %v2186, %v2294
        %s2299 = sld [smem:[#allocation2 + $0x397]]
        %v2300 = vstv %s2299
        %v2301 = vmul.f32 %v2300, %v1333
        %v2302 = vmul.f32 %v2300, %v1334
        %2305 = vrot.lane.b32.xlu0 %v2301, 126
        %v2306 = vpop.permute.xlu0 %2305
        %2307 = vrot.lane.b32.xlu0 %v2302, 126
        %v2308 = vpop.permute.xlu0 %2307
        %v2311 = vadd.f32 %v2199, %v2306
        %v2312 = vadd.f32 %v2200, %v2308
        %s2313 = sld [smem:[#allocation2 + $0x20]]
        %v2314 = vstv %s2313
        %v2315 = vmul.f32 %v2314, %v1335
        %v2316 = vmul.f32 %v2314, %v1336
        %2319 = vrot.lane.b32.xlu0 %v2315, 126
        %v2320 = vpop.permute.xlu0 %2319
        %2321 = vrot.lane.b32.xlu0 %v2316, 126
        %v2322 = vpop.permute.xlu0 %2321
        %v2325 = vadd.f32 %v2213, %v2320
        %v2326 = vadd.f32 %v2214, %v2322
        %s2327 = sld [smem:[#allocation2 + $0xa0]]
        %v2328 = vstv %s2327
        %v2329 = vmul.f32 %v2328, %v1335
        %v2330 = vmul.f32 %v2328, %v1336
        %2333 = vrot.lane.b32.xlu0 %v2329, 126
        %v2334 = vpop.permute.xlu0 %2333
        %2335 = vrot.lane.b32.xlu0 %v2330, 126
        %v2336 = vpop.permute.xlu0 %2335
        %v2339 = vadd.f32 %v2227, %v2334
        %v2340 = vadd.f32 %v2228, %v2336
        %s2341 = sld [smem:[#allocation2 + $0x120]]
        %v2342 = vstv %s2341
        %v2343 = vmul.f32 %v2342, %v1335
        %v2344 = vmul.f32 %v2342, %v1336
        %2347 = vrot.lane.b32.xlu0 %v2343, 126
        %v2348 = vpop.permute.xlu0 %2347
        %2349 = vrot.lane.b32.xlu0 %v2344, 126
        %v2350 = vpop.permute.xlu0 %2349
        %v2353 = vadd.f32 %v2241, %v2348
        %v2354 = vadd.f32 %v2242, %v2350
        %s2355 = sld [smem:[#allocation2 + $0x1a0]]
        %v2356 = vstv %s2355
        %v2357 = vmul.f32 %v2356, %v1335
        %v2358 = vmul.f32 %v2356, %v1336
        %2361 = vrot.lane.b32.xlu0 %v2357, 126
        %v2362 = vpop.permute.xlu0 %2361
        %2363 = vrot.lane.b32.xlu0 %v2358, 126
        %v2364 = vpop.permute.xlu0 %2363
        %v2367 = vadd.f32 %v2255, %v2362
        %v2368 = vadd.f32 %v2256, %v2364
        %s2369 = sld [smem:[#allocation2 + $0x220]]
        %v2370 = vstv %s2369
        %v2371 = vmul.f32 %v2370, %v1335
        %v2372 = vmul.f32 %v2370, %v1336
        %2375 = vrot.lane.b32.xlu0 %v2371, 126
        %v2376 = vpop.permute.xlu0 %2375
        %2377 = vrot.lane.b32.xlu0 %v2372, 126
        %v2378 = vpop.permute.xlu0 %2377
        %v2381 = vadd.f32 %v2269, %v2376
        %v2382 = vadd.f32 %v2270, %v2378
        %s2383 = sld [smem:[#allocation2 + $0x2a0]]
        %v2384 = vstv %s2383
        %v2385 = vmul.f32 %v2384, %v1335
        %v2386 = vmul.f32 %v2384, %v1336
        %2389 = vrot.lane.b32.xlu0 %v2385, 126
        %v2390 = vpop.permute.xlu0 %2389
        %2391 = vrot.lane.b32.xlu0 %v2386, 126
        %v2392 = vpop.permute.xlu0 %2391
        %v2395 = vadd.f32 %v2283, %v2390
        %v2396 = vadd.f32 %v2284, %v2392
        %s2397 = sld [smem:[#allocation2 + $0x320]]
        %v2398 = vstv %s2397
        %v2399 = vmul.f32 %v2398, %v1335
        %v2400 = vmul.f32 %v2398, %v1336
        %2403 = vrot.lane.b32.xlu0 %v2399, 126
        %v2404 = vpop.permute.xlu0 %2403
        %2405 = vrot.lane.b32.xlu0 %v2400, 126
        %v2406 = vpop.permute.xlu0 %2405
        %v2409 = vadd.f32 %v2297, %v2404
        %v2410 = vadd.f32 %v2298, %v2406
        %s2411 = sld [smem:[#allocation2 + $0x3a0]]
        %v2412 = vstv %s2411
        %v2413 = vmul.f32 %v2412, %v1335
        %v2414 = vmul.f32 %v2412, %v1336
        %2417 = vrot.lane.b32.xlu0 %v2413, 126
        %v2418 = vpop.permute.xlu0 %2417
        %2419 = vrot.lane.b32.xlu0 %v2414, 126
        %v2420 = vpop.permute.xlu0 %2419
        %v2423 = vadd.f32 %v2311, %v2418
        %v2424 = vadd.f32 %v2312, %v2420
        %v2425 = vld [vmem:[%s248 + $0x2] sm:$0xff]
        %v2426 = vld [vmem:[%s248 + $0xa] sm:$0x3f]
        %v2427 = vld [vmem:[%s248 + $0x12] sm:$0xff]
        %v2428 = vld [vmem:[%s248 + $0x1a] sm:$0x3f]
        %v2429 = vld [vmem:[%s248 + $0x22] sm:$0xff]
        %v2430 = vld [vmem:[%s248 + $0x2a] sm:$0x3f]
        %v2431 = vld [vmem:[%s248 + $0x32] sm:$0xff]
        %v2432 = vld [vmem:[%s248 + $0x3a] sm:$0x3f]
        %s2433 = sld [smem:[#allocation2 + $0x6]]
        %v2434 = vstv %s2433
        %v2435 = vmul.f32 %v2434, %v2425
        %v2436 = vmul.f32 %v2434, %v2426
        %v2437 = vadd.f32 %v2325, %v2435
        %v2438 = vadd.f32 %v2326, %v2436
        %s2439 = sld [smem:[#allocation2 + $0x86]]
        %v2440 = vstv %s2439
        %v2441 = vmul.f32 %v2440, %v2425
        %v2442 = vmul.f32 %v2440, %v2426
        %v2443 = vadd.f32 %v2339, %v2441
        %v2444 = vadd.f32 %v2340, %v2442
        %s2445 = sld [smem:[#allocation2 + $0x106]]
        %v2446 = vstv %s2445
        %v2447 = vmul.f32 %v2446, %v2425
        %v2448 = vmul.f32 %v2446, %v2426
        %v2449 = vadd.f32 %v2353, %v2447
        %v2450 = vadd.f32 %v2354, %v2448
        %s2451 = sld [smem:[#allocation2 + $0x186]]
        %v2452 = vstv %s2451
        %v2453 = vmul.f32 %v2452, %v2425
        %v2454 = vmul.f32 %v2452, %v2426
        %v2455 = vadd.f32 %v2367, %v2453
        %v2456 = vadd.f32 %v2368, %v2454
        %s2457 = sld [smem:[#allocation2 + $0x206]]
        %v2458 = vstv %s2457
        %v2459 = vmul.f32 %v2458, %v2425
        %v2460 = vmul.f32 %v2458, %v2426
        %v2461 = vadd.f32 %v2381, %v2459
        %v2462 = vadd.f32 %v2382, %v2460
        %s2463 = sld [smem:[#allocation2 + $0x286]]
        %v2464 = vstv %s2463
        %v2465 = vmul.f32 %v2464, %v2425
        %v2466 = vmul.f32 %v2464, %v2426
        %v2467 = vadd.f32 %v2395, %v2465
        %v2468 = vadd.f32 %v2396, %v2466
        %s2469 = sld [smem:[#allocation2 + $0x306]]
        %v2470 = vstv %s2469
        %v2471 = vmul.f32 %v2470, %v2425
        %v2472 = vmul.f32 %v2470, %v2426
        %v2473 = vadd.f32 %v2409, %v2471
        %v2474 = vadd.f32 %v2410, %v2472
        %s2475 = sld [smem:[#allocation2 + $0x386]]
        %v2476 = vstv %s2475
        %v2477 = vmul.f32 %v2476, %v2425
        %v2478 = vmul.f32 %v2476, %v2426
        %v2479 = vadd.f32 %v2423, %v2477
        %v2480 = vadd.f32 %v2424, %v2478
        %s2481 = sld [smem:[#allocation2 + $0xf]]
        %v2482 = vstv %s2481
        %v2483 = vmul.f32 %v2482, %v2427
        %v2484 = vmul.f32 %v2482, %v2428
        %v2485 = vadd.f32 %v2437, %v2483
        %v2486 = vadd.f32 %v2438, %v2484
        %s2487 = sld [smem:[#allocation2 + $0x8f]]
        %v2488 = vstv %s2487
        %v2489 = vmul.f32 %v2488, %v2427
        %v2490 = vmul.f32 %v2488, %v2428
        %v2491 = vadd.f32 %v2443, %v2489
        %v2492 = vadd.f32 %v2444, %v2490
        %s2493 = sld [smem:[#allocation2 + $0x10f]]
        %v2494 = vstv %s2493
        %v2495 = vmul.f32 %v2494, %v2427
        %v2496 = vmul.f32 %v2494, %v2428
        %v2497 = vadd.f32 %v2449, %v2495
        %v2498 = vadd.f32 %v2450, %v2496
        %s2499 = sld [smem:[#allocation2 + $0x18f]]
        %v2500 = vstv %s2499
        %v2501 = vmul.f32 %v2500, %v2427
        %v2502 = vmul.f32 %v2500, %v2428
        %v2503 = vadd.f32 %v2455, %v2501
        %v2504 = vadd.f32 %v2456, %v2502
        %s2505 = sld [smem:[#allocation2 + $0x20f]]
        %v2506 = vstv %s2505
        %v2507 = vmul.f32 %v2506, %v2427
        %v2508 = vmul.f32 %v2506, %v2428
        %v2509 = vadd.f32 %v2461, %v2507
        %v2510 = vadd.f32 %v2462, %v2508
        %s2511 = sld [smem:[#allocation2 + $0x28f]]
        %v2512 = vstv %s2511
        %v2513 = vmul.f32 %v2512, %v2427
        %v2514 = vmul.f32 %v2512, %v2428
        %v2515 = vadd.f32 %v2467, %v2513
        %v2516 = vadd.f32 %v2468, %v2514
        %s2517 = sld [smem:[#allocation2 + $0x30f]]
        %v2518 = vstv %s2517
        %v2519 = vmul.f32 %v2518, %v2427
        %v2520 = vmul.f32 %v2518, %v2428
        %v2521 = vadd.f32 %v2473, %v2519
        %v2522 = vadd.f32 %v2474, %v2520
        %s2523 = sld [smem:[#allocation2 + $0x38f]]
        %v2524 = vstv %s2523
        %v2525 = vmul.f32 %v2524, %v2427
        %v2526 = vmul.f32 %v2524, %v2428
        %v2527 = vadd.f32 %v2479, %v2525
        %v2528 = vadd.f32 %v2480, %v2526
        %s2529 = sld [smem:[#allocation2 + $0x18]]
        %v2530 = vstv %s2529
        %v2531 = vmul.f32 %v2530, %v2429
        %v2532 = vmul.f32 %v2530, %v2430
        %v2533 = vadd.f32 %v2485, %v2531
        %v2534 = vadd.f32 %v2486, %v2532
        %s2535 = sld [smem:[#allocation2 + $0x98]]
        %v2536 = vstv %s2535
        %v2537 = vmul.f32 %v2536, %v2429
        %v2538 = vmul.f32 %v2536, %v2430
        %v2539 = vadd.f32 %v2491, %v2537
        %v2540 = vadd.f32 %v2492, %v2538
        %s2541 = sld [smem:[#allocation2 + $0x118]]
        %v2542 = vstv %s2541
        %v2543 = vmul.f32 %v2542, %v2429
        %v2544 = vmul.f32 %v2542, %v2430
        %v2545 = vadd.f32 %v2497, %v2543
        %v2546 = vadd.f32 %v2498, %v2544
        %s2547 = sld [smem:[#allocation2 + $0x198]]
        %v2548 = vstv %s2547
        %v2549 = vmul.f32 %v2548, %v2429
        %v2550 = vmul.f32 %v2548, %v2430
        %v2551 = vadd.f32 %v2503, %v2549
        %v2552 = vadd.f32 %v2504, %v2550
        %s2553 = sld [smem:[#allocation2 + $0x218]]
        %v2554 = vstv %s2553
        %v2555 = vmul.f32 %v2554, %v2429
        %v2556 = vmul.f32 %v2554, %v2430
        %v2557 = vadd.f32 %v2509, %v2555
        %v2558 = vadd.f32 %v2510, %v2556
        %s2559 = sld [smem:[#allocation2 + $0x298]]
        %v2560 = vstv %s2559
        %v2561 = vmul.f32 %v2560, %v2429
        %v2562 = vmul.f32 %v2560, %v2430
        %v2563 = vadd.f32 %v2515, %v2561
        %v2564 = vadd.f32 %v2516, %v2562
        %s2565 = sld [smem:[#allocation2 + $0x318]]
        %v2566 = vstv %s2565
        %v2567 = vmul.f32 %v2566, %v2429
        %v2568 = vmul.f32 %v2566, %v2430
        %v2569 = vadd.f32 %v2521, %v2567
        %v2570 = vadd.f32 %v2522, %v2568
        %s2571 = sld [smem:[#allocation2 + $0x398]]
        %v2572 = vstv %s2571
        %v2573 = vmul.f32 %v2572, %v2429
        %v2574 = vmul.f32 %v2572, %v2430
        %v2575 = vadd.f32 %v2527, %v2573
        %v2576 = vadd.f32 %v2528, %v2574
        %s2577 = sld [smem:[#allocation2 + $0x21]]
        %v2578 = vstv %s2577
        %v2579 = vmul.f32 %v2578, %v2431
        %v2580 = vmul.f32 %v2578, %v2432
        %v2581 = vadd.f32 %v2533, %v2579
        %v2582 = vadd.f32 %v2534, %v2580
        %s2583 = sld [smem:[#allocation2 + $0xa1]]
        %v2584 = vstv %s2583
        %v2585 = vmul.f32 %v2584, %v2431
        %v2586 = vmul.f32 %v2584, %v2432
        %v2587 = vadd.f32 %v2539, %v2585
        %v2588 = vadd.f32 %v2540, %v2586
        %s2589 = sld [smem:[#allocation2 + $0x121]]
        %v2590 = vstv %s2589
        %v2591 = vmul.f32 %v2590, %v2431
        %v2592 = vmul.f32 %v2590, %v2432
        %v2593 = vadd.f32 %v2545, %v2591
        %v2594 = vadd.f32 %v2546, %v2592
        %s2595 = sld [smem:[#allocation2 + $0x1a1]]
        %v2596 = vstv %s2595
        %v2597 = vmul.f32 %v2596, %v2431
        %v2598 = vmul.f32 %v2596, %v2432
        %v2599 = vadd.f32 %v2551, %v2597
        %v2600 = vadd.f32 %v2552, %v2598
        %s2601 = sld [smem:[#allocation2 + $0x221]]
        %v2602 = vstv %s2601
        %v2603 = vmul.f32 %v2602, %v2431
        %v2604 = vmul.f32 %v2602, %v2432
        %v2605 = vadd.f32 %v2557, %v2603
        %v2606 = vadd.f32 %v2558, %v2604
        %s2607 = sld [smem:[#allocation2 + $0x2a1]]
        %v2608 = vstv %s2607
        %v2609 = vmul.f32 %v2608, %v2431
        %v2610 = vmul.f32 %v2608, %v2432
        %v2611 = vadd.f32 %v2563, %v2609
        %v2612 = vadd.f32 %v2564, %v2610
        %s2613 = sld [smem:[#allocation2 + $0x321]]
        %v2614 = vstv %s2613
        %v2615 = vmul.f32 %v2614, %v2431
        %v2616 = vmul.f32 %v2614, %v2432
        %v2617 = vadd.f32 %v2569, %v2615
        %v2618 = vadd.f32 %v2570, %v2616
        %s2619 = sld [smem:[#allocation2 + $0x3a1]]
        %v2620 = vstv %s2619
        %v2621 = vmul.f32 %v2620, %v2431
        %v2622 = vmul.f32 %v2620, %v2432
        %v2623 = vadd.f32 %v2575, %v2621
        %v2624 = vadd.f32 %v2576, %v2622
        %s2625 = sld [smem:[#allocation2 + $0x7]]
        %v2626 = vstv %s2625
        %v2627 = vmul.f32 %v2626, %v2425
        %v2628 = vmul.f32 %v2626, %v2426
        %2631 = vrot.lane.b32.xlu0 %v2627, 127
        %v2632 = vpop.permute.xlu0 %2631
        %2633 = vrot.lane.b32.xlu0 %v2628, 127
        %v2634 = vpop.permute.xlu0 %2633
        %v2637 = vadd.f32 %v2581, %v2632
        %v2638 = vadd.f32 %v2582, %v2634
        %s2639 = sld [smem:[#allocation2 + $0x87]]
        %v2640 = vstv %s2639
        %v2641 = vmul.f32 %v2640, %v2425
        %v2642 = vmul.f32 %v2640, %v2426
        %2645 = vrot.lane.b32.xlu0 %v2641, 127
        %v2646 = vpop.permute.xlu0 %2645
        %2647 = vrot.lane.b32.xlu0 %v2642, 127
        %v2648 = vpop.permute.xlu0 %2647
        %v2651 = vadd.f32 %v2587, %v2646
        %v2652 = vadd.f32 %v2588, %v2648
        %s2653 = sld [smem:[#allocation2 + $0x107]]
        %v2654 = vstv %s2653
        %v2655 = vmul.f32 %v2654, %v2425
        %v2656 = vmul.f32 %v2654, %v2426
        %2659 = vrot.lane.b32.xlu0 %v2655, 127
        %v2660 = vpop.permute.xlu0 %2659
        %2661 = vrot.lane.b32.xlu0 %v2656, 127
        %v2662 = vpop.permute.xlu0 %2661
        %v2665 = vadd.f32 %v2593, %v2660
        %v2666 = vadd.f32 %v2594, %v2662
        %s2667 = sld [smem:[#allocation2 + $0x187]]
        %v2668 = vstv %s2667
        %v2669 = vmul.f32 %v2668, %v2425
        %v2670 = vmul.f32 %v2668, %v2426
        %2673 = vrot.lane.b32.xlu0 %v2669, 127
        %v2674 = vpop.permute.xlu0 %2673
        %2675 = vrot.lane.b32.xlu0 %v2670, 127
        %v2676 = vpop.permute.xlu0 %2675
        %v2679 = vadd.f32 %v2599, %v2674
        %v2680 = vadd.f32 %v2600, %v2676
        %s2681 = sld [smem:[#allocation2 + $0x207]]
        %v2682 = vstv %s2681
        %v2683 = vmul.f32 %v2682, %v2425
        %v2684 = vmul.f32 %v2682, %v2426
        %2687 = vrot.lane.b32.xlu0 %v2683, 127
        %v2688 = vpop.permute.xlu0 %2687
        %2689 = vrot.lane.b32.xlu0 %v2684, 127
        %v2690 = vpop.permute.xlu0 %2689
        %v2693 = vadd.f32 %v2605, %v2688
        %v2694 = vadd.f32 %v2606, %v2690
        %s2695 = sld [smem:[#allocation2 + $0x287]]
        %v2696 = vstv %s2695
        %v2697 = vmul.f32 %v2696, %v2425
        %v2698 = vmul.f32 %v2696, %v2426
        %2701 = vrot.lane.b32.xlu0 %v2697, 127
        %v2702 = vpop.permute.xlu0 %2701
        %2703 = vrot.lane.b32.xlu0 %v2698, 127
        %v2704 = vpop.permute.xlu0 %2703
        %v2707 = vadd.f32 %v2611, %v2702
        %v2708 = vadd.f32 %v2612, %v2704
        %s2709 = sld [smem:[#allocation2 + $0x307]]
        %v2710 = vstv %s2709
        %v2711 = vmul.f32 %v2710, %v2425
        %v2712 = vmul.f32 %v2710, %v2426
        %2715 = vrot.lane.b32.xlu0 %v2711, 127
        %v2716 = vpop.permute.xlu0 %2715
        %2717 = vrot.lane.b32.xlu0 %v2712, 127
        %v2718 = vpop.permute.xlu0 %2717
        %v2721 = vadd.f32 %v2617, %v2716
        %v2722 = vadd.f32 %v2618, %v2718
        %s2723 = sld [smem:[#allocation2 + $0x387]]
        %v2724 = vstv %s2723
        %v2725 = vmul.f32 %v2724, %v2425
        %v2726 = vmul.f32 %v2724, %v2426
        %2729 = vrot.lane.b32.xlu0 %v2725, 127
        %v2730 = vpop.permute.xlu0 %2729
        %2731 = vrot.lane.b32.xlu0 %v2726, 127
        %v2732 = vpop.permute.xlu0 %2731
        %v2735 = vadd.f32 %v2623, %v2730
        %v2736 = vadd.f32 %v2624, %v2732
        %s2737 = sld [smem:[#allocation2 + $0x10]]
        %v2738 = vstv %s2737
        %v2739 = vmul.f32 %v2738, %v2427
        %v2740 = vmul.f32 %v2738, %v2428
        %2743 = vrot.lane.b32.xlu0 %v2739, 127
        %v2744 = vpop.permute.xlu0 %2743
        %2745 = vrot.lane.b32.xlu0 %v2740, 127
        %v2746 = vpop.permute.xlu0 %2745
        %v2749 = vadd.f32 %v2637, %v2744
        %v2750 = vadd.f32 %v2638, %v2746
        %s2751 = sld [smem:[#allocation2 + $0x90]]
        %v2752 = vstv %s2751
        %v2753 = vmul.f32 %v2752, %v2427
        %v2754 = vmul.f32 %v2752, %v2428
        %2757 = vrot.lane.b32.xlu0 %v2753, 127
        %v2758 = vpop.permute.xlu0 %2757
        %2759 = vrot.lane.b32.xlu0 %v2754, 127
        %v2760 = vpop.permute.xlu0 %2759
        %v2763 = vadd.f32 %v2651, %v2758
        %v2764 = vadd.f32 %v2652, %v2760
        %s2765 = sld [smem:[#allocation2 + $0x110]]
        %v2766 = vstv %s2765
        %v2767 = vmul.f32 %v2766, %v2427
        %v2768 = vmul.f32 %v2766, %v2428
        %2771 = vrot.lane.b32.xlu0 %v2767, 127
        %v2772 = vpop.permute.xlu0 %2771
        %2773 = vrot.lane.b32.xlu0 %v2768, 127
        %v2774 = vpop.permute.xlu0 %2773
        %v2777 = vadd.f32 %v2665, %v2772
        %v2778 = vadd.f32 %v2666, %v2774
        %s2779 = sld [smem:[#allocation2 + $0x190]]
        %v2780 = vstv %s2779
        %v2781 = vmul.f32 %v2780, %v2427
        %v2782 = vmul.f32 %v2780, %v2428
        %2785 = vrot.lane.b32.xlu0 %v2781, 127
        %v2786 = vpop.permute.xlu0 %2785
        %2787 = vrot.lane.b32.xlu0 %v2782, 127
        %v2788 = vpop.permute.xlu0 %2787
        %v2791 = vadd.f32 %v2679, %v2786
        %v2792 = vadd.f32 %v2680, %v2788
        %s2793 = sld [smem:[#allocation2 + $0x210]]
        %v2794 = vstv %s2793
        %v2795 = vmul.f32 %v2794, %v2427
        %v2796 = vmul.f32 %v2794, %v2428
        %2799 = vrot.lane.b32.xlu0 %v2795, 127
        %v2800 = vpop.permute.xlu0 %2799
        %2801 = vrot.lane.b32.xlu0 %v2796, 127
        %v2802 = vpop.permute.xlu0 %2801
        %v2805 = vadd.f32 %v2693, %v2800
        %v2806 = vadd.f32 %v2694, %v2802
        %s2807 = sld [smem:[#allocation2 + $0x290]]
        %v2808 = vstv %s2807
        %v2809 = vmul.f32 %v2808, %v2427
        %v2810 = vmul.f32 %v2808, %v2428
        %2813 = vrot.lane.b32.xlu0 %v2809, 127
        %v2814 = vpop.permute.xlu0 %2813
        %2815 = vrot.lane.b32.xlu0 %v2810, 127
        %v2816 = vpop.permute.xlu0 %2815
        %v2819 = vadd.f32 %v2707, %v2814
        %v2820 = vadd.f32 %v2708, %v2816
        %s2821 = sld [smem:[#allocation2 + $0x310]]
        %v2822 = vstv %s2821
        %v2823 = vmul.f32 %v2822, %v2427
        %v2824 = vmul.f32 %v2822, %v2428
        %2827 = vrot.lane.b32.xlu0 %v2823, 127
        %v2828 = vpop.permute.xlu0 %2827
        %2829 = vrot.lane.b32.xlu0 %v2824, 127
        %v2830 = vpop.permute.xlu0 %2829
        %v2833 = vadd.f32 %v2721, %v2828
        %v2834 = vadd.f32 %v2722, %v2830
        %s2835 = sld [smem:[#allocation2 + $0x390]]
        %v2836 = vstv %s2835
        %v2837 = vmul.f32 %v2836, %v2427
        %v2838 = vmul.f32 %v2836, %v2428
        %2841 = vrot.lane.b32.xlu0 %v2837, 127
        %v2842 = vpop.permute.xlu0 %2841
        %2843 = vrot.lane.b32.xlu0 %v2838, 127
        %v2844 = vpop.permute.xlu0 %2843
        %v2847 = vadd.f32 %v2735, %v2842
        %v2848 = vadd.f32 %v2736, %v2844
        %s2849 = sld [smem:[#allocation2 + $0x19]]
        %v2850 = vstv %s2849
        %v2851 = vmul.f32 %v2850, %v2429
        %v2852 = vmul.f32 %v2850, %v2430
        %2855 = vrot.lane.b32.xlu0 %v2851, 127
        %v2856 = vpop.permute.xlu0 %2855
        %2857 = vrot.lane.b32.xlu0 %v2852, 127
        %v2858 = vpop.permute.xlu0 %2857
        %v2861 = vadd.f32 %v2749, %v2856
        %v2862 = vadd.f32 %v2750, %v2858
        %s2863 = sld [smem:[#allocation2 + $0x99]]
        %v2864 = vstv %s2863
        %v2865 = vmul.f32 %v2864, %v2429
        %v2866 = vmul.f32 %v2864, %v2430
        %2869 = vrot.lane.b32.xlu0 %v2865, 127
        %v2870 = vpop.permute.xlu0 %2869
        %2871 = vrot.lane.b32.xlu0 %v2866, 127
        %v2872 = vpop.permute.xlu0 %2871
        %v2875 = vadd.f32 %v2763, %v2870
        %v2876 = vadd.f32 %v2764, %v2872
        %s2877 = sld [smem:[#allocation2 + $0x119]]
        %v2878 = vstv %s2877
        %v2879 = vmul.f32 %v2878, %v2429
        %v2880 = vmul.f32 %v2878, %v2430
        %2883 = vrot.lane.b32.xlu0 %v2879, 127
        %v2884 = vpop.permute.xlu0 %2883
        %2885 = vrot.lane.b32.xlu0 %v2880, 127
        %v2886 = vpop.permute.xlu0 %2885
        %v2889 = vadd.f32 %v2777, %v2884
        %v2890 = vadd.f32 %v2778, %v2886
        %s2891 = sld [smem:[#allocation2 + $0x199]]
        %v2892 = vstv %s2891
        %v2893 = vmul.f32 %v2892, %v2429
        %v2894 = vmul.f32 %v2892, %v2430
        %2897 = vrot.lane.b32.xlu0 %v2893, 127
        %v2898 = vpop.permute.xlu0 %2897
        %2899 = vrot.lane.b32.xlu0 %v2894, 127
        %v2900 = vpop.permute.xlu0 %2899
        %v2903 = vadd.f32 %v2791, %v2898
        %v2904 = vadd.f32 %v2792, %v2900
        %s2905 = sld [smem:[#allocation2 + $0x219]]
        %v2906 = vstv %s2905
        %v2907 = vmul.f32 %v2906, %v2429
        %v2908 = vmul.f32 %v2906, %v2430
        %2911 = vrot.lane.b32.xlu0 %v2907, 127
        %v2912 = vpop.permute.xlu0 %2911
        %2913 = vrot.lane.b32.xlu0 %v2908, 127
        %v2914 = vpop.permute.xlu0 %2913
        %v2917 = vadd.f32 %v2805, %v2912
        %v2918 = vadd.f32 %v2806, %v2914
        %s2919 = sld [smem:[#allocation2 + $0x299]]
        %v2920 = vstv %s2919
        %v2921 = vmul.f32 %v2920, %v2429
        %v2922 = vmul.f32 %v2920, %v2430
        %2925 = vrot.lane.b32.xlu0 %v2921, 127
        %v2926 = vpop.permute.xlu0 %2925
        %2927 = vrot.lane.b32.xlu0 %v2922, 127
        %v2928 = vpop.permute.xlu0 %2927
        %v2931 = vadd.f32 %v2819, %v2926
        %v2932 = vadd.f32 %v2820, %v2928
        %s2933 = sld [smem:[#allocation2 + $0x319]]
        %v2934 = vstv %s2933
        %v2935 = vmul.f32 %v2934, %v2429
        %v2936 = vmul.f32 %v2934, %v2430
        %2939 = vrot.lane.b32.xlu0 %v2935, 127
        %v2940 = vpop.permute.xlu0 %2939
        %2941 = vrot.lane.b32.xlu0 %v2936, 127
        %v2942 = vpop.permute.xlu0 %2941
        %v2945 = vadd.f32 %v2833, %v2940
        %v2946 = vadd.f32 %v2834, %v2942
        %s2947 = sld [smem:[#allocation2 + $0x399]]
        %v2948 = vstv %s2947
        %v2949 = vmul.f32 %v2948, %v2429
        %v2950 = vmul.f32 %v2948, %v2430
        %2953 = vrot.lane.b32.xlu0 %v2949, 127
        %v2954 = vpop.permute.xlu0 %2953
        %2955 = vrot.lane.b32.xlu0 %v2950, 127
        %v2956 = vpop.permute.xlu0 %2955
        %v2959 = vadd.f32 %v2847, %v2954
        %v2960 = vadd.f32 %v2848, %v2956
        %s2961 = sld [smem:[#allocation2 + $0x22]]
        %v2962 = vstv %s2961
        %v2963 = vmul.f32 %v2962, %v2431
        %v2964 = vmul.f32 %v2962, %v2432
        %2967 = vrot.lane.b32.xlu0 %v2963, 127
        %v2968 = vpop.permute.xlu0 %2967
        %2969 = vrot.lane.b32.xlu0 %v2964, 127
        %v2970 = vpop.permute.xlu0 %2969
        %v2973 = vadd.f32 %v2861, %v2968
        %v2974 = vadd.f32 %v2862, %v2970
        %s2975 = sld [smem:[#allocation2 + $0xa2]]
        %v2976 = vstv %s2975
        %v2977 = vmul.f32 %v2976, %v2431
        %v2978 = vmul.f32 %v2976, %v2432
        %2981 = vrot.lane.b32.xlu0 %v2977, 127
        %v2982 = vpop.permute.xlu0 %2981
        %2983 = vrot.lane.b32.xlu0 %v2978, 127
        %v2984 = vpop.permute.xlu0 %2983
        %v2987 = vadd.f32 %v2875, %v2982
        %v2988 = vadd.f32 %v2876, %v2984
        %s2989 = sld [smem:[#allocation2 + $0x122]]
        %v2990 = vstv %s2989
        %v2991 = vmul.f32 %v2990, %v2431
        %v2992 = vmul.f32 %v2990, %v2432
        %2995 = vrot.lane.b32.xlu0 %v2991, 127
        %v2996 = vpop.permute.xlu0 %2995
        %2997 = vrot.lane.b32.xlu0 %v2992, 127
        %v2998 = vpop.permute.xlu0 %2997
        %v3001 = vadd.f32 %v2889, %v2996
        %v3002 = vadd.f32 %v2890, %v2998
        %s3003 = sld [smem:[#allocation2 + $0x1a2]]
        %v3004 = vstv %s3003
        %v3005 = vmul.f32 %v3004, %v2431
        %v3006 = vmul.f32 %v3004, %v2432
        %3009 = vrot.lane.b32.xlu0 %v3005, 127
        %v3010 = vpop.permute.xlu0 %3009
        %3011 = vrot.lane.b32.xlu0 %v3006, 127
        %v3012 = vpop.permute.xlu0 %3011
        %v3015 = vadd.f32 %v2903, %v3010
        %v3016 = vadd.f32 %v2904, %v3012
        %s3017 = sld [smem:[#allocation2 + $0x222]]
        %v3018 = vstv %s3017
        %v3019 = vmul.f32 %v3018, %v2431
        %v3020 = vmul.f32 %v3018, %v2432
        %3023 = vrot.lane.b32.xlu0 %v3019, 127
        %v3024 = vpop.permute.xlu0 %3023
        %3025 = vrot.lane.b32.xlu0 %v3020, 127
        %v3026 = vpop.permute.xlu0 %3025
        %v3029 = vadd.f32 %v2917, %v3024
        %v3030 = vadd.f32 %v2918, %v3026
        %s3031 = sld [smem:[#allocation2 + $0x2a2]]
        %v3032 = vstv %s3031
        %v3033 = vmul.f32 %v3032, %v2431
        %v3034 = vmul.f32 %v3032, %v2432
        %3037 = vrot.lane.b32.xlu0 %v3033, 127
        %v3038 = vpop.permute.xlu0 %3037
        %3039 = vrot.lane.b32.xlu0 %v3034, 127
        %v3040 = vpop.permute.xlu0 %3039
        %v3043 = vadd.f32 %v2931, %v3038
        %v3044 = vadd.f32 %v2932, %v3040
        %s3045 = sld [smem:[#allocation2 + $0x322]]
        %v3046 = vstv %s3045
        %v3047 = vmul.f32 %v3046, %v2431
        %v3048 = vmul.f32 %v3046, %v2432
        %3051 = vrot.lane.b32.xlu0 %v3047, 127
        %v3052 = vpop.permute.xlu0 %3051
        %3053 = vrot.lane.b32.xlu0 %v3048, 127
        %v3054 = vpop.permute.xlu0 %3053
        %v3057 = vadd.f32 %v2945, %v3052
        %v3058 = vadd.f32 %v2946, %v3054
        %s3059 = sld [smem:[#allocation2 + $0x3a2]]
        %v3060 = vstv %s3059
        %v3061 = vmul.f32 %v3060, %v2431
        %v3062 = vmul.f32 %v3060, %v2432
        %3065 = vrot.lane.b32.xlu0 %v3061, 127
        %v3066 = vpop.permute.xlu0 %3065
        %3067 = vrot.lane.b32.xlu0 %v3062, 127
        %v3068 = vpop.permute.xlu0 %3067
        %v3071 = vadd.f32 %v2959, %v3066
        %v3072 = vadd.f32 %v2960, %v3068
        %s3073 = sld [smem:[#allocation2 + $0x8]]
        %v3074 = vstv %s3073
        %v3075 = vmul.f32 %v3074, %v2425
        %v3076 = vmul.f32 %v3074, %v2426
        %3079 = vrot.lane.b32.xlu0 %v3075, 126
        %v3080 = vpop.permute.xlu0 %3079
        %3081 = vrot.lane.b32.xlu0 %v3076, 126
        %v3082 = vpop.permute.xlu0 %3081
        %v3085 = vadd.f32 %v2973, %v3080
        %v3086 = vadd.f32 %v2974, %v3082
        %s3087 = sld [smem:[#allocation2 + $0x88]]
        %v3088 = vstv %s3087
        %v3089 = vmul.f32 %v3088, %v2425
        %v3090 = vmul.f32 %v3088, %v2426
        %3093 = vrot.lane.b32.xlu0 %v3089, 126
        %v3094 = vpop.permute.xlu0 %3093
        %3095 = vrot.lane.b32.xlu0 %v3090, 126
        %v3096 = vpop.permute.xlu0 %3095
        %v3099 = vadd.f32 %v2987, %v3094
        %v3100 = vadd.f32 %v2988, %v3096
        %s3101 = sld [smem:[#allocation2 + $0x108]]
        %v3102 = vstv %s3101
        %v3103 = vmul.f32 %v3102, %v2425
        %v3104 = vmul.f32 %v3102, %v2426
        %3107 = vrot.lane.b32.xlu0 %v3103, 126
        %v3108 = vpop.permute.xlu0 %3107
        %3109 = vrot.lane.b32.xlu0 %v3104, 126
        %v3110 = vpop.permute.xlu0 %3109
        %v3113 = vadd.f32 %v3001, %v3108
        %v3114 = vadd.f32 %v3002, %v3110
        %s3115 = sld [smem:[#allocation2 + $0x188]]
        %v3116 = vstv %s3115
        %v3117 = vmul.f32 %v3116, %v2425
        %v3118 = vmul.f32 %v3116, %v2426
        %3121 = vrot.lane.b32.xlu0 %v3117, 126
        %v3122 = vpop.permute.xlu0 %3121
        %3123 = vrot.lane.b32.xlu0 %v3118, 126
        %v3124 = vpop.permute.xlu0 %3123
        %v3127 = vadd.f32 %v3015, %v3122
        %v3128 = vadd.f32 %v3016, %v3124
        %s3129 = sld [smem:[#allocation2 + $0x208]]
        %v3130 = vstv %s3129
        %v3131 = vmul.f32 %v3130, %v2425
        %v3132 = vmul.f32 %v3130, %v2426
        %3135 = vrot.lane.b32.xlu0 %v3131, 126
        %v3136 = vpop.permute.xlu0 %3135
        %3137 = vrot.lane.b32.xlu0 %v3132, 126
        %v3138 = vpop.permute.xlu0 %3137
        %v3141 = vadd.f32 %v3029, %v3136
        %v3142 = vadd.f32 %v3030, %v3138
        %s3143 = sld [smem:[#allocation2 + $0x288]]
        %v3144 = vstv %s3143
        %v3145 = vmul.f32 %v3144, %v2425
        %v3146 = vmul.f32 %v3144, %v2426
        %3149 = vrot.lane.b32.xlu0 %v3145, 126
        %v3150 = vpop.permute.xlu0 %3149
        %3151 = vrot.lane.b32.xlu0 %v3146, 126
        %v3152 = vpop.permute.xlu0 %3151
        %v3155 = vadd.f32 %v3043, %v3150
        %v3156 = vadd.f32 %v3044, %v3152
        %s3157 = sld [smem:[#allocation2 + $0x308]]
        %v3158 = vstv %s3157
        %v3159 = vmul.f32 %v3158, %v2425
        %v3160 = vmul.f32 %v3158, %v2426
        %3163 = vrot.lane.b32.xlu0 %v3159, 126
        %v3164 = vpop.permute.xlu0 %3163
        %3165 = vrot.lane.b32.xlu0 %v3160, 126
        %v3166 = vpop.permute.xlu0 %3165
        %v3169 = vadd.f32 %v3057, %v3164
        %v3170 = vadd.f32 %v3058, %v3166
        %s3171 = sld [smem:[#allocation2 + $0x388]]
        %v3172 = vstv %s3171
        %v3173 = vmul.f32 %v3172, %v2425
        %v3174 = vmul.f32 %v3172, %v2426
        %3177 = vrot.lane.b32.xlu0 %v3173, 126
        %v3178 = vpop.permute.xlu0 %3177
        %3179 = vrot.lane.b32.xlu0 %v3174, 126
        %v3180 = vpop.permute.xlu0 %3179
        %v3183 = vadd.f32 %v3071, %v3178
        %v3184 = vadd.f32 %v3072, %v3180
        %s3185 = sld [smem:[#allocation2 + $0x11]]
        %v3186 = vstv %s3185
        %v3187 = vmul.f32 %v3186, %v2427
        %v3188 = vmul.f32 %v3186, %v2428
        %3191 = vrot.lane.b32.xlu0 %v3187, 126
        %v3192 = vpop.permute.xlu0 %3191
        %3193 = vrot.lane.b32.xlu0 %v3188, 126
        %v3194 = vpop.permute.xlu0 %3193
        %v3197 = vadd.f32 %v3085, %v3192
        %v3198 = vadd.f32 %v3086, %v3194
        %s3199 = sld [smem:[#allocation2 + $0x91]]
        %v3200 = vstv %s3199
        %v3201 = vmul.f32 %v3200, %v2427
        %v3202 = vmul.f32 %v3200, %v2428
        %3205 = vrot.lane.b32.xlu0 %v3201, 126
        %v3206 = vpop.permute.xlu0 %3205
        %3207 = vrot.lane.b32.xlu0 %v3202, 126
        %v3208 = vpop.permute.xlu0 %3207
        %v3211 = vadd.f32 %v3099, %v3206
        %v3212 = vadd.f32 %v3100, %v3208
        %s3213 = sld [smem:[#allocation2 + $0x111]]
        %v3214 = vstv %s3213
        %v3215 = vmul.f32 %v3214, %v2427
        %v3216 = vmul.f32 %v3214, %v2428
        %3219 = vrot.lane.b32.xlu0 %v3215, 126
        %v3220 = vpop.permute.xlu0 %3219
        %3221 = vrot.lane.b32.xlu0 %v3216, 126
        %v3222 = vpop.permute.xlu0 %3221
        %v3225 = vadd.f32 %v3113, %v3220
        %v3226 = vadd.f32 %v3114, %v3222
        %s3227 = sld [smem:[#allocation2 + $0x191]]
        %v3228 = vstv %s3227
        %v3229 = vmul.f32 %v3228, %v2427
        %v3230 = vmul.f32 %v3228, %v2428
        %3233 = vrot.lane.b32.xlu0 %v3229, 126
        %v3234 = vpop.permute.xlu0 %3233
        %3235 = vrot.lane.b32.xlu0 %v3230, 126
        %v3236 = vpop.permute.xlu0 %3235
        %v3239 = vadd.f32 %v3127, %v3234
        %v3240 = vadd.f32 %v3128, %v3236
        %s3241 = sld [smem:[#allocation2 + $0x211]]
        %v3242 = vstv %s3241
        %v3243 = vmul.f32 %v3242, %v2427
        %v3244 = vmul.f32 %v3242, %v2428
        %3247 = vrot.lane.b32.xlu0 %v3243, 126
        %v3248 = vpop.permute.xlu0 %3247
        %3249 = vrot.lane.b32.xlu0 %v3244, 126
        %v3250 = vpop.permute.xlu0 %3249
        %v3253 = vadd.f32 %v3141, %v3248
        %v3254 = vadd.f32 %v3142, %v3250
        %s3255 = sld [smem:[#allocation2 + $0x291]]
        %v3256 = vstv %s3255
        %v3257 = vmul.f32 %v3256, %v2427
        %v3258 = vmul.f32 %v3256, %v2428
        %3261 = vrot.lane.b32.xlu0 %v3257, 126
        %v3262 = vpop.permute.xlu0 %3261
        %3263 = vrot.lane.b32.xlu0 %v3258, 126
        %v3264 = vpop.permute.xlu0 %3263
        %v3267 = vadd.f32 %v3155, %v3262
        %v3268 = vadd.f32 %v3156, %v3264
        %s3269 = sld [smem:[#allocation2 + $0x311]]
        %v3270 = vstv %s3269
        %v3271 = vmul.f32 %v3270, %v2427
        %v3272 = vmul.f32 %v3270, %v2428
        %3275 = vrot.lane.b32.xlu0 %v3271, 126
        %v3276 = vpop.permute.xlu0 %3275
        %3277 = vrot.lane.b32.xlu0 %v3272, 126
        %v3278 = vpop.permute.xlu0 %3277
        %v3281 = vadd.f32 %v3169, %v3276
        %v3282 = vadd.f32 %v3170, %v3278
        %s3283 = sld [smem:[#allocation2 + $0x391]]
        %v3284 = vstv %s3283
        %v3285 = vmul.f32 %v3284, %v2427
        %v3286 = vmul.f32 %v3284, %v2428
        %3289 = vrot.lane.b32.xlu0 %v3285, 126
        %v3290 = vpop.permute.xlu0 %3289
        %3291 = vrot.lane.b32.xlu0 %v3286, 126
        %v3292 = vpop.permute.xlu0 %3291
        %v3295 = vadd.f32 %v3183, %v3290
        %v3296 = vadd.f32 %v3184, %v3292
        %s3297 = sld [smem:[#allocation2 + $0x1a]]
        %v3298 = vstv %s3297
        %v3299 = vmul.f32 %v3298, %v2429
        %v3300 = vmul.f32 %v3298, %v2430
        %3303 = vrot.lane.b32.xlu0 %v3299, 126
        %v3304 = vpop.permute.xlu0 %3303
        %3305 = vrot.lane.b32.xlu0 %v3300, 126
        %v3306 = vpop.permute.xlu0 %3305
        %v3309 = vadd.f32 %v3197, %v3304
        %v3310 = vadd.f32 %v3198, %v3306
        %s3311 = sld [smem:[#allocation2 + $0x9a]]
        %v3312 = vstv %s3311
        %v3313 = vmul.f32 %v3312, %v2429
        %v3314 = vmul.f32 %v3312, %v2430
        %3317 = vrot.lane.b32.xlu0 %v3313, 126
        %v3318 = vpop.permute.xlu0 %3317
        %3319 = vrot.lane.b32.xlu0 %v3314, 126
        %v3320 = vpop.permute.xlu0 %3319
        %v3323 = vadd.f32 %v3211, %v3318
        %v3324 = vadd.f32 %v3212, %v3320
        %s3325 = sld [smem:[#allocation2 + $0x11a]]
        %v3326 = vstv %s3325
        %v3327 = vmul.f32 %v3326, %v2429
        %v3328 = vmul.f32 %v3326, %v2430
        %3331 = vrot.lane.b32.xlu0 %v3327, 126
        %v3332 = vpop.permute.xlu0 %3331
        %3333 = vrot.lane.b32.xlu0 %v3328, 126
        %v3334 = vpop.permute.xlu0 %3333
        %v3337 = vadd.f32 %v3225, %v3332
        %v3338 = vadd.f32 %v3226, %v3334
        %s3339 = sld [smem:[#allocation2 + $0x19a]]
        %v3340 = vstv %s3339
        %v3341 = vmul.f32 %v3340, %v2429
        %v3342 = vmul.f32 %v3340, %v2430
        %3345 = vrot.lane.b32.xlu0 %v3341, 126
        %v3346 = vpop.permute.xlu0 %3345
        %3347 = vrot.lane.b32.xlu0 %v3342, 126
        %v3348 = vpop.permute.xlu0 %3347
        %v3351 = vadd.f32 %v3239, %v3346
        %v3352 = vadd.f32 %v3240, %v3348
        %s3353 = sld [smem:[#allocation2 + $0x21a]]
        %v3354 = vstv %s3353
        %v3355 = vmul.f32 %v3354, %v2429
        %v3356 = vmul.f32 %v3354, %v2430
        %3359 = vrot.lane.b32.xlu0 %v3355, 126
        %v3360 = vpop.permute.xlu0 %3359
        %3361 = vrot.lane.b32.xlu0 %v3356, 126
        %v3362 = vpop.permute.xlu0 %3361
        %v3365 = vadd.f32 %v3253, %v3360
        %v3366 = vadd.f32 %v3254, %v3362
        %s3367 = sld [smem:[#allocation2 + $0x29a]]
        %v3368 = vstv %s3367
        %v3369 = vmul.f32 %v3368, %v2429
        %v3370 = vmul.f32 %v3368, %v2430
        %3373 = vrot.lane.b32.xlu0 %v3369, 126
        %v3374 = vpop.permute.xlu0 %3373
        %3375 = vrot.lane.b32.xlu0 %v3370, 126
        %v3376 = vpop.permute.xlu0 %3375
        %v3379 = vadd.f32 %v3267, %v3374
        %v3380 = vadd.f32 %v3268, %v3376
        %s3381 = sld [smem:[#allocation2 + $0x31a]]
        %v3382 = vstv %s3381
        %v3383 = vmul.f32 %v3382, %v2429
        %v3384 = vmul.f32 %v3382, %v2430
        %3387 = vrot.lane.b32.xlu0 %v3383, 126
        %v3388 = vpop.permute.xlu0 %3387
        %3389 = vrot.lane.b32.xlu0 %v3384, 126
        %v3390 = vpop.permute.xlu0 %3389
        %v3393 = vadd.f32 %v3281, %v3388
        %v3394 = vadd.f32 %v3282, %v3390
        %s3395 = sld [smem:[#allocation2 + $0x39a]]
        %v3396 = vstv %s3395
        %v3397 = vmul.f32 %v3396, %v2429
        %v3398 = vmul.f32 %v3396, %v2430
        %3401 = vrot.lane.b32.xlu0 %v3397, 126
        %v3402 = vpop.permute.xlu0 %3401
        %3403 = vrot.lane.b32.xlu0 %v3398, 126
        %v3404 = vpop.permute.xlu0 %3403
        %v3407 = vadd.f32 %v3295, %v3402
        %v3408 = vadd.f32 %v3296, %v3404
        %s3409 = sld [smem:[#allocation2 + $0x23]]
        %v3410 = vstv %s3409
        %v3411 = vmul.f32 %v3410, %v2431
        %v3412 = vmul.f32 %v3410, %v2432
        %3415 = vrot.lane.b32.xlu0 %v3411, 126
        %v3416 = vpop.permute.xlu0 %3415
        %3417 = vrot.lane.b32.xlu0 %v3412, 126
        %v3418 = vpop.permute.xlu0 %3417
        %v3421 = vadd.f32 %v3309, %v3416
        %v3422 = vadd.f32 %v3310, %v3418
        %s3423 = sld [smem:[#allocation2 + $0xa3]]
        %v3424 = vstv %s3423
        %v3425 = vmul.f32 %v3424, %v2431
        %v3426 = vmul.f32 %v3424, %v2432
        %3429 = vrot.lane.b32.xlu0 %v3425, 126
        %v3430 = vpop.permute.xlu0 %3429
        %3431 = vrot.lane.b32.xlu0 %v3426, 126
        %v3432 = vpop.permute.xlu0 %3431
        %v3435 = vadd.f32 %v3323, %v3430
        %v3436 = vadd.f32 %v3324, %v3432
        %s3437 = sld [smem:[#allocation2 + $0x123]]
        %v3438 = vstv %s3437
        %v3439 = vmul.f32 %v3438, %v2431
        %v3440 = vmul.f32 %v3438, %v2432
        %3443 = vrot.lane.b32.xlu0 %v3439, 126
        %v3444 = vpop.permute.xlu0 %3443
        %3445 = vrot.lane.b32.xlu0 %v3440, 126
        %v3446 = vpop.permute.xlu0 %3445
        %v3449 = vadd.f32 %v3337, %v3444
        %v3450 = vadd.f32 %v3338, %v3446
        %s3451 = sld [smem:[#allocation2 + $0x1a3]]
        %v3452 = vstv %s3451
        %v3453 = vmul.f32 %v3452, %v2431
        %v3454 = vmul.f32 %v3452, %v2432
        %3457 = vrot.lane.b32.xlu0 %v3453, 126
        %v3458 = vpop.permute.xlu0 %3457
        %3459 = vrot.lane.b32.xlu0 %v3454, 126
        %v3460 = vpop.permute.xlu0 %3459
        %v3463 = vadd.f32 %v3351, %v3458
        %v3464 = vadd.f32 %v3352, %v3460
        %s3465 = sld [smem:[#allocation2 + $0x223]]
        %v3466 = vstv %s3465
        %v3467 = vmul.f32 %v3466, %v2431
        %v3468 = vmul.f32 %v3466, %v2432
        %3471 = vrot.lane.b32.xlu0 %v3467, 126
        %v3472 = vpop.permute.xlu0 %3471
        %3473 = vrot.lane.b32.xlu0 %v3468, 126
        %v3474 = vpop.permute.xlu0 %3473
        %v3477 = vadd.f32 %v3365, %v3472
        %v3478 = vadd.f32 %v3366, %v3474
        %s3479 = sld [smem:[#allocation2 + $0x2a3]]
        %v3480 = vstv %s3479
        %v3481 = vmul.f32 %v3480, %v2431
        %v3482 = vmul.f32 %v3480, %v2432
        %3485 = vrot.lane.b32.xlu0 %v3481, 126
        %v3486 = vpop.permute.xlu0 %3485
        %3487 = vrot.lane.b32.xlu0 %v3482, 126
        %v3488 = vpop.permute.xlu0 %3487
        %v3491 = vadd.f32 %v3379, %v3486
        %v3492 = vadd.f32 %v3380, %v3488
        %s3493 = sld [smem:[#allocation2 + $0x323]]
        %v3494 = vstv %s3493
        %v3495 = vmul.f32 %v3494, %v2431
        %v3496 = vmul.f32 %v3494, %v2432
        %3499 = vrot.lane.b32.xlu0 %v3495, 126
        %v3500 = vpop.permute.xlu0 %3499
        %3501 = vrot.lane.b32.xlu0 %v3496, 126
        %v3502 = vpop.permute.xlu0 %3501
        %v3505 = vadd.f32 %v3393, %v3500
        %v3506 = vadd.f32 %v3394, %v3502
        %s3507 = sld [smem:[#allocation2 + $0x3a3]]
        %v3508 = vstv %s3507
        %v3509 = vmul.f32 %v3508, %v2431
        %v3510 = vmul.f32 %v3508, %v2432
        %3513 = vrot.lane.b32.xlu0 %v3509, 126
        %v3514 = vpop.permute.xlu0 %3513
        %3515 = vrot.lane.b32.xlu0 %v3510, 126
        %v3516 = vpop.permute.xlu0 %3515
        %v3519 = vadd.f32 %v3407, %v3514
        %v3520 = vadd.f32 %v3408, %v3516
        %s3521 = sld [smem:[#allocation5]]
        %v3522 = vstv %s3521
        %v3523 = vadd.f32 %v3421, %v3522
        %v3524 = vadd.f32 %v3422, %v3522
        %v3525 = vmax.f32 %v3523, 0.0
        %v3526 = vmax.f32 %v3524, 0.0
        %s3527 = sld [smem:[#allocation5 + $0x1]]
        %v3528 = vstv %s3527
        %v3529 = vadd.f32 %v3435, %v3528
        %v3530 = vadd.f32 %v3436, %v3528
        %v3531 = vmax.f32 %v3529, 0.0
        %v3532 = vmax.f32 %v3530, 0.0
        %s3533 = sld [smem:[#allocation5 + $0x2]]
        %v3534 = vstv %s3533
        %v3535 = vadd.f32 %v3449, %v3534
        %v3536 = vadd.f32 %v3450, %v3534
        %v3537 = vmax.f32 %v3535, 0.0
        %v3538 = vmax.f32 %v3536, 0.0
        %s3539 = sld [smem:[#allocation5 + $0x3]]
        %v3540 = vstv %s3539
        %v3541 = vadd.f32 %v3463, %v3540
        %v3542 = vadd.f32 %v3464, %v3540
        %v3543 = vmax.f32 %v3541, 0.0
        %v3544 = vmax.f32 %v3542, 0.0
        %s3545 = sld [smem:[#allocation5 + $0x4]]
        %v3546 = vstv %s3545
        %v3547 = vadd.f32 %v3477, %v3546
        %v3548 = vadd.f32 %v3478, %v3546
        %v3549 = vmax.f32 %v3547, 0.0
        %v3550 = vmax.f32 %v3548, 0.0
        %s3551 = sld [smem:[#allocation5 + $0x5]]
        %v3552 = vstv %s3551
        %v3553 = vadd.f32 %v3491, %v3552
        %v3554 = vadd.f32 %v3492, %v3552
        %v3555 = vmax.f32 %v3553, 0.0
        %v3556 = vmax.f32 %v3554, 0.0
        %s3557 = sld [smem:[#allocation5 + $0x6]]
        %v3558 = vstv %s3557
        %v3559 = vadd.f32 %v3505, %v3558
        %v3560 = vadd.f32 %v3506, %v3558
        %v3561 = vmax.f32 %v3559, 0.0
        %v3562 = vmax.f32 %v3560, 0.0
        %s3563 = sld [smem:[#allocation5 + $0x7]]
        %v3564 = vstv %s3563
        %v3565 = vadd.f32 %v3519, %v3564
        %v3566 = vadd.f32 %v3520, %v3564
        %v3567 = vmax.f32 %v3565, 0.0
        %v3568 = vmax.f32 %v3566, 0.0
        %v3569 = vlaneseq
        %v3570 = vand.u32 %v3569, 127
        %v3571 = vld [vmem:[%s4] sm:$0x1]
        %v3572 = vld [vmem:[%s3] sm:$0xff]
        %v3573 = vld [vmem:[%s3 + $0x8] sm:$0x3f]
        %v3574 = vld [vmem:[%s3 + $0x10] sm:$0xff]
        %v3575 = vld [vmem:[%s3 + $0x18] sm:$0x3f]
        %v3576 = vld [vmem:[%s3 + $0x20] sm:$0xff]
        %v3577 = vld [vmem:[%s3 + $0x28] sm:$0x3f]
        %v3578 = vld [vmem:[%s3 + $0x30] sm:$0xff]
        %v3579 = vld [vmem:[%s3 + $0x38] sm:$0x3f]
        %v3580 = vld [vmem:[%s3 + $0x40] sm:$0xff]
        %v3581 = vld [vmem:[%s3 + $0x48] sm:$0x3f]
        %v3582 = vld [vmem:[%s3 + $0x50] sm:$0xff]
        %v3583 = vld [vmem:[%s3 + $0x58] sm:$0x3f]
        %v3584 = vld [vmem:[%s3 + $0x60] sm:$0xff]
        %v3585 = vld [vmem:[%s3 + $0x68] sm:$0x3f]
        %v3586 = vld [vmem:[%s3 + $0x70] sm:$0xff]
        %v3587 = vld [vmem:[%s3 + $0x78] sm:$0x3f]
        %v3588 = vmul.f32 %v3525, %v3572
        %v3589 = vmul.f32 %v3526, %v3573
        %v3590 = vmul.f32 %v3531, %v3574
        %v3591 = vmul.f32 %v3532, %v3575
        %v3592 = vadd.f32 %v3588, %v3590
        %v3593 = vadd.f32 %v3589, %v3591
        %v3594 = vmul.f32 %v3537, %v3576
        %v3595 = vmul.f32 %v3538, %v3577
        %v3596 = vadd.f32 %v3592, %v3594
        %v3597 = vadd.f32 %v3593, %v3595
        %v3598 = vmul.f32 %v3543, %v3578
        %v3599 = vmul.f32 %v3544, %v3579
        %v3600 = vadd.f32 %v3596, %v3598
        %v3601 = vadd.f32 %v3597, %v3599
        %v3602 = vmul.f32 %v3549, %v3580
        %v3603 = vmul.f32 %v3550, %v3581
        %v3604 = vadd.f32 %v3600, %v3602
        %v3605 = vadd.f32 %v3601, %v3603
        %v3606 = vmul.f32 %v3555, %v3582
        %v3607 = vmul.f32 %v3556, %v3583
        %v3608 = vadd.f32 %v3604, %v3606
        %v3609 = vadd.f32 %v3605, %v3607
        %v3610 = vmul.f32 %v3561, %v3584
        %v3611 = vmul.f32 %v3562, %v3585
        %v3612 = vadd.f32 %v3608, %v3610
        %v3613 = vadd.f32 %v3609, %v3611
        %v3614 = vmul.f32 %v3567, %v3586
        %v3615 = vmul.f32 %v3568, %v3587
        %v3616 = vadd.f32 %v3612, %v3614
        %v3617 = vadd.f32 %v3613, %v3615
        %vm3618 = vcmask 113664
        %v3619 = vsel %vm3618, %v3616, 0.0
        %3620 = vadd.xlane.f32.xlu0 %v3619
        %v3621 = vpop.xlane.xlu0 %3620
        %vm3622 = vcmask 111616
        %v3623 = vsel %vm3622, %v3617, 0.0
        %3624 = vadd.xlane.f32.xlu0 %v3623
        %v3625 = vpop.xlane.xlu0 %3624
        %vm3626 = vcmask 1045504
        %v3627 = vsel %vm3626, %v3625, 0.0
        %v3628 = vadd.f32 %v3621, %v3627
        %v3629 = vrot.slane %v3628, 4
        %v3630 = vadd.f32 %v3628, %v3629
        %v3631 = vrot.slane %v3630, 2
        %v3632 = vadd.f32 %v3630, %v3631
        %v3633 = vrot.slane %v3632, 1
        %v3634 = vadd.f32 %v3632, %v3633
        %vm3635 = vcmp.eq.s32.totalorder %v3570, 0
        %v3636 = vsel %vm3635, %v3634, 0.0
        %v3637 = vadd.f32 %v3571, %v3636
        %s3638 = scalar_lea.vmem %s3, 128
        %v3639 = vld [vmem:[%s3638] sm:$0xff]
        %v3640 = vld [vmem:[%s3638 + $0x8] sm:$0x3f]
        %v3641 = vld [vmem:[%s3638 + $0x10] sm:$0xff]
        %v3642 = vld [vmem:[%s3638 + $0x18] sm:$0x3f]
        %v3643 = vld [vmem:[%s3638 + $0x20] sm:$0xff]
        %v3644 = vld [vmem:[%s3638 + $0x28] sm:$0x3f]
        %v3645 = vld [vmem:[%s3638 + $0x30] sm:$0xff]
        %v3646 = vld [vmem:[%s3638 + $0x38] sm:$0x3f]
        %v3647 = vld [vmem:[%s3638 + $0x40] sm:$0xff]
        %v3648 = vld [vmem:[%s3638 + $0x48] sm:$0x3f]
        %v3649 = vld [vmem:[%s3638 + $0x50] sm:$0xff]
        %v3650 = vld [vmem:[%s3638 + $0x58] sm:$0x3f]
        %v3651 = vld [vmem:[%s3638 + $0x60] sm:$0xff]
        %v3652 = vld [vmem:[%s3638 + $0x68] sm:$0x3f]
        %v3653 = vld [vmem:[%s3638 + $0x70] sm:$0xff]
        %v3654 = vld [vmem:[%s3638 + $0x78] sm:$0x3f]
        %v3655 = vmul.f32 %v3525, %v3639
        %v3656 = vmul.f32 %v3526, %v3640
        %v3657 = vmul.f32 %v3531, %v3641
        %v3658 = vmul.f32 %v3532, %v3642
        %v3659 = vadd.f32 %v3655, %v3657
        %v3660 = vadd.f32 %v3656, %v3658
        %v3661 = vmul.f32 %v3537, %v3643
        %v3662 = vmul.f32 %v3538, %v3644
        %v3663 = vadd.f32 %v3659, %v3661
        %v3664 = vadd.f32 %v3660, %v3662
        %v3665 = vmul.f32 %v3543, %v3645
        %v3666 = vmul.f32 %v3544, %v3646
        %v3667 = vadd.f32 %v3663, %v3665
        %v3668 = vadd.f32 %v3664, %v3666
        %v3669 = vmul.f32 %v3549, %v3647
        %v3670 = vmul.f32 %v3550, %v3648
        %v3671 = vadd.f32 %v3667, %v3669
        %v3672 = vadd.f32 %v3668, %v3670
        %v3673 = vmul.f32 %v3555, %v3649
        %v3674 = vmul.f32 %v3556, %v3650
        %v3675 = vadd.f32 %v3671, %v3673
        %v3676 = vadd.f32 %v3672, %v3674
        %v3677 = vmul.f32 %v3561, %v3651
        %v3678 = vmul.f32 %v3562, %v3652
        %v3679 = vadd.f32 %v3675, %v3677
        %v3680 = vadd.f32 %v3676, %v3678
        %v3681 = vmul.f32 %v3567, %v3653
        %v3682 = vmul.f32 %v3568, %v3654
        %v3683 = vadd.f32 %v3679, %v3681
        %v3684 = vadd.f32 %v3680, %v3682
        %v3685 = vsel %vm3618, %v3683, 0.0
        %3686 = vadd.xlane.f32.xlu0 %v3685
        %v3687 = vpop.xlane.xlu0 %3686
        %v3688 = vsel %vm3622, %v3684, 0.0
        %3689 = vadd.xlane.f32.xlu0 %v3688
        %v3690 = vpop.xlane.xlu0 %3689
        %v3691 = vsel %vm3626, %v3690, 0.0
        %v3692 = vadd.f32 %v3687, %v3691
        %v3693 = vrot.slane %v3692, 4
        %v3694 = vadd.f32 %v3692, %v3693
        %v3695 = vrot.slane %v3694, 2
        %v3696 = vadd.f32 %v3694, %v3695
        %v3697 = vrot.slane %v3696, 1
        %v3698 = vadd.f32 %v3696, %v3697
        %vm3699 = vcmp.eq.s32.totalorder %v3570, 1
        %v3700 = vsel %vm3699, %v3698, 0.0
        %v3701 = vadd.f32 %v3637, %v3700
        %s3702 = scalar_lea.vmem %s3, 256
        %v3703 = vld [vmem:[%s3702] sm:$0xff]
        %v3704 = vld [vmem:[%s3702 + $0x8] sm:$0x3f]
        %v3705 = vld [vmem:[%s3702 + $0x10] sm:$0xff]
        %v3706 = vld [vmem:[%s3702 + $0x18] sm:$0x3f]
        %v3707 = vld [vmem:[%s3702 + $0x20] sm:$0xff]
        %v3708 = vld [vmem:[%s3702 + $0x28] sm:$0x3f]
        %v3709 = vld [vmem:[%s3702 + $0x30] sm:$0xff]
        %v3710 = vld [vmem:[%s3702 + $0x38] sm:$0x3f]
        %v3711 = vld [vmem:[%s3702 + $0x40] sm:$0xff]
        %v3712 = vld [vmem:[%s3702 + $0x48] sm:$0x3f]
        %v3713 = vld [vmem:[%s3702 + $0x50] sm:$0xff]
        %v3714 = vld [vmem:[%s3702 + $0x58] sm:$0x3f]
        %v3715 = vld [vmem:[%s3702 + $0x60] sm:$0xff]
        %v3716 = vld [vmem:[%s3702 + $0x68] sm:$0x3f]
        %v3717 = vld [vmem:[%s3702 + $0x70] sm:$0xff]
        %v3718 = vld [vmem:[%s3702 + $0x78] sm:$0x3f]
        %v3719 = vmul.f32 %v3525, %v3703
        %v3720 = vmul.f32 %v3526, %v3704
        %v3721 = vmul.f32 %v3531, %v3705
        %v3722 = vmul.f32 %v3532, %v3706
        %v3723 = vadd.f32 %v3719, %v3721
        %v3724 = vadd.f32 %v3720, %v3722
        %v3725 = vmul.f32 %v3537, %v3707
        %v3726 = vmul.f32 %v3538, %v3708
        %v3727 = vadd.f32 %v3723, %v3725
        %v3728 = vadd.f32 %v3724, %v3726
        %v3729 = vmul.f32 %v3543, %v3709
        %v3730 = vmul.f32 %v3544, %v3710
        %v3731 = vadd.f32 %v3727, %v3729
        %v3732 = vadd.f32 %v3728, %v3730
        %v3733 = vmul.f32 %v3549, %v3711
        %v3734 = vmul.f32 %v3550, %v3712
        %v3735 = vadd.f32 %v3731, %v3733
        %v3736 = vadd.f32 %v3732, %v3734
        %v3737 = vmul.f32 %v3555, %v3713
        %v3738 = vmul.f32 %v3556, %v3714
        %v3739 = vadd.f32 %v3735, %v3737
        %v3740 = vadd.f32 %v3736, %v3738
        %v3741 = vmul.f32 %v3561, %v3715
        %v3742 = vmul.f32 %v3562, %v3716
        %v3743 = vadd.f32 %v3739, %v3741
        %v3744 = vadd.f32 %v3740, %v3742
        %v3745 = vmul.f32 %v3567, %v3717
        %v3746 = vmul.f32 %v3568, %v3718
        %v3747 = vadd.f32 %v3743, %v3745
        %v3748 = vadd.f32 %v3744, %v3746
        %v3749 = vsel %vm3618, %v3747, 0.0
        %3750 = vadd.xlane.f32.xlu0 %v3749
        %v3751 = vpop.xlane.xlu0 %3750
        %v3752 = vsel %vm3622, %v3748, 0.0
        %3753 = vadd.xlane.f32.xlu0 %v3752
        %v3754 = vpop.xlane.xlu0 %3753
        %v3755 = vsel %vm3626, %v3754, 0.0
        %v3756 = vadd.f32 %v3751, %v3755
        %v3757 = vrot.slane %v3756, 4
        %v3758 = vadd.f32 %v3756, %v3757
        %v3759 = vrot.slane %v3758, 2
        %v3760 = vadd.f32 %v3758, %v3759
        %v3761 = vrot.slane %v3760, 1
        %v3762 = vadd.f32 %v3760, %v3761
        %vm3763 = vcmp.eq.s32.totalorder %v3570, 2
        %v3764 = vsel %vm3763, %v3762, 0.0
        %v3765 = vadd.f32 %v3701, %v3764
        %s3766 = scalar_lea.vmem %s3, 384
        %v3767 = vld [vmem:[%s3766] sm:$0xff]
        %v3768 = vld [vmem:[%s3766 + $0x8] sm:$0x3f]
        %v3769 = vld [vmem:[%s3766 + $0x10] sm:$0xff]
        %v3770 = vld [vmem:[%s3766 + $0x18] sm:$0x3f]
        %v3771 = vld [vmem:[%s3766 + $0x20] sm:$0xff]
        %v3772 = vld [vmem:[%s3766 + $0x28] sm:$0x3f]
        %v3773 = vld [vmem:[%s3766 + $0x30] sm:$0xff]
        %v3774 = vld [vmem:[%s3766 + $0x38] sm:$0x3f]
        %v3775 = vld [vmem:[%s3766 + $0x40] sm:$0xff]
        %v3776 = vld [vmem:[%s3766 + $0x48] sm:$0x3f]
        %v3777 = vld [vmem:[%s3766 + $0x50] sm:$0xff]
        %v3778 = vld [vmem:[%s3766 + $0x58] sm:$0x3f]
        %v3779 = vld [vmem:[%s3766 + $0x60] sm:$0xff]
        %v3780 = vld [vmem:[%s3766 + $0x68] sm:$0x3f]
        %v3781 = vld [vmem:[%s3766 + $0x70] sm:$0xff]
        %v3782 = vld [vmem:[%s3766 + $0x78] sm:$0x3f]
        %v3783 = vmul.f32 %v3525, %v3767
        %v3784 = vmul.f32 %v3526, %v3768
        %v3785 = vmul.f32 %v3531, %v3769
        %v3786 = vmul.f32 %v3532, %v3770
        %v3787 = vadd.f32 %v3783, %v3785
        %v3788 = vadd.f32 %v3784, %v3786
        %v3789 = vmul.f32 %v3537, %v3771
        %v3790 = vmul.f32 %v3538, %v3772
        %v3791 = vadd.f32 %v3787, %v3789
        %v3792 = vadd.f32 %v3788, %v3790
        %v3793 = vmul.f32 %v3543, %v3773
        %v3794 = vmul.f32 %v3544, %v3774
        %v3795 = vadd.f32 %v3791, %v3793
        %v3796 = vadd.f32 %v3792, %v3794
        %v3797 = vmul.f32 %v3549, %v3775
        %v3798 = vmul.f32 %v3550, %v3776
        %v3799 = vadd.f32 %v3795, %v3797
        %v3800 = vadd.f32 %v3796, %v3798
        %v3801 = vmul.f32 %v3555, %v3777
        %v3802 = vmul.f32 %v3556, %v3778
        %v3803 = vadd.f32 %v3799, %v3801
        %v3804 = vadd.f32 %v3800, %v3802
        %v3805 = vmul.f32 %v3561, %v3779
        %v3806 = vmul.f32 %v3562, %v3780
        %v3807 = vadd.f32 %v3803, %v3805
        %v3808 = vadd.f32 %v3804, %v3806
        %v3809 = vmul.f32 %v3567, %v3781
        %v3810 = vmul.f32 %v3568, %v3782
        %v3811 = vadd.f32 %v3807, %v3809
        %v3812 = vadd.f32 %v3808, %v3810
        %v3813 = vsel %vm3618, %v3811, 0.0
        %3814 = vadd.xlane.f32.xlu0 %v3813
        %v3815 = vpop.xlane.xlu0 %3814
        %v3816 = vsel %vm3622, %v3812, 0.0
        %3817 = vadd.xlane.f32.xlu0 %v3816
        %v3818 = vpop.xlane.xlu0 %3817
        %v3819 = vsel %vm3626, %v3818, 0.0
        %v3820 = vadd.f32 %v3815, %v3819
        %v3821 = vrot.slane %v3820, 4
        %v3822 = vadd.f32 %v3820, %v3821
        %v3823 = vrot.slane %v3822, 2
        %v3824 = vadd.f32 %v3822, %v3823
        %v3825 = vrot.slane %v3824, 1
        %v3826 = vadd.f32 %v3824, %v3825
        %vm3827 = vcmp.eq.s32.totalorder %v3570, 3
        %v3828 = vsel %vm3827, %v3826, 0.0
        %v3829 = vadd.f32 %v3765, %v3828
        %s3830 = scalar_lea.vmem %s3, 512
        %v3831 = vld [vmem:[%s3830] sm:$0xff]
        %v3832 = vld [vmem:[%s3830 + $0x8] sm:$0x3f]
        %v3833 = vld [vmem:[%s3830 + $0x10] sm:$0xff]
        %v3834 = vld [vmem:[%s3830 + $0x18] sm:$0x3f]
        %v3835 = vld [vmem:[%s3830 + $0x20] sm:$0xff]
        %v3836 = vld [vmem:[%s3830 + $0x28] sm:$0x3f]
        %v3837 = vld [vmem:[%s3830 + $0x30] sm:$0xff]
        %v3838 = vld [vmem:[%s3830 + $0x38] sm:$0x3f]
        %v3839 = vld [vmem:[%s3830 + $0x40] sm:$0xff]
        %v3840 = vld [vmem:[%s3830 + $0x48] sm:$0x3f]
        %v3841 = vld [vmem:[%s3830 + $0x50] sm:$0xff]
        %v3842 = vld [vmem:[%s3830 + $0x58] sm:$0x3f]
        %v3843 = vld [vmem:[%s3830 + $0x60] sm:$0xff]
        %v3844 = vld [vmem:[%s3830 + $0x68] sm:$0x3f]
        %v3845 = vld [vmem:[%s3830 + $0x70] sm:$0xff]
        %v3846 = vld [vmem:[%s3830 + $0x78] sm:$0x3f]
        %v3847 = vmul.f32 %v3525, %v3831
        %v3848 = vmul.f32 %v3526, %v3832
        %v3849 = vmul.f32 %v3531, %v3833
        %v3850 = vmul.f32 %v3532, %v3834
        %v3851 = vadd.f32 %v3847, %v3849
        %v3852 = vadd.f32 %v3848, %v3850
        %v3853 = vmul.f32 %v3537, %v3835
        %v3854 = vmul.f32 %v3538, %v3836
        %v3855 = vadd.f32 %v3851, %v3853
        %v3856 = vadd.f32 %v3852, %v3854
        %v3857 = vmul.f32 %v3543, %v3837
        %v3858 = vmul.f32 %v3544, %v3838
        %v3859 = vadd.f32 %v3855, %v3857
        %v3860 = vadd.f32 %v3856, %v3858
        %v3861 = vmul.f32 %v3549, %v3839
        %v3862 = vmul.f32 %v3550, %v3840
        %v3863 = vadd.f32 %v3859, %v3861
        %v3864 = vadd.f32 %v3860, %v3862
        %v3865 = vmul.f32 %v3555, %v3841
        %v3866 = vmul.f32 %v3556, %v3842
        %v3867 = vadd.f32 %v3863, %v3865
        %v3868 = vadd.f32 %v3864, %v3866
        %v3869 = vmul.f32 %v3561, %v3843
        %v3870 = vmul.f32 %v3562, %v3844
        %v3871 = vadd.f32 %v3867, %v3869
        %v3872 = vadd.f32 %v3868, %v3870
        %v3873 = vmul.f32 %v3567, %v3845
        %v3874 = vmul.f32 %v3568, %v3846
        %v3875 = vadd.f32 %v3871, %v3873
        %v3876 = vadd.f32 %v3872, %v3874
        %v3877 = vsel %vm3618, %v3875, 0.0
        %3878 = vadd.xlane.f32.xlu0 %v3877
        %v3879 = vpop.xlane.xlu0 %3878
        %v3880 = vsel %vm3622, %v3876, 0.0
        %3881 = vadd.xlane.f32.xlu0 %v3880
        %v3882 = vpop.xlane.xlu0 %3881
        %v3883 = vsel %vm3626, %v3882, 0.0
        %v3884 = vadd.f32 %v3879, %v3883
        %v3885 = vrot.slane %v3884, 4
        %v3886 = vadd.f32 %v3884, %v3885
        %v3887 = vrot.slane %v3886, 2
        %v3888 = vadd.f32 %v3886, %v3887
        %v3889 = vrot.slane %v3888, 1
        %v3890 = vadd.f32 %v3888, %v3889
        %vm3891 = vcmp.eq.s32.totalorder %v3570, 4
        %v3892 = vsel %vm3891, %v3890, 0.0
        %v3893 = vadd.f32 %v3829, %v3892
        %s3894 = scalar_lea.vmem %s3, 640
        %v3895 = vld [vmem:[%s3894] sm:$0xff]
        %v3896 = vld [vmem:[%s3894 + $0x8] sm:$0x3f]
        %v3897 = vld [vmem:[%s3894 + $0x10] sm:$0xff]
        %v3898 = vld [vmem:[%s3894 + $0x18] sm:$0x3f]
        %v3899 = vld [vmem:[%s3894 + $0x20] sm:$0xff]
        %v3900 = vld [vmem:[%s3894 + $0x28] sm:$0x3f]
        %v3901 = vld [vmem:[%s3894 + $0x30] sm:$0xff]
        %v3902 = vld [vmem:[%s3894 + $0x38] sm:$0x3f]
        %v3903 = vld [vmem:[%s3894 + $0x40] sm:$0xff]
        %v3904 = vld [vmem:[%s3894 + $0x48] sm:$0x3f]
        %v3905 = vld [vmem:[%s3894 + $0x50] sm:$0xff]
        %v3906 = vld [vmem:[%s3894 + $0x58] sm:$0x3f]
        %v3907 = vld [vmem:[%s3894 + $0x60] sm:$0xff]
        %v3908 = vld [vmem:[%s3894 + $0x68] sm:$0x3f]
        %v3909 = vld [vmem:[%s3894 + $0x70] sm:$0xff]
        %v3910 = vld [vmem:[%s3894 + $0x78] sm:$0x3f]
        %v3911 = vmul.f32 %v3525, %v3895
        %v3912 = vmul.f32 %v3526, %v3896
        %v3913 = vmul.f32 %v3531, %v3897
        %v3914 = vmul.f32 %v3532, %v3898
        %v3915 = vadd.f32 %v3911, %v3913
        %v3916 = vadd.f32 %v3912, %v3914
        %v3917 = vmul.f32 %v3537, %v3899
        %v3918 = vmul.f32 %v3538, %v3900
        %v3919 = vadd.f32 %v3915, %v3917
        %v3920 = vadd.f32 %v3916, %v3918
        %v3921 = vmul.f32 %v3543, %v3901
        %v3922 = vmul.f32 %v3544, %v3902
        %v3923 = vadd.f32 %v3919, %v3921
        %v3924 = vadd.f32 %v3920, %v3922
        %v3925 = vmul.f32 %v3549, %v3903
        %v3926 = vmul.f32 %v3550, %v3904
        %v3927 = vadd.f32 %v3923, %v3925
        %v3928 = vadd.f32 %v3924, %v3926
        %v3929 = vmul.f32 %v3555, %v3905
        %v3930 = vmul.f32 %v3556, %v3906
        %v3931 = vadd.f32 %v3927, %v3929
        %v3932 = vadd.f32 %v3928, %v3930
        %v3933 = vmul.f32 %v3561, %v3907
        %v3934 = vmul.f32 %v3562, %v3908
        %v3935 = vadd.f32 %v3931, %v3933
        %v3936 = vadd.f32 %v3932, %v3934
        %v3937 = vmul.f32 %v3567, %v3909
        %v3938 = vmul.f32 %v3568, %v3910
        %v3939 = vadd.f32 %v3935, %v3937
        %v3940 = vadd.f32 %v3936, %v3938
        %v3941 = vsel %vm3618, %v3939, 0.0
        %3942 = vadd.xlane.f32.xlu0 %v3941
        %v3943 = vpop.xlane.xlu0 %3942
        %v3944 = vsel %vm3622, %v3940, 0.0
        %3945 = vadd.xlane.f32.xlu0 %v3944
        %v3946 = vpop.xlane.xlu0 %3945
        %v3947 = vsel %vm3626, %v3946, 0.0
        %v3948 = vadd.f32 %v3943, %v3947
        %v3949 = vrot.slane %v3948, 4
        %v3950 = vadd.f32 %v3948, %v3949
        %v3951 = vrot.slane %v3950, 2
        %v3952 = vadd.f32 %v3950, %v3951
        %v3953 = vrot.slane %v3952, 1
        %v3954 = vadd.f32 %v3952, %v3953
        %vm3955 = vcmp.eq.s32.totalorder %v3570, 5
        %v3956 = vsel %vm3955, %v3954, 0.0
        %v3957 = vadd.f32 %v3893, %v3956
        %s3958 = scalar_lea.vmem %s3, 768
        %v3959 = vld [vmem:[%s3958] sm:$0xff]
        %v3960 = vld [vmem:[%s3958 + $0x8] sm:$0x3f]
        %v3961 = vld [vmem:[%s3958 + $0x10] sm:$0xff]
        %v3962 = vld [vmem:[%s3958 + $0x18] sm:$0x3f]
        %v3963 = vld [vmem:[%s3958 + $0x20] sm:$0xff]
        %v3964 = vld [vmem:[%s3958 + $0x28] sm:$0x3f]
        %v3965 = vld [vmem:[%s3958 + $0x30] sm:$0xff]
        %v3966 = vld [vmem:[%s3958 + $0x38] sm:$0x3f]
        %v3967 = vld [vmem:[%s3958 + $0x40] sm:$0xff]
        %v3968 = vld [vmem:[%s3958 + $0x48] sm:$0x3f]
        %v3969 = vld [vmem:[%s3958 + $0x50] sm:$0xff]
        %v3970 = vld [vmem:[%s3958 + $0x58] sm:$0x3f]
        %v3971 = vld [vmem:[%s3958 + $0x60] sm:$0xff]
        %v3972 = vld [vmem:[%s3958 + $0x68] sm:$0x3f]
        %v3973 = vld [vmem:[%s3958 + $0x70] sm:$0xff]
        %v3974 = vld [vmem:[%s3958 + $0x78] sm:$0x3f]
        %v3975 = vmul.f32 %v3525, %v3959
        %v3976 = vmul.f32 %v3526, %v3960
        %v3977 = vmul.f32 %v3531, %v3961
        %v3978 = vmul.f32 %v3532, %v3962
        %v3979 = vadd.f32 %v3975, %v3977
        %v3980 = vadd.f32 %v3976, %v3978
        %v3981 = vmul.f32 %v3537, %v3963
        %v3982 = vmul.f32 %v3538, %v3964
        %v3983 = vadd.f32 %v3979, %v3981
        %v3984 = vadd.f32 %v3980, %v3982
        %v3985 = vmul.f32 %v3543, %v3965
        %v3986 = vmul.f32 %v3544, %v3966
        %v3987 = vadd.f32 %v3983, %v3985
        %v3988 = vadd.f32 %v3984, %v3986
        %v3989 = vmul.f32 %v3549, %v3967
        %v3990 = vmul.f32 %v3550, %v3968
        %v3991 = vadd.f32 %v3987, %v3989
        %v3992 = vadd.f32 %v3988, %v3990
        %v3993 = vmul.f32 %v3555, %v3969
        %v3994 = vmul.f32 %v3556, %v3970
        %v3995 = vadd.f32 %v3991, %v3993
        %v3996 = vadd.f32 %v3992, %v3994
        %v3997 = vmul.f32 %v3561, %v3971
        %v3998 = vmul.f32 %v3562, %v3972
        %v3999 = vadd.f32 %v3995, %v3997
        %v4000 = vadd.f32 %v3996, %v3998
        %v4001 = vmul.f32 %v3567, %v3973
        %v4002 = vmul.f32 %v3568, %v3974
        %v4003 = vadd.f32 %v3999, %v4001
        %v4004 = vadd.f32 %v4000, %v4002
        %v4005 = vsel %vm3618, %v4003, 0.0
        %4006 = vadd.xlane.f32.xlu0 %v4005
        %v4007 = vpop.xlane.xlu0 %4006
        %v4008 = vsel %vm3622, %v4004, 0.0
        %4009 = vadd.xlane.f32.xlu0 %v4008
        %v4010 = vpop.xlane.xlu0 %4009
        %v4011 = vsel %vm3626, %v4010, 0.0
        %v4012 = vadd.f32 %v4007, %v4011
        %v4013 = vrot.slane %v4012, 4
        %v4014 = vadd.f32 %v4012, %v4013
        %v4015 = vrot.slane %v4014, 2
        %v4016 = vadd.f32 %v4014, %v4015
        %v4017 = vrot.slane %v4016, 1
        %v4018 = vadd.f32 %v4016, %v4017
        %vm4019 = vcmp.eq.s32.totalorder %v3570, 6
        %v4020 = vsel %vm4019, %v4018, 0.0
        %v4021 = vadd.f32 %v3957, %v4020
        %s4022 = scalar_lea.vmem %s3, 896
        %v4023 = vld [vmem:[%s4022] sm:$0xff]
        %v4024 = vld [vmem:[%s4022 + $0x8] sm:$0x3f]
        %v4025 = vld [vmem:[%s4022 + $0x10] sm:$0xff]
        %v4026 = vld [vmem:[%s4022 + $0x18] sm:$0x3f]
        %v4027 = vld [vmem:[%s4022 + $0x20] sm:$0xff]
        %v4028 = vld [vmem:[%s4022 + $0x28] sm:$0x3f]
        %v4029 = vld [vmem:[%s4022 + $0x30] sm:$0xff]
        %v4030 = vld [vmem:[%s4022 + $0x38] sm:$0x3f]
        %v4031 = vld [vmem:[%s4022 + $0x40] sm:$0xff]
        %v4032 = vld [vmem:[%s4022 + $0x48] sm:$0x3f]
        %v4033 = vld [vmem:[%s4022 + $0x50] sm:$0xff]
        %v4034 = vld [vmem:[%s4022 + $0x58] sm:$0x3f]
        %v4035 = vld [vmem:[%s4022 + $0x60] sm:$0xff]
        %v4036 = vld [vmem:[%s4022 + $0x68] sm:$0x3f]
        %v4037 = vld [vmem:[%s4022 + $0x70] sm:$0xff]
        %v4038 = vld [vmem:[%s4022 + $0x78] sm:$0x3f]
        %v4039 = vmul.f32 %v3525, %v4023
        %v4040 = vmul.f32 %v3526, %v4024
        %v4041 = vmul.f32 %v3531, %v4025
        %v4042 = vmul.f32 %v3532, %v4026
        %v4043 = vadd.f32 %v4039, %v4041
        %v4044 = vadd.f32 %v4040, %v4042
        %v4045 = vmul.f32 %v3537, %v4027
        %v4046 = vmul.f32 %v3538, %v4028
        %v4047 = vadd.f32 %v4043, %v4045
        %v4048 = vadd.f32 %v4044, %v4046
        %v4049 = vmul.f32 %v3543, %v4029
        %v4050 = vmul.f32 %v3544, %v4030
        %v4051 = vadd.f32 %v4047, %v4049
        %v4052 = vadd.f32 %v4048, %v4050
        %v4053 = vmul.f32 %v3549, %v4031
        %v4054 = vmul.f32 %v3550, %v4032
        %v4055 = vadd.f32 %v4051, %v4053
        %v4056 = vadd.f32 %v4052, %v4054
        %v4057 = vmul.f32 %v3555, %v4033
        %v4058 = vmul.f32 %v3556, %v4034
        %v4059 = vadd.f32 %v4055, %v4057
        %v4060 = vadd.f32 %v4056, %v4058
        %v4061 = vmul.f32 %v3561, %v4035
        %v4062 = vmul.f32 %v3562, %v4036
        %v4063 = vadd.f32 %v4059, %v4061
        %v4064 = vadd.f32 %v4060, %v4062
        %v4065 = vmul.f32 %v3567, %v4037
        %v4066 = vmul.f32 %v3568, %v4038
        %v4067 = vadd.f32 %v4063, %v4065
        %v4068 = vadd.f32 %v4064, %v4066
        %v4069 = vsel %vm3618, %v4067, 0.0
        %4070 = vadd.xlane.f32.xlu0 %v4069
        %v4071 = vpop.xlane.xlu0 %4070
        %v4072 = vsel %vm3622, %v4068, 0.0
        %4073 = vadd.xlane.f32.xlu0 %v4072
        %v4074 = vpop.xlane.xlu0 %4073
        %v4075 = vsel %vm3626, %v4074, 0.0
        %v4076 = vadd.f32 %v4071, %v4075
        %v4077 = vrot.slane %v4076, 4
        %v4078 = vadd.f32 %v4076, %v4077
        %v4079 = vrot.slane %v4078, 2
        %v4080 = vadd.f32 %v4078, %v4079
        %v4081 = vrot.slane %v4080, 1
        %v4082 = vadd.f32 %v4080, %v4081
        %vm4083 = vcmp.eq.s32.totalorder %v3570, 7
        %v4084 = vsel %vm4083, %v4082, 0.0
        %v4085 = vadd.f32 %v4021, %v4084
        %vm4086 = vcmask 57344
        %4087 = vst.msk [vmem:[%s243] sm:$0x1] %vm4086, %v4085
        %s4088 = sand.u32 %s139, 1
        %s4089 = scalar_lea.sflag [#allocation3], %s4088
        %s4090 = sand.u32 %s139, 1
        %s4091 = scalar_lea.vmem [#allocation7], %s4090
        // Predicated region
        $region49: #{tpu_custom_call.1} parent=39 // pred_check
          %p4092 = pneg %p149
        $region50: #{tpu_custom_call.1} parent=39 // pred_check_branch
          %4094 = sbr.rel (%p4092) target = $region52
        $region51: #{tpu_custom_call.1} parent=39 // pred_region
          %s4096 = ssub.s32 16, 16
          %4097 = vsyncadd %s4089, %s4096
          %s4098 = smul.addr %s21, 16
          %s4099 = scalar_lea.hbm %s5, %s4098
          %s4101 = sshll.u32 %s4091, 4
          %s4102 = int_to_ptr.vmem [resolvable:$true] %s4101
          %4104 = dma.vmem_to_hbm [thread:$0]  %s4102, 16, %s4099, %s4089
        $region52: #{tpu_custom_call.1} parent=39 // pred_fallthru
          _
      $region40: #{tpu_custom_call.1} parent=5 // pred_fallthru
        _
      %p4105 = scmp.le.s32.totalorder 2, %s16
      // Predicated region
      $region53: #{tpu_custom_call.1} parent=5 // pred_check
        %p4106 = pneg %p4105
      $region54: #{tpu_custom_call.1} parent=5 // pred_check_branch
        %4108 = sbr.rel (%p4106) target = $region56
      $region55: #{tpu_custom_call.1} parent=5 // pred_region
        %s4109 = ssub.s32 %s16, 2
        // Predicated region
        $region57: #{tpu_custom_call.1} parent=55 // pred_check
          %p4110 = pneg %p155
        $region58: #{tpu_custom_call.1} parent=55 // pred_check_branch
          %4112 = sbr.rel (%p4110) target = $region60
        $region59: #{tpu_custom_call.1} parent=55 // pred_region
          %s4113 = sand.u32 %s140, 1
          %s4114 = scalar_lea.sflag [#allocation3], %s4113
          %s4115 = sand.u32 %s140, 1
          %s4116 = scalar_lea.vmem [#allocation7], %s4115
          %4117 = dma.done %s4114, 16
        $region60: #{tpu_custom_call.1} parent=55 // pred_fallthru
          _
      $region56: #{tpu_custom_call.1} parent=5 // pred_fallthru
        _
    $region6: #{tpu_custom_call.1} parent=1 // loop_footer
      %s20 = sadd.s32 1, %s16
    $region7: #{tpu_custom_call.1} parent=1 // loop_footer_branch
      %15 = sbr.rel target = $region3
    $region8: #{tpu_custom_call.1} parent=1 // loop_exit
      _
    %4118 = vsyncpa [#allocation3], 1
    %s4119 = scalar_lea.sflag [#allocation3], 1
    %4120 = vsyncpa %s4119, 1
    %4121 = vsyncpa [#allocation4], 1
    %s4122 = scalar_lea.sflag [#allocation4], 1
    %4123 = vsyncpa %s4122, 1
    %4124 = vsyncpa [#allocation6], 1

</llo_original>
